<compile_context>
chip_gen: v7x
topology: tpu7x:2x2x1
jax: 0.10.0
libtpu: 0.0.40
codegen_flags: <defaults>
</compile_context>

<pallas_src>
import functools

import jax
import jax.numpy as jnp
from jax.experimental import pallas as pl
from jax.experimental.pallas import tpu as pltpu

EPS = 1e-5  # nn.BatchNorm2d default eps


def _vmem_limit_bytes():
    """Per-generation scoped-VMEM budget (headroom below physical VMEM)."""
    try:
        cap = int(pltpu.get_tpu_info().vmem_capacity_bytes)
    except Exception:
        cap = 64 * 1024 * 1024          # conservative fallback (safe on v7x too)
    return int(min(cap * 3 // 4, 96 * 1024 * 1024))


def _pair(v):
    return (v, v) if isinstance(v, int) else tuple(v)


def _dsl(start, size, stride):
    """Static slice helper: strided pl.ds only when the stride is non-unit."""
    return pl.ds(start, size, stride) if stride > 1 else pl.ds(start, size)


def _pick_tile(n, cap):
    for p in (1024, 512, 256, 128):
        if p <= cap and n % p == 0:
            return p
    return n


# ---------------------------------------------------------------------------
# In-kernel conv of one frame: kh banded matmuls over the lane-dense
# (Hp, Wp*cin) block.  The kw taps / cin / width-stride are folded into the
# pre-built weight band, so every operand read is a full lane-aligned row slab.
# ---------------------------------------------------------------------------
def _conv_frame(x_ref, wband_ref, f, *, ho, sh):
    """x_ref: (sf, Hp, Wp*cin) bf16; wband_ref: (kh, Wp*cin, wo*cout) bf16.

    Returns the bias-free conv output of frame `f`, shape (ho, wo*cout) f32 with
    lanes ordered (w_out, cout).  (The conv bias cancels exactly under
    training-mode BatchNorm, so it is never added.)
    """
    kh = wband_ref.shape[0]
    n_lanes = wband_ref.shape[-1]
    acc = jnp.zeros((ho, n_lanes), jnp.float32)
    for ky in range(kh):                                   # static unroll
        a = x_ref[f, _dsl(ky, ho, sh), :]                  # (ho, Wp*cin), lane-dense
        acc = acc + jnp.dot(a, wband_ref[ky],
                            preferred_element_type=jnp.float32)
    return acc


# ---------------------------------------------------------------------------
# Kernel 1a: per-group partial sums / sums-of-squares of the conv output
# (lane-dense (2, wo*cout) row per group; channel fold + pairwise reduction of
# the tiny partials happens in the wrapper -> grid axis stays "parallel").
# ---------------------------------------------------------------------------
def _stats_kernel(x_ref, wband_ref, stats_ref, *, ho, sh):
    sf = x_ref.shape[0]
    n_lanes = wband_ref.shape[-1]
    s = jnp.zeros((1, n_lanes), jnp.float32)
    ss = jnp.zeros((1, n_lanes), jnp.float32)
    for f in range(sf):                                    # static unroll
        y = _conv_frame(x_ref, wband_ref, f, ho=ho, sh=sh)
        s = s + jnp.sum(y, axis=0, keepdims=True)
        ss = ss + jnp.sum(y * y, axis=0, keepdims=True)
    stats_ref[:, 0, :] = s
    stats_ref[:, 1, :] = ss


# ---------------------------------------------------------------------------
# Kernel 1b: conv (recomputed; K is tiny, recompute beats spilling to HBM)
# + BN affine + ReLU + sf^3 mean pool, pooled per frame and accumulated.
# The pool is two tiny constant matmuls (P on rows, Q on lanes) -> no
# sublane/lane regroup reshapes.  Output: one lane-dense bf16 row per group.
# ---------------------------------------------------------------------------
def _bn_relu_pool_kernel(x_ref, wband_ref, p_ref, q_ref, scale_ref, shift_ref,
                         out_ref, *, ho, sh):
    sf = x_ref.shape[0]
    hq = p_ref.shape[0]
    wqc = q_ref.shape[1]
    scale = scale_ref[...]                                 # (1, wo*cout), per-channel tiled
    shift = shift_ref[...]

    pooled = jnp.zeros((hq, wqc), jnp.float32)
    for f in range(sf):                                    # per-frame: small live acc
        y = _conv_frame(x_ref, wband_ref, f, ho=ho, sh=sh)
        y = jnp.maximum(y * scale + shift, 0.0)            # BN affine + ReLU (f32)
        pooled = pooled + jnp.dot(
            jnp.dot(p_ref[...], y, preferred_element_type=jnp.float32),
            q_ref[...], preferred_element_type=jnp.float32)

    # lane-dense flat row (h, w, c): concat of the hq pooled rows along lanes
    row = jnp.concatenate([pooled[i:i + 1, :] for i in range(hq)], axis=1)
    out_ref[...] = row.reshape(1, 1, hq * wqc).astype(out_ref.dtype)


# ---------------------------------------------------------------------------
# Kernel 2: Linear, tiled over (output columns, reduction).  bf16 MXU operands
# (activations arrive already in bf16), f32 VMEM accumulator, (out, in) weight
# row tiles, pl.when init/finalize.
# ---------------------------------------------------------------------------
def _linear_kernel(x_ref, w_ref, b_ref, o_ref, acc_ref):
    k = pl.program_id(1)

    @pl.when(k == 0)
    def _init():
        acc_ref[...] = jnp.zeros_like(acc_ref)

    acc_ref[...] += jax.lax.dot_general(
        x_ref[...], w_ref[...],
        dimension_numbers=(((1,), (1,)), ((), ())),
        preferred_element_type=jnp.float32)

    @pl.when(k == pl.num_programs(1) - 1)
    def _finalize():
        o_ref[...] = (acc_ref[...] + b_ref[...]).astype(o_ref.dtype)


# ---------------------------------------------------------------------------
# Wrapper
# ---------------------------------------------------------------------------
@functools.partial(jax.jit, static_argnames=("stride", "padding", "scale_factor"))
def conv_inflation_block(x, params, *, stride, padding, scale_factor):
    conv_w = params["conv_w"]            # (cout, cin, kh, kw), torch layout
    gamma, beta = params["gamma"], params["beta"]
    lin_w, lin_b = params["lin_w"], params["lin_b"]
    # params["conv_b"] is accepted for interface parity but cancels exactly
    # under training-mode BatchNorm (batch statistics), so it never enters the
    # kernels.  TODO(synk): re-add it if the block is run with running stats.

    b, t, h, w, d = x.shape
    cout, cin, kh, kw = conv_w.shape
    sh, sw = _pair(stride)
    ph, pw = _pair(padding)
    sf = scale_factor
    assert cin == d

    bt = b * t
    hp, wp = h + 2 * ph, w + 2 * pw
    ho = (hp - kh) // sh + 1
    wo = (wp - kw) // sw + 1
    assert t % sf == 0 and ho % sf == 0 and wo % sf == 0, \
        "t and the conv output h/w must be divisible by scale_factor"
    tp, hq, wq = t // sf, ho // sf, wo // sf
    n_groups = bt // sf                  # one grid step = sf consecutive frames
    n_lanes = wo * cout                  # conv-output lane width, (w, cout) order
    feat = tp * hq * wq * cout
    vmem_limit = _vmem_limit_bytes()

    # glue: lane-dense, halo-padded, bf16 input (pad fused with the cast so the
    # padded HBM copy is written once in bf16).  Layout (bt, Hp, Wp*cin).
    # TODO(synk): handle the halo fully in-kernel (masked edge taps) to remove
    # this extra HBM pass, and tile kernel 1 over halo'd row blocks for
    # production H/W so blocks stay small on v7x's 64 MiB VMEM.
    x_flat = x.reshape(bt, h, w * cin).astype(jnp.bfloat16)
    x_pad = jnp.pad(x_flat, ((0, 0), (ph, ph), (pw * cin, pw * cin)))

    # glue: banded conv weights.  Fold the kw taps, cin contraction and width
    # stride into one (Wp*cin, wo*cout) matrix per ky -> kh lane-aligned
    # matmuls per frame, no im2col, no per-tap lane slicing.
    # TODO(synk): the band scales as Wp*wo*cin*cout; tile over W for very wide frames.
    w_t = jnp.transpose(conv_w, (2, 3, 1, 0)).astype(jnp.float32)   # (kh,kw,cin,cout)
    kx_of = jnp.arange(wp)[:, None] - jnp.arange(wo)[None, :] * sw  # (Wp, wo)
    valid = (kx_of >= 0) & (kx_of < kw)
    band = jnp.where(valid[None, :, :, None, None],
                     w_t[:, jnp.clip(kx_of, 0, kw - 1)], 0.0)       # (kh,Wp,wo,cin,cout)
    w_band = jnp.transpose(band, (0, 1, 3, 2, 4)).reshape(kh, wp * cin, n_lanes)
    w_band = w_band.astype(jnp.bfloat16)

    x_spec = pl.BlockSpec((sf, hp, wp * cin), lambda i: (i, 0, 0))
    w_spec = pl.BlockSpec((kh, wp * cin, n_lanes), lambda i: (0, 0, 0))

    # ---- Kernel 1a: per-group BN partial statistics ------------------------
    part = pl.pallas_call(
        functools.partial(_stats_kernel, ho=ho, sh=sh),
        out_shape=jax.ShapeDtypeStruct((n_groups, 2, n_lanes), jnp.float32),
        grid=(n_groups,),
        in_specs=[x_spec, w_spec],
        out_specs=pl.BlockSpec((1, 2, n_lanes), lambda i: (i, 0, 0)),
        compiler_params=pltpu.CompilerParams(
            dimension_semantics=("parallel",),        # independent per-group partials
            vmem_limit_bytes=vmem_limit),
    )(x_pad, w_band)

    # glue: pairwise f32 reduction of the tiny partials + BN affine.  The conv
    # bias cancels here (training-mode BN), so it never appears.
    moments = part.reshape(n_groups, 2, wo, cout).sum(axis=(0, 2))   # (2, cout)
    count = float(bt * ho * wo)
    mean = moments[0] / count
    var = jnp.maximum(moments[1] / count - mean * mean, 0.0)
    scale = gamma * jax.lax.rsqrt(var + EPS)
    shift = beta - mean * scale
    scale_t = jnp.tile(scale, wo).reshape(1, n_lanes).astype(jnp.float32)
    shift_t = jnp.tile(shift, wo).reshape(1, n_lanes).astype(jnp.float32)

    # glue: constant pooling matrices (tiny): P sums sf rows per output row,
    # Q sums sf lane-groups per output column and carries the 1/sf^3 scale.
    p_mat = (jnp.arange(ho) // sf == jnp.arange(hq)[:, None]).astype(jnp.float32)
    col_w = jnp.arange(n_lanes) // cout
    col_c = jnp.arange(n_lanes) % cout
    out_col = (col_w // sf) * cout + col_c
    q_mat = (out_col[:, None] == jnp.arange(wq * cout)[None, :]).astype(jnp.float32)
    q_mat = q_mat / float(sf ** 3)

    # ---- Kernel 1b: conv + BN affine + ReLU + sf^3 mean pool ----------------
    pooled = pl.pallas_call(
        functools.partial(_bn_relu_pool_kernel, ho=ho, sh=sh),
        out_shape=jax.ShapeDtypeStruct((n_groups, 1, hq * wq * cout), jnp.bfloat16),
        grid=(n_groups,),
        in_specs=[x_spec, w_spec,
                  pl.BlockSpec((hq, ho), lambda i: (0, 0)),
                  pl.BlockSpec((n_lanes, wq * cout), lambda i: (0, 0)),
                  pl.BlockSpec((1, n_lanes), lambda i: (0, 0)),
                  pl.BlockSpec((1, n_lanes), lambda i: (0, 0))],
        out_specs=pl.BlockSpec((1, 1, hq * wq * cout), lambda i: (i, 0, 0)),
        compiler_params=pltpu.CompilerParams(
            dimension_semantics=("parallel",),        # independent groups
            vmem_limit_bytes=vmem_limit),
    )(x_pad, w_band, p_mat, q_mat, scale_t, shift_t)

    # glue: 'b t h w c -> b (t h w c)' -- rows are already (t, h, w, c)-ordered.
    flat = pooled.reshape(b, feat)                   # bf16, fed straight to the MXU

    # ---- Kernel 2: Linear, K-tiled, bf16 operands, f32 accumulator ----------
    # TODO(synk): the original module lazily builds Linear(feat, feat//scale_factor)
    # but reshapes the result back to feat elements (inconsistent / would crash);
    # we follow the documented output shape and use a feat -> feat linear.
    fout = lin_w.shape[0]
    assert lin_w.shape[1] == feat and fout == feat
    tn = _pick_tile(fout, 1024)
    tk_cap = max(128, (vmem_limit // 4) // max(1, tn * 2 * 3))
    tk = _pick_tile(feat, min(1024, tk_cap))
    assert fout % tn == 0 and feat % tk == 0
    assert tn * tk * 2 * 4 <= vmem_limit, "linear tiles exceed the VMEM budget"
    kt = feat // tk
    w_bf16 = lin_w.astype(jnp.bfloat16)              # (out, in): no transpose copy
    if kt >= 3:
        # pure weight stream: deeper buffering hides per-step overhead (v5e/v6e)
        lin_w_spec = pl.BlockSpec((tn, tk), lambda j, k: (j, k),
                                  pipeline_mode=pl.Buffered(3))
    else:
        lin_w_spec = pl.BlockSpec((tn, tk), lambda j, k: (j, k))
    out_flat = pl.pallas_call(
        _linear_kernel,
        out_shape=jax.ShapeDtypeStruct((b, fout), jnp.float32),
        grid=(fout // tn, kt),
        in_specs=[
            pl.BlockSpec((b, tk), lambda j, k: (0, k)),
            lin_w_spec,
            pl.BlockSpec((1, tn), lambda j, k: (0, j)),
        ],
        out_specs=pl.BlockSpec((b, tn), lambda j, k: (0, j)),
        scratch_shapes=[pltpu.VMEM((b, tn), jnp.float32)],
        compiler_params=pltpu.CompilerParams(
            dimension_semantics=("parallel", "arbitrary"),
            vmem_limit_bytes=vmem_limit),
    )(flat, w_bf16, lin_b.reshape(1, fout).astype(jnp.float32))

    # glue: 'b (t h w c) -> b t h w c'
    return out_flat.reshape(b, tp, hq, wq, cout)


# ---------------------------------------------------------------------------
# Pure-JAX reference (for correctness check)
# ---------------------------------------------------------------------------
def reference(x, params, *, stride, padding, scale_factor):
    conv_w, conv_b = params["conv_w"], params["conv_b"]
    gamma, beta = params["gamma"], params["beta"]
    lin_w, lin_b = params["lin_w"], params["lin_b"]
    b, t, h, w, d = x.shape
    cout = conv_w.shape[0]
    sf = scale_factor
    xn = jnp.transpose(x.reshape(b * t, h, w, d), (0, 3, 1, 2))  # NCHW
    y = jax.lax.conv_general_dilated(
        xn, conv_w, (stride, stride), [(padding, padding)] * 2,
        dimension_numbers=("NCHW", "OIHW", "NCHW")) + conv_b[None, :, None, None]
    mean = y.mean(axis=(0, 2, 3), keepdims=True)
    var = ((y - mean) ** 2).mean(axis=(0, 2, 3), keepdims=True)
    y = (y - mean) / jnp.sqrt(var + EPS) * gamma[None, :, None, None] \
        + beta[None, :, None, None]
    y = jnp.maximum(y, 0.0)
    _, _, ho, wo = y.shape
    y = y.reshape(b, t // sf, sf, cout, ho // sf, sf, wo // sf, sf).mean(axis=(2, 5, 7))
    y = jnp.transpose(y, (0, 1, 3, 4, 2))       # b, t/sf, h/sf, w/sf, c
    flat = y.reshape(b, -1)
    out = flat @ lin_w.T + lin_b
    return out.reshape(b, t // sf, ho // sf, wo // sf, cout)


if __name__ == "__main__":
    B, T, H, W = 2, 4, 16, 16
    IN_CH, OUT_CH = 4, 8
    KSIZE, STRIDE, PAD, SF = 3, 1, 1, 2

    key = jax.random.PRNGKey(0)
    kx_, kcw, kcb, kg, kbt, klw, klb = jax.random.split(key, 7)

    x = jax.random.normal(kx_, (B, T, H, W, IN_CH), dtype=jnp.float32)

    ho = (H + 2 * PAD - KSIZE) // STRIDE + 1
    wo = (W + 2 * PAD - KSIZE) // STRIDE + 1
    feat = (T // SF) * (ho // SF) * (wo // SF) * OUT_CH

    params = dict(
        conv_w=0.2 * jax.random.normal(kcw, (OUT_CH, IN_CH, KSIZE, KSIZE), jnp.float32),
        conv_b=0.1 * jax.random.normal(kcb, (OUT_CH,), jnp.float32),
        gamma=1.0 + 0.1 * jax.random.normal(kg, (OUT_CH,), jnp.float32),
        beta=0.1 * jax.random.normal(kbt, (OUT_CH,), jnp.float32),
        lin_w=(1.0 / feat ** 0.5) * jax.random.normal(klw, (feat, feat), jnp.float32),
        lin_b=0.1 * jax.random.normal(klb, (feat,), jnp.float32),
    )

    out = conv_inflation_block(x, params, stride=STRIDE, padding=PAD, scale_factor=SF)
    out = jax.block_until_ready(out)

    ref = reference(x, params, stride=STRIDE, padding=PAD, scale_factor=SF)
    assert out.shape == (B, T // SF, ho // SF, wo // SF, OUT_CH), out.shape
    max_err = float(jnp.max(jnp.abs(out - ref)))
    # bf16 input/weight/activation streaming -> relaxed tolerance vs f32 reference.
    assert jnp.allclose(out, ref, atol=3e-2, rtol=3e-2), max_err
    print("KERNEL_OK")
</pallas_src>

<mosaic_0001>
module attributes {stable_mosaic.version = 11 : i64} {
  func.func @_stats_kernel(%arg0: i32, %arg1: memref<2x18x72xbf16, #tpu.memory_space<vmem>>, %arg2: memref<3x72x128xbf16, #tpu.memory_space<vmem>>, %arg3: memref<1x2x128xf32, #tpu.memory_space<vmem>>) attributes {dimension_semantics = [#tpu.dimension_semantics<parallel>], iteration_bounds = array<i64: 4>, scalar_prefetch = 0 : i64, scratch_operands = 0 : i64, tpu.core_type = #tpu.core_type<tc>, window_params = [{transform_indices = @transform_0, window_bounds = array<i64: 2, 18, 72>}, {pipeline_mode = #tpu.pipeline_mode<synchronous>, transform_indices = @transform_1, window_bounds = array<i64: 3, 72, 128>}, {transform_indices = @transform_2, window_bounds = array<i64: 1, 2, 128>}]} {
    %cst = arith.constant 0.000000e+00 : f32
    %0 = vector.broadcast %cst : f32 to vector<1x128xf32>
    %cst_0 = arith.constant 0.000000e+00 : f32
    %1 = vector.broadcast %cst_0 : f32 to vector<1x128xf32>
    %cst_1 = arith.constant 0.000000e+00 : f32
    %2 = vector.broadcast %cst_1 : f32 to vector<16x128xf32>
    %c0 = arith.constant 0 : index
    %c0_2 = arith.constant 0 : index
    %c0_3 = arith.constant 0 : index
    %3 = vector.load %arg1[%c0, %c0_2, %c0_3] : memref<2x18x72xbf16, #tpu.memory_space<vmem>>, vector<1x16x72xbf16>
    %4 = vector.shape_cast %3 : vector<1x16x72xbf16> to vector<16x72xbf16>
    %c0_4 = arith.constant 0 : index
    %c0_5 = arith.constant 0 : index
    %c0_6 = arith.constant 0 : index
    %5 = vector.load %arg2[%c0_4, %c0_5, %c0_6] : memref<3x72x128xbf16, #tpu.memory_space<vmem>>, vector<1x72x128xbf16>
    %6 = vector.shape_cast %5 : vector<1x72x128xbf16> to vector<72x128xbf16>
    %cst_7 = arith.constant dense<0.000000e+00> : vector<16x128xf32>
    %7 = tpu.matmul %4, %6, %cst_7 {dimension_numbers = #tpu.dot_dimension_numbers<[1], [0], [0], [1], [0, 0, 1, 1], [], []>} : vector<16x72xbf16>, vector<72x128xbf16>, vector<16x128xf32> -> vector<16x128xf32>
    %8 = arith.addf %2, %7 : vector<16x128xf32>
    %c0_8 = arith.constant 0 : index
    %c1 = arith.constant 1 : index
    %c0_9 = arith.constant 0 : index
    %9 = vector.load %arg1[%c0_8, %c1, %c0_9] : memref<2x18x72xbf16, #tpu.memory_space<vmem>>, vector<1x16x72xbf16>
    %10 = vector.shape_cast %9 : vector<1x16x72xbf16> to vector<16x72xbf16>
    %c1_10 = arith.constant 1 : index
    %c0_11 = arith.constant 0 : index
    %c0_12 = arith.constant 0 : index
    %11 = vector.load %arg2[%c1_10, %c0_11, %c0_12] : memref<3x72x128xbf16, #tpu.memory_space<vmem>>, vector<1x72x128xbf16>
    %12 = vector.shape_cast %11 : vector<1x72x128xbf16> to vector<72x128xbf16>
    %cst_13 = arith.constant dense<0.000000e+00> : vector<16x128xf32>
    %13 = tpu.matmul %10, %12, %cst_13 {dimension_numbers = #tpu.dot_dimension_numbers<[1], [0], [0], [1], [0, 0, 1, 1], [], []>} : vector<16x72xbf16>, vector<72x128xbf16>, vector<16x128xf32> -> vector<16x128xf32>
    %14 = arith.addf %8, %13 : vector<16x128xf32>
    %c0_14 = arith.constant 0 : index
    %c2 = arith.constant 2 : index
    %c0_15 = arith.constant 0 : index
    %15 = vector.load %arg1[%c0_14, %c2, %c0_15] : memref<2x18x72xbf16, #tpu.memory_space<vmem>>, vector<1x16x72xbf16>
    %16 = vector.shape_cast %15 : vector<1x16x72xbf16> to vector<16x72xbf16>
    %c2_16 = arith.constant 2 : index
    %c0_17 = arith.constant 0 : index
    %c0_18 = arith.constant 0 : index
    %17 = vector.load %arg2[%c2_16, %c0_17, %c0_18] : memref<3x72x128xbf16, #tpu.memory_space<vmem>>, vector<1x72x128xbf16>
    %18 = vector.shape_cast %17 : vector<1x72x128xbf16> to vector<72x128xbf16>
    %cst_19 = arith.constant dense<0.000000e+00> : vector<16x128xf32>
    %19 = tpu.matmul %16, %18, %cst_19 {dimension_numbers = #tpu.dot_dimension_numbers<[1], [0], [0], [1], [0, 0, 1, 1], [], []>} : vector<16x72xbf16>, vector<72x128xbf16>, vector<16x128xf32> -> vector<16x128xf32>
    %20 = arith.addf %14, %19 : vector<16x128xf32>
    %cst_20 = arith.constant dense<0.000000e+00> : vector<128xf32>
    %21 = vector.multi_reduction <add>, %20, %cst_20 [0] : vector<16x128xf32> to vector<128xf32>
    %22 = vector.shape_cast %21 : vector<128xf32> to vector<1x128xf32>
    %23 = arith.addf %0, %22 : vector<1x128xf32>
    %24 = arith.mulf %20, %20 : vector<16x128xf32>
    %cst_21 = arith.constant dense<0.000000e+00> : vector<128xf32>
    %25 = vector.multi_reduction <add>, %24, %cst_21 [0] : vector<16x128xf32> to vector<128xf32>
    %26 = vector.shape_cast %25 : vector<128xf32> to vector<1x128xf32>
    %27 = arith.addf %1, %26 : vector<1x128xf32>
    %cst_22 = arith.constant 0.000000e+00 : f32
    %28 = vector.broadcast %cst_22 : f32 to vector<16x128xf32>
    %c1_23 = arith.constant 1 : index
    %c0_24 = arith.constant 0 : index
    %c0_25 = arith.constant 0 : index
    %29 = vector.load %arg1[%c1_23, %c0_24, %c0_25] : memref<2x18x72xbf16, #tpu.memory_space<vmem>>, vector<1x16x72xbf16>
    %30 = vector.shape_cast %29 : vector<1x16x72xbf16> to vector<16x72xbf16>
    %c0_26 = arith.constant 0 : index
    %c0_27 = arith.constant 0 : index
    %c0_28 = arith.constant 0 : index
    %31 = vector.load %arg2[%c0_26, %c0_27, %c0_28] : memref<3x72x128xbf16, #tpu.memory_space<vmem>>, vector<1x72x128xbf16>
    %32 = vector.shape_cast %31 : vector<1x72x128xbf16> to vector<72x128xbf16>
    %cst_29 = arith.constant dense<0.000000e+00> : vector<16x128xf32>
    %33 = tpu.matmul %30, %32, %cst_29 {dimension_numbers = #tpu.dot_dimension_numbers<[1], [0], [0], [1], [0, 0, 1, 1], [], []>} : vector<16x72xbf16>, vector<72x128xbf16>, vector<16x128xf32> -> vector<16x128xf32>
    %34 = arith.addf %28, %33 : vector<16x128xf32>
    %c1_30 = arith.constant 1 : index
    %c1_31 = arith.constant 1 : index
    %c0_32 = arith.constant 0 : index
    %35 = vector.load %arg1[%c1_30, %c1_31, %c0_32] : memref<2x18x72xbf16, #tpu.memory_space<vmem>>, vector<1x16x72xbf16>
    %36 = vector.shape_cast %35 : vector<1x16x72xbf16> to vector<16x72xbf16>
    %c1_33 = arith.constant 1 : index
    %c0_34 = arith.constant 0 : index
    %c0_35 = arith.constant 0 : index
    %37 = vector.load %arg2[%c1_33, %c0_34, %c0_35] : memref<3x72x128xbf16, #tpu.memory_space<vmem>>, vector<1x72x128xbf16>
    %38 = vector.shape_cast %37 : vector<1x72x128xbf16> to vector<72x128xbf16>
    %cst_36 = arith.constant dense<0.000000e+00> : vector<16x128xf32>
    %39 = tpu.matmul %36, %38, %cst_36 {dimension_numbers = #tpu.dot_dimension_numbers<[1], [0], [0], [1], [0, 0, 1, 1], [], []>} : vector<16x72xbf16>, vector<72x128xbf16>, vector<16x128xf32> -> vector<16x128xf32>
    %40 = arith.addf %34, %39 : vector<16x128xf32>
    %c1_37 = arith.constant 1 : index
    %c2_38 = arith.constant 2 : index
    %c0_39 = arith.constant 0 : index
    %41 = vector.load %arg1[%c1_37, %c2_38, %c0_39] : memref<2x18x72xbf16, #tpu.memory_space<vmem>>, vector<1x16x72xbf16>
    %42 = vector.shape_cast %41 : vector<1x16x72xbf16> to vector<16x72xbf16>
    %c2_40 = arith.constant 2 : index
    %c0_41 = arith.constant 0 : index
    %c0_42 = arith.constant 0 : index
    %43 = vector.load %arg2[%c2_40, %c0_41, %c0_42] : memref<3x72x128xbf16, #tpu.memory_space<vmem>>, vector<1x72x128xbf16>
    %44 = vector.shape_cast %43 : vector<1x72x128xbf16> to vector<72x128xbf16>
    %cst_43 = arith.constant dense<0.000000e+00> : vector<16x128xf32>
    %45 = tpu.matmul %42, %44, %cst_43 {dimension_numbers = #tpu.dot_dimension_numbers<[1], [0], [0], [1], [0, 0, 1, 1], [], []>} : vector<16x72xbf16>, vector<72x128xbf16>, vector<16x128xf32> -> vector<16x128xf32>
    %46 = arith.addf %40, %45 : vector<16x128xf32>
    %cst_44 = arith.constant dense<0.000000e+00> : vector<128xf32>
    %47 = vector.multi_reduction <add>, %46, %cst_44 [0] : vector<16x128xf32> to vector<128xf32>
    %48 = vector.shape_cast %47 : vector<128xf32> to vector<1x128xf32>
    %49 = arith.addf %23, %48 : vector<1x128xf32>
    %50 = arith.mulf %46, %46 : vector<16x128xf32>
    %cst_45 = arith.constant dense<0.000000e+00> : vector<128xf32>
    %51 = vector.multi_reduction <add>, %50, %cst_45 [0] : vector<16x128xf32> to vector<128xf32>
    %52 = vector.shape_cast %51 : vector<128xf32> to vector<1x128xf32>
    %53 = arith.addf %27, %52 : vector<1x128xf32>
    %c0_46 = arith.constant 0 : index
    %c0_47 = arith.constant 0 : index
    %c0_48 = arith.constant 0 : index
    %54 = vector.load %arg3[%c0_46, %c0_47, %c0_48] : memref<1x2x128xf32, #tpu.memory_space<vmem>>, vector<1x1x128xf32>
    %55 = vector.shape_cast %54 : vector<1x1x128xf32> to vector<1x128xf32>
    %56 = vector.shape_cast %49 : vector<1x128xf32> to vector<1x1x128xf32>
    tpu.vector_store %arg3[%c0_46, %c0_47, %c0_48], %56 {strides = array<i32>} : memref<1x2x128xf32, #tpu.memory_space<vmem>>, vector<1x1x128xf32>,
    %c0_49 = arith.constant 0 : index
    %c1_50 = arith.constant 1 : index
    %c0_51 = arith.constant 0 : index
    %57 = vector.load %arg3[%c0_49, %c1_50, %c0_51] : memref<1x2x128xf32, #tpu.memory_space<vmem>>, vector<1x1x128xf32>
    %58 = vector.shape_cast %57 : vector<1x1x128xf32> to vector<1x128xf32>
    %59 = vector.shape_cast %53 : vector<1x128xf32> to vector<1x1x128xf32>
    tpu.vector_store %arg3[%c0_49, %c1_50, %c0_51], %59 {strides = array<i32>} : memref<1x2x128xf32, #tpu.memory_space<vmem>>, vector<1x1x128xf32>,
    return
  }
  func.func @transform_0(%arg0: i32) -> (i32, i32, i32) {
    %c0_i32 = arith.constant 0 : i32
    %c0_i32_0 = arith.constant 0 : i32
    %c0_i32_1 = arith.constant 0 : i32
    return %arg0, %c0_i32, %c0_i32_0 : i32, i32, i32
  }
  func.func @transform_1(%arg0: i32) -> (i32, i32, i32) {
    %c0_i32 = arith.constant 0 : i32
    %c0_i32_0 = arith.constant 0 : i32
    %c0_i32_1 = arith.constant 0 : i32
    %c0_i32_2 = arith.constant 0 : i32
    return %c0_i32, %c0_i32_0, %c0_i32_1 : i32, i32, i32
  }
  func.func @transform_2(%arg0: i32) -> (i32, i32, i32) {
    %c0_i32 = arith.constant 0 : i32
    %c0_i32_0 = arith.constant 0 : i32
    %c0_i32_1 = arith.constant 0 : i32
    return %arg0, %c0_i32, %c0_i32_0 : i32, i32, i32
  }
}

module attributes {stable_mosaic.version = 11 : i64} {
  func.func @_bn_relu_pool_kernel(%arg0: i32, %arg1: memref<2x18x72xbf16, #tpu.memory_space<vmem>>, %arg2: memref<3x72x128xbf16, #tpu.memory_space<vmem>>, %arg3: memref<8x16xf32, #tpu.memory_space<vmem>>, %arg4: memref<128x64xf32, #tpu.memory_space<vmem>>, %arg5: memref<1x128xf32, #tpu.memory_space<vmem>>, %arg6: memref<1x128xf32, #tpu.memory_space<vmem>>, %arg7: memref<1x1x512xbf16, #tpu.memory_space<vmem>>) attributes {dimension_semantics = [#tpu.dimension_semantics<parallel>], iteration_bounds = array<i64: 4>, scalar_prefetch = 0 : i64, scratch_operands = 0 : i64, tpu.core_type = #tpu.core_type<tc>, window_params = [{transform_indices = @transform_0, window_bounds = array<i64: 2, 18, 72>}, {pipeline_mode = #tpu.pipeline_mode<synchronous>, transform_indices = @transform_1, window_bounds = array<i64: 3, 72, 128>}, {pipeline_mode = #tpu.pipeline_mode<synchronous>, transform_indices = @transform_2, window_bounds = array<i64: 8, 16>}, {pipeline_mode = #tpu.pipeline_mode<synchronous>, transform_indices = @transform_3, window_bounds = array<i64: 128, 64>}, {pipeline_mode = #tpu.pipeline_mode<synchronous>, transform_indices = @transform_4, window_bounds = array<i64: 1, 128>}, {pipeline_mode = #tpu.pipeline_mode<synchronous>, transform_indices = @transform_5, window_bounds = array<i64: 1, 128>}, {transform_indices = @transform_6, window_bounds = array<i64: 1, 1, 512>}]} {
    %c0 = arith.constant 0 : index
    %c0_0 = arith.constant 0 : index
    %0 = vector.load %arg5[%c0, %c0_0] : memref<1x128xf32, #tpu.memory_space<vmem>>, vector<1x128xf32>
    %c0_1 = arith.constant 0 : index
    %c0_2 = arith.constant 0 : index
    %1 = vector.load %arg6[%c0_1, %c0_2] : memref<1x128xf32, #tpu.memory_space<vmem>>, vector<1x128xf32>
    %cst = arith.constant 0.000000e+00 : f32
    %2 = vector.broadcast %cst : f32 to vector<8x64xf32>
    %cst_3 = arith.constant 0.000000e+00 : f32
    %3 = vector.broadcast %cst_3 : f32 to vector<16x128xf32>
    %c0_4 = arith.constant 0 : index
    %c0_5 = arith.constant 0 : index
    %c0_6 = arith.constant 0 : index
    %4 = vector.load %arg1[%c0_4, %c0_5, %c0_6] : memref<2x18x72xbf16, #tpu.memory_space<vmem>>, vector<1x16x72xbf16>
    %5 = vector.shape_cast %4 : vector<1x16x72xbf16> to vector<16x72xbf16>
    %c0_7 = arith.constant 0 : index
    %c0_8 = arith.constant 0 : index
    %c0_9 = arith.constant 0 : index
    %6 = vector.load %arg2[%c0_7, %c0_8, %c0_9] : memref<3x72x128xbf16, #tpu.memory_space<vmem>>, vector<1x72x128xbf16>
    %7 = vector.shape_cast %6 : vector<1x72x128xbf16> to vector<72x128xbf16>
    %cst_10 = arith.constant dense<0.000000e+00> : vector<16x128xf32>
    %8 = tpu.matmul %5, %7, %cst_10 {dimension_numbers = #tpu.dot_dimension_numbers<[1], [0], [0], [1], [0, 0, 1, 1], [], []>} : vector<16x72xbf16>, vector<72x128xbf16>, vector<16x128xf32> -> vector<16x128xf32>
    %9 = arith.addf %3, %8 : vector<16x128xf32>
    %c0_11 = arith.constant 0 : index
    %c1 = arith.constant 1 : index
    %c0_12 = arith.constant 0 : index
    %10 = vector.load %arg1[%c0_11, %c1, %c0_12] : memref<2x18x72xbf16, #tpu.memory_space<vmem>>, vector<1x16x72xbf16>
    %11 = vector.shape_cast %10 : vector<1x16x72xbf16> to vector<16x72xbf16>
    %c1_13 = arith.constant 1 : index
    %c0_14 = arith.constant 0 : index
    %c0_15 = arith.constant 0 : index
    %12 = vector.load %arg2[%c1_13, %c0_14, %c0_15] : memref<3x72x128xbf16, #tpu.memory_space<vmem>>, vector<1x72x128xbf16>
    %13 = vector.shape_cast %12 : vector<1x72x128xbf16> to vector<72x128xbf16>
    %cst_16 = arith.constant dense<0.000000e+00> : vector<16x128xf32>
    %14 = tpu.matmul %11, %13, %cst_16 {dimension_numbers = #tpu.dot_dimension_numbers<[1], [0], [0], [1], [0, 0, 1, 1], [], []>} : vector<16x72xbf16>, vector<72x128xbf16>, vector<16x128xf32> -> vector<16x128xf32>
    %15 = arith.addf %9, %14 : vector<16x128xf32>
    %c0_17 = arith.constant 0 : index
    %c2 = arith.constant 2 : index
    %c0_18 = arith.constant 0 : index
    %16 = vector.load %arg1[%c0_17, %c2, %c0_18] : memref<2x18x72xbf16, #tpu.memory_space<vmem>>, vector<1x16x72xbf16>
    %17 = vector.shape_cast %16 : vector<1x16x72xbf16> to vector<16x72xbf16>
    %c2_19 = arith.constant 2 : index
    %c0_20 = arith.constant 0 : index
    %c0_21 = arith.constant 0 : index
    %18 = vector.load %arg2[%c2_19, %c0_20, %c0_21] : memref<3x72x128xbf16, #tpu.memory_space<vmem>>, vector<1x72x128xbf16>
    %19 = vector.shape_cast %18 : vector<1x72x128xbf16> to vector<72x128xbf16>
    %cst_22 = arith.constant dense<0.000000e+00> : vector<16x128xf32>
    %20 = tpu.matmul %17, %19, %cst_22 {dimension_numbers = #tpu.dot_dimension_numbers<[1], [0], [0], [1], [0, 0, 1, 1], [], []>} : vector<16x72xbf16>, vector<72x128xbf16>, vector<16x128xf32> -> vector<16x128xf32>
    %21 = arith.addf %15, %20 : vector<16x128xf32>
    %22 = vector.broadcast %0 : vector<1x128xf32> to vector<16x128xf32>
    %23 = arith.mulf %21, %22 : vector<16x128xf32>
    %24 = vector.broadcast %1 : vector<1x128xf32> to vector<16x128xf32>
    %25 = arith.addf %23, %24 : vector<16x128xf32>
    %cst_23 = arith.constant 0.000000e+00 : f32
    %26 = vector.broadcast %cst_23 : f32 to vector<16x128xf32>
    %27 = arith.maximumf %25, %26 : vector<16x128xf32>
    %c0_24 = arith.constant 0 : index
    %c0_25 = arith.constant 0 : index
    %28 = vector.load %arg3[%c0_24, %c0_25] : memref<8x16xf32, #tpu.memory_space<vmem>>, vector<8x16xf32>
    %cst_26 = arith.constant dense<0.000000e+00> : vector<8x128xf32>
    %29 = tpu.matmul %28, %27, %cst_26 {dimension_numbers = #tpu.dot_dimension_numbers<[1], [0], [0], [1], [0, 0, 1, 1], [], []>} : vector<8x16xf32>, vector<16x128xf32>, vector<8x128xf32> -> vector<8x128xf32>
    %c0_27 = arith.constant 0 : index
    %c0_28 = arith.constant 0 : index
    %30 = vector.load %arg4[%c0_27, %c0_28] : memref<128x64xf32, #tpu.memory_space<vmem>>, vector<128x64xf32>
    %cst_29 = arith.constant dense<0.000000e+00> : vector<8x64xf32>
    %31 = tpu.matmul %29, %30, %cst_29 {dimension_numbers = #tpu.dot_dimension_numbers<[1], [0], [0], [1], [0, 0, 1, 1], [], []>} : vector<8x128xf32>, vector<128x64xf32>, vector<8x64xf32> -> vector<8x64xf32>
    %32 = arith.addf %2, %31 : vector<8x64xf32>
    %cst_30 = arith.constant 0.000000e+00 : f32
    %33 = vector.broadcast %cst_30 : f32 to vector<16x128xf32>
    %c1_31 = arith.constant 1 : index
    %c0_32 = arith.constant 0 : index
    %c0_33 = arith.constant 0 : index
    %34 = vector.load %arg1[%c1_31, %c0_32, %c0_33] : memref<2x18x72xbf16, #tpu.memory_space<vmem>>, vector<1x16x72xbf16>
    %35 = vector.shape_cast %34 : vector<1x16x72xbf16> to vector<16x72xbf16>
    %c0_34 = arith.constant 0 : index
    %c0_35 = arith.constant 0 : index
    %c0_36 = arith.constant 0 : index
    %36 = vector.load %arg2[%c0_34, %c0_35, %c0_36] : memref<3x72x128xbf16, #tpu.memory_space<vmem>>, vector<1x72x128xbf16>
    %37 = vector.shape_cast %36 : vector<1x72x128xbf16> to vector<72x128xbf16>
    %cst_37 = arith.constant dense<0.000000e+00> : vector<16x128xf32>
    %38 = tpu.matmul %35, %37, %cst_37 {dimension_numbers = #tpu.dot_dimension_numbers<[1], [0], [0], [1], [0, 0, 1, 1], [], []>} : vector<16x72xbf16>, vector<72x128xbf16>, vector<16x128xf32> -> vector<16x128xf32>
    %39 = arith.addf %33, %38 : vector<16x128xf32>
    %c1_38 = arith.constant 1 : index
    %c1_39 = arith.constant 1 : index
    %c0_40 = arith.constant 0 : index
    %40 = vector.load %arg1[%c1_38, %c1_39, %c0_40] : memref<2x18x72xbf16, #tpu.memory_space<vmem>>, vector<1x16x72xbf16>
    %41 = vector.shape_cast %40 : vector<1x16x72xbf16> to vector<16x72xbf16>
    %c1_41 = arith.constant 1 : index
    %c0_42 = arith.constant 0 : index
    %c0_43 = arith.constant 0 : index
    %42 = vector.load %arg2[%c1_41, %c0_42, %c0_43] : memref<3x72x128xbf16, #tpu.memory_space<vmem>>, vector<1x72x128xbf16>
    %43 = vector.shape_cast %42 : vector<1x72x128xbf16> to vector<72x128xbf16>
    %cst_44 = arith.constant dense<0.000000e+00> : vector<16x128xf32>
    %44 = tpu.matmul %41, %43, %cst_44 {dimension_numbers = #tpu.dot_dimension_numbers<[1], [0], [0], [1], [0, 0, 1, 1], [], []>} : vector<16x72xbf16>, vector<72x128xbf16>, vector<16x128xf32> -> vector<16x128xf32>
    %45 = arith.addf %39, %44 : vector<16x128xf32>
    %c1_45 = arith.constant 1 : index
    %c2_46 = arith.constant 2 : index
    %c0_47 = arith.constant 0 : index
    %46 = vector.load %arg1[%c1_45, %c2_46, %c0_47] : memref<2x18x72xbf16, #tpu.memory_space<vmem>>, vector<1x16x72xbf16>
    %47 = vector.shape_cast %46 : vector<1x16x72xbf16> to vector<16x72xbf16>
    %c2_48 = arith.constant 2 : index
    %c0_49 = arith.constant 0 : index
    %c0_50 = arith.constant 0 : index
    %48 = vector.load %arg2[%c2_48, %c0_49, %c0_50] : memref<3x72x128xbf16, #tpu.memory_space<vmem>>, vector<1x72x128xbf16>
    %49 = vector.shape_cast %48 : vector<1x72x128xbf16> to vector<72x128xbf16>
    %cst_51 = arith.constant dense<0.000000e+00> : vector<16x128xf32>
    %50 = tpu.matmul %47, %49, %cst_51 {dimension_numbers = #tpu.dot_dimension_numbers<[1], [0], [0], [1], [0, 0, 1, 1], [], []>} : vector<16x72xbf16>, vector<72x128xbf16>, vector<16x128xf32> -> vector<16x128xf32>
    %51 = arith.addf %45, %50 : vector<16x128xf32>
    %52 = vector.broadcast %0 : vector<1x128xf32> to vector<16x128xf32>
    %53 = arith.mulf %51, %52 : vector<16x128xf32>
    %54 = vector.broadcast %1 : vector<1x128xf32> to vector<16x128xf32>
    %55 = arith.addf %53, %54 : vector<16x128xf32>
    %cst_52 = arith.constant 0.000000e+00 : f32
    %56 = vector.broadcast %cst_52 : f32 to vector<16x128xf32>
    %57 = arith.maximumf %55, %56 : vector<16x128xf32>
    %c0_53 = arith.constant 0 : index
    %c0_54 = arith.constant 0 : index
    %58 = vector.load %arg3[%c0_53, %c0_54] : memref<8x16xf32, #tpu.memory_space<vmem>>, vector<8x16xf32>
    %cst_55 = arith.constant dense<0.000000e+00> : vector<8x128xf32>
    %59 = tpu.matmul %58, %57, %cst_55 {dimension_numbers = #tpu.dot_dimension_numbers<[1], [0], [0], [1], [0, 0, 1, 1], [], []>} : vector<8x16xf32>, vector<16x128xf32>, vector<8x128xf32> -> vector<8x128xf32>
    %c0_56 = arith.constant 0 : index
    %c0_57 = arith.constant 0 : index
    %60 = vector.load %arg4[%c0_56, %c0_57] : memref<128x64xf32, #tpu.memory_space<vmem>>, vector<128x64xf32>
    %cst_58 = arith.constant dense<0.000000e+00> : vector<8x64xf32>
    %61 = tpu.matmul %59, %60, %cst_58 {dimension_numbers = #tpu.dot_dimension_numbers<[1], [0], [0], [1], [0, 0, 1, 1], [], []>} : vector<8x128xf32>, vector<128x64xf32>, vector<8x64xf32> -> vector<8x64xf32>
    %62 = arith.addf %32, %61 : vector<8x64xf32>
    %63 = vector.extract_strided_slice %62 {offsets = [0, 0], sizes = [1, 64], strides = [1, 1]} : vector<8x64xf32> to vector<1x64xf32>
    %64 = vector.extract_strided_slice %62 {offsets = [1, 0], sizes = [1, 64], strides = [1, 1]} : vector<8x64xf32> to vector<1x64xf32>
    %65 = vector.extract_strided_slice %62 {offsets = [2, 0], sizes = [1, 64], strides = [1, 1]} : vector<8x64xf32> to vector<1x64xf32>
    %66 = vector.extract_strided_slice %62 {offsets = [3, 0], sizes = [1, 64], strides = [1, 1]} : vector<8x64xf32> to vector<1x64xf32>
    %67 = vector.extract_strided_slice %62 {offsets = [4, 0], sizes = [1, 64], strides = [1, 1]} : vector<8x64xf32> to vector<1x64xf32>
    %68 = vector.extract_strided_slice %62 {offsets = [5, 0], sizes = [1, 64], strides = [1, 1]} : vector<8x64xf32> to vector<1x64xf32>
    %69 = vector.extract_strided_slice %62 {offsets = [6, 0], sizes = [1, 64], strides = [1, 1]} : vector<8x64xf32> to vector<1x64xf32>
    %70 = vector.extract_strided_slice %62 {offsets = [7, 0], sizes = [1, 64], strides = [1, 1]} : vector<8x64xf32> to vector<1x64xf32>
    %71 = tpu.concatenate %63, %64, %65, %66, %67, %68, %69, %70 in 1 : vector<1x64xf32>, vector<1x64xf32>, vector<1x64xf32>, vector<1x64xf32>, vector<1x64xf32>, vector<1x64xf32>, vector<1x64xf32>, vector<1x64xf32> -> vector<1x512xf32>
    %72 = vector.shape_cast %71 : vector<1x512xf32> to vector<1x1x512xf32>
    %73 = arith.truncf %72 : vector<1x1x512xf32> to vector<1x1x512xbf16>
    %c0_59 = arith.constant 0 : index
    %c0_60 = arith.constant 0 : index
    %c0_61 = arith.constant 0 : index
    %74 = vector.load %arg7[%c0_59, %c0_60, %c0_61] : memref<1x1x512xbf16, #tpu.memory_space<vmem>>, vector<1x1x512xbf16>
    tpu.vector_store %arg7[%c0_59, %c0_60, %c0_61], %73 {strides = array<i32>} : memref<1x1x512xbf16, #tpu.memory_space<vmem>>, vector<1x1x512xbf16>,
    return
  }
  func.func @transform_0(%arg0: i32) -> (i32, i32, i32) {
    %c0_i32 = arith.constant 0 : i32
    %c0_i32_0 = arith.constant 0 : i32
    %c0_i32_1 = arith.constant 0 : i32
    return %arg0, %c0_i32, %c0_i32_0 : i32, i32, i32
  }
  func.func @transform_1(%arg0: i32) -> (i32, i32, i32) {
    %c0_i32 = arith.constant 0 : i32
    %c0_i32_0 = arith.constant 0 : i32
    %c0_i32_1 = arith.constant 0 : i32
    %c0_i32_2 = arith.constant 0 : i32
    return %c0_i32, %c0_i32_0, %c0_i32_1 : i32, i32, i32
  }
  func.func @transform_2(%arg0: i32) -> (i32, i32) {
    %c0_i32 = arith.constant 0 : i32
    %c0_i32_0 = arith.constant 0 : i32
    %c0_i32_1 = arith.constant 0 : i32
    return %c0_i32, %c0_i32_0 : i32, i32
  }
  func.func @transform_3(%arg0: i32) -> (i32, i32) {
    %c0_i32 = arith.constant 0 : i32
    %c0_i32_0 = arith.constant 0 : i32
    %c0_i32_1 = arith.constant 0 : i32
    return %c0_i32, %c0_i32_0 : i32, i32
  }
  func.func @transform_4(%arg0: i32) -> (i32, i32) {
    %c0_i32 = arith.constant 0 : i32
    %c0_i32_0 = arith.constant 0 : i32
    %c0_i32_1 = arith.constant 0 : i32
    return %c0_i32, %c0_i32_0 : i32, i32
  }
  func.func @transform_5(%arg0: i32) -> (i32, i32) {
    %c0_i32 = arith.constant 0 : i32
    %c0_i32_0 = arith.constant 0 : i32
    %c0_i32_1 = arith.constant 0 : i32
    return %c0_i32, %c0_i32_0 : i32, i32
  }
  func.func @transform_6(%arg0: i32) -> (i32, i32, i32) {
    %c0_i32 = arith.constant 0 : i32
    %c0_i32_0 = arith.constant 0 : i32
    %c0_i32_1 = arith.constant 0 : i32
    return %arg0, %c0_i32, %c0_i32_0 : i32, i32, i32
  }
}

module attributes {stable_mosaic.version = 11 : i64} {
  func.func @_linear_kernel(%arg0: i32, %arg1: i32, %arg2: memref<2x1024xbf16, #tpu.memory_space<vmem>>, %arg3: memref<1024x1024xbf16, #tpu.memory_space<vmem>>, %arg4: memref<1x1024xf32, #tpu.memory_space<vmem>>, %arg5: memref<2x1024xf32, #tpu.memory_space<vmem>>, %arg6: memref<2x1024xf32, #tpu.memory_space<vmem>>) attributes {dimension_semantics = [#tpu.dimension_semantics<parallel>, #tpu.dimension_semantics<arbitrary>], iteration_bounds = array<i64: 1, 1>, scalar_prefetch = 0 : i64, scratch_operands = 1 : i64, tpu.core_type = #tpu.core_type<tc>, window_params = [{transform_indices = @transform_0, window_bounds = array<i64: 2, 1024>}, {transform_indices = @transform_1, window_bounds = array<i64: 1024, 1024>}, {transform_indices = @transform_2, window_bounds = array<i64: 1, 1024>}, {transform_indices = @transform_3, window_bounds = array<i64: 2, 1024>}]} {
    %c0_i32 = arith.constant 0 : i32
    %0 = arith.cmpi eq, %arg1, %c0_i32 : i32
    %1 = arith.extui %0 : i1 to i32
    %c0_i32_0 = arith.constant 0 : i32
    %2 = arith.cmpi ne, %1, %c0_i32_0 : i32
    scf.if %2 {
      %cst_10 = arith.constant 0.000000e+00 : f32
      %12 = vector.broadcast %cst_10 : f32 to vector<2x1024xf32>
      %c0_11 = arith.constant 0 : index
      %c0_12 = arith.constant 0 : index
      %13 = vector.load %arg6[%c0_11, %c0_12] : memref<2x1024xf32, #tpu.memory_space<vmem>>, vector<2x1024xf32>
      tpu.vector_store %arg6[%c0_11, %c0_12], %12 {strides = array<i32>} : memref<2x1024xf32, #tpu.memory_space<vmem>>, vector<2x1024xf32>,
    } else {
    }
    %c0 = arith.constant 0 : index
    %c0_1 = arith.constant 0 : index
    %3 = vector.load %arg6[%c0, %c0_1] : memref<2x1024xf32, #tpu.memory_space<vmem>>, vector<2x1024xf32>
    %c0_2 = arith.constant 0 : index
    %c0_3 = arith.constant 0 : index
    %4 = vector.load %arg2[%c0_2, %c0_3] : memref<2x1024xbf16, #tpu.memory_space<vmem>>, vector<2x1024xbf16>
    %c0_4 = arith.constant 0 : index
    %c0_5 = arith.constant 0 : index
    %5 = vector.load %arg3[%c0_4, %c0_5] : memref<1024x1024xbf16, #tpu.memory_space<vmem>>, vector<1024x1024xbf16>
    %cst = arith.constant dense<0.000000e+00> : vector<2x1024xf32>
    %6 = tpu.matmul %4, %5, %cst {dimension_numbers = #tpu.dot_dimension_numbers<[1], [1], [0], [0], [0, 0, 1, 0], [], []>} : vector<2x1024xbf16>, vector<1024x1024xbf16>, vector<2x1024xf32> -> vector<2x1024xf32>
    %7 = arith.addf %3, %6 : vector<2x1024xf32>
    %c0_6 = arith.constant 0 : index
    %c0_7 = arith.constant 0 : index
    %8 = vector.load %arg6[%c0_6, %c0_7] : memref<2x1024xf32, #tpu.memory_space<vmem>>, vector<2x1024xf32>
    tpu.vector_store %arg6[%c0_6, %c0_7], %7 {strides = array<i32>} : memref<2x1024xf32, #tpu.memory_space<vmem>>, vector<2x1024xf32>,
    %c0_i32_8 = arith.constant 0 : i32
    %9 = arith.cmpi eq, %arg1, %c0_i32_8 : i32
    %10 = arith.extui %9 : i1 to i32
    %c0_i32_9 = arith.constant 0 : i32
    %11 = arith.cmpi ne, %10, %c0_i32_9 : i32
    scf.if %11 {
      %c0_10 = arith.constant 0 : index
      %c0_11 = arith.constant 0 : index
      %12 = vector.load %arg6[%c0_10, %c0_11] : memref<2x1024xf32, #tpu.memory_space<vmem>>, vector<2x1024xf32>
      %c0_12 = arith.constant 0 : index
      %c0_13 = arith.constant 0 : index
      %13 = vector.load %arg4[%c0_12, %c0_13] : memref<1x1024xf32, #tpu.memory_space<vmem>>, vector<1x1024xf32>
      %14 = vector.broadcast %13 : vector<1x1024xf32> to vector<2x1024xf32>
      %15 = arith.addf %12, %14 : vector<2x1024xf32>
      %c0_14 = arith.constant 0 : index
      %c0_15 = arith.constant 0 : index
      %16 = vector.load %arg5[%c0_14, %c0_15] : memref<2x1024xf32, #tpu.memory_space<vmem>>, vector<2x1024xf32>
      tpu.vector_store %arg5[%c0_14, %c0_15], %15 {strides = array<i32>} : memref<2x1024xf32, #tpu.memory_space<vmem>>, vector<2x1024xf32>,
    } else {
    }
    return
  }
  func.func @transform_0(%arg0: i32, %arg1: i32) -> (i32, i32) {
    %c0_i32 = arith.constant 0 : i32
    %c0_i32_0 = arith.constant 0 : i32
    return %c0_i32, %arg1 : i32, i32
  }
  func.func @transform_1(%arg0: i32, %arg1: i32) -> (i32, i32) {
    %c0_i32 = arith.constant 0 : i32
    return %arg0, %arg1 : i32, i32
  }
  func.func @transform_2(%arg0: i32, %arg1: i32) -> (i32, i32) {
    %c0_i32 = arith.constant 0 : i32
    %c0_i32_0 = arith.constant 0 : i32
    return %c0_i32, %arg0 : i32, i32
  }
  func.func @transform_3(%arg0: i32, %arg1: i32) -> (i32, i32) {
    %c0_i32 = arith.constant 0 : i32
    %c0_i32_0 = arith.constant 0 : i32
    return %c0_i32, %arg0 : i32, i32
  }
}

</mosaic_0001>

<llo_original>
// kernel: conv_inflation_block.3
$region0: #{conv_inflation_block.3}
  #allocation0 [shape = 'u32[]', space=smem, size = 0x4, offset = 0x4, fixed_abs, tag = 'smem constant byte address 0x4 - core index']
  #allocation1 [shape = 'u32[144,128]{1,0:T(1,128)}', space=vmem, size = 0x12000, scoped, tag = 'internal scratch']
  %s0 = inlined_call_operand.vmem [shape: bf16[8,18,72], index: 0, kind: input, shape index: {}]
  %s1 = inlined_call_operand.vmem [shape: bf16[3,72,128], index: 1, kind: input, shape index: {}]
  %s2 = inlined_call_operand.vmem [shape: f32[4,2,128], index: 2, kind: output, shape index: {}]
  %s3 = sld [smem:[#allocation0]]
  $region41: #{conv_inflation_block.3} parent=0
    _
  %s5 = ssub.s32 1, %s3
  %s6 = scalar_select 0, %s5, %s3
  loop: start=0, step=1, limit=6
  $region2: #{conv_inflation_block.3} parent=0 // loop_pre_header
    _
  $region3: #{conv_inflation_block.3} parent=0 // loop_header
    %s8 = sphi 0, %s12
    %p9 = scmp.ge.s32.totalorder %s8, 6
    %s18 = sphi 0, %s20
    %s21 = sphi 0, %s18
    %s22 = sphi 0, %s21
    %s38 = sphi 0, %s22
    %s42 = sphi 0, %s42
    %s44 = sphi 0, %s42
    %s45 = sphi 0, %s44
    %s59 = sphi 0, %s45
    %s65 = sphi 0, %s67
    %s68 = sphi 0, %s65
    %s69 = sphi 0, %s68
    %s85 = sphi 0, %s69
  $region4: #{conv_inflation_block.3} parent=0 // loop_header_branch
    %11 = sbr.rel (%p9) target = $region8
  $region5: #{conv_inflation_block.3} parent=0 // loop_body
    %s13 = ssub.s32 %s8, 1
    %s14 = ssub.s32 %s8, 2
    %s15 = sadd.s32 %s8, 1
    %s16 = ssub.s32 %s8, %s15
    %p17 = scmp.eq.s32.totalorder %s16, 0
    %s19 = sadd.s32 %s18, 1
    %s20 = scalar_select %p17, %s18, %s19
    %p23 = pneg %p17
    %p24 = scmp.eq.s32.totalorder %s8, 3
    %p25 = por %p23, %p24
    %p26 = scmp.ne.s32.totalorder %s18, %s21
    %p27 = scmp.eq.s32.totalorder %s8, 0
    %p28 = por %p26, %p27
    %p29 = scmp.ne.s32.totalorder %s18, %s21
    %p30 = scmp.eq.s32.totalorder %s13, 3
    %p31 = por %p29, %p30
    %p32 = scmp.ne.s32.totalorder %s21, %s22
    %p33 = scmp.eq.s32.totalorder %s13, 0
    %p34 = por %p32, %p33
    %p35 = scmp.ne.s32.totalorder %s21, %s22
    %p36 = scmp.eq.s32.totalorder %s14, 3
    %p37 = por %p35, %p36
    %p39 = scmp.ne.s32.totalorder %s22, %s38
    %p40 = scmp.eq.s32.totalorder %s14, 0
    %p41 = por %p39, %p40
    %s43 = sadd.s32 %s42, 1
    %p46 = scmp.eq.s32.totalorder %s8, 3
    %p47 = scmp.ne.s32.totalorder %s42, %s44
    %p48 = scmp.eq.s32.totalorder %s8, 0
    %p49 = por %p47, %p48
    %p50 = scmp.ne.s32.totalorder %s42, %s44
    %p51 = scmp.eq.s32.totalorder %s13, 3
    %p52 = por %p50, %p51
    %p53 = scmp.ne.s32.totalorder %s44, %s45
    %p54 = scmp.eq.s32.totalorder %s13, 0
    %p55 = por %p53, %p54
    %p56 = scmp.ne.s32.totalorder %s44, %s45
    %p57 = scmp.eq.s32.totalorder %s14, 3
    %p58 = por %p56, %p57
    %p60 = scmp.ne.s32.totalorder %s45, %s59
    %p61 = scmp.eq.s32.totalorder %s14, 0
    %p62 = por %p60, %p61
    %s63 = ssub.s32 %s8, %s15
    %p64 = scmp.eq.s32.totalorder %s63, 0
    %s66 = sadd.s32 %s65, 1
    %s67 = scalar_select %p64, %s65, %s66
    %p70 = pneg %p64
    %p71 = scmp.eq.s32.totalorder %s8, 3
    %p72 = por %p70, %p71
    %p73 = scmp.ne.s32.totalorder %s65, %s68
    %p74 = scmp.eq.s32.totalorder %s8, 0
    %p75 = por %p73, %p74
    %p76 = scmp.ne.s32.totalorder %s65, %s68
    %p77 = scmp.eq.s32.totalorder %s13, 3
    %p78 = por %p76, %p77
    %p79 = scmp.ne.s32.totalorder %s68, %s69
    %p80 = scmp.eq.s32.totalorder %s13, 0
    %p81 = por %p79, %p80
    %p82 = scmp.ne.s32.totalorder %s68, %s69
    %p83 = scmp.eq.s32.totalorder %s14, 3
    %p84 = por %p82, %p83
    %p86 = scmp.ne.s32.totalorder %s69, %s85
    %p87 = scmp.eq.s32.totalorder %s14, 0
    %p88 = por %p86, %p87
    %p89 = scmp.le.s32.totalorder 1, %s8
    %p90 = scmp.lt.s32.totalorder %s8, 5
    %p91 = pnand %p89, %p90
    %p92 = pneg %p91
    // Predicated region
    $region9: #{conv_inflation_block.3} parent=5 // pred_check
      _
    $region10: #{conv_inflation_block.3} parent=5 // pred_check_branch
      %94 = sbr.rel (%p91) target = $region12
    $region11: #{conv_inflation_block.3} parent=5 // pred_region
      %s95 = ssub.s32 %s8, 1
      // Predicated region
      $region13: #{conv_inflation_block.3} parent=11 // pred_check
        %p96 = pneg %p55
      $region14: #{conv_inflation_block.3} parent=11 // pred_check_branch
        %98 = sbr.rel (%p96) target = $region16
      $region15: #{conv_inflation_block.3} parent=11 // pred_region
        _
      $region16: #{conv_inflation_block.3} parent=11 // pred_fallthru
        _
    $region12: #{conv_inflation_block.3} parent=5 // pred_fallthru
      _
    %p99 = scmp.lt.s32.totalorder %s8, 4
    // Predicated region
    $region17: #{conv_inflation_block.3} parent=5 // pred_check
      %p100 = pneg %p99
    $region18: #{conv_inflation_block.3} parent=5 // pred_check_branch
      %102 = sbr.rel (%p100) target = $region20
    $region19: #{conv_inflation_block.3} parent=5 // pred_region
      // Predicated region
      $region21: #{conv_inflation_block.3} parent=19 // pred_check
        %p103 = pneg %p28
      $region22: #{conv_inflation_block.3} parent=19 // pred_check_branch
        %105 = sbr.rel (%p103) target = $region24
      $region23: #{conv_inflation_block.3} parent=19 // pred_region
        %s106 = smul.u32 2, %s8
        %p107 = scmp.lt.s32.totalorder %s106, 7
        %s108 = scalar_select %p107, %s106, 7
        %s109 = smul.addr %s108, 3
        %s110 = smul.addr %s109, 4
        %s111 = scalar_lea.vmem %s0, %s110
        %s112 = smul.u32 2, %s8
      $region24: #{conv_inflation_block.3} parent=19 // pred_fallthru
        _
    $region20: #{conv_inflation_block.3} parent=5 // pred_fallthru
      _
    %p113 = scmp.le.s32.totalorder 1, %s8
    %p114 = scmp.lt.s32.totalorder %s8, 5
    %p115 = pnand %p113, %p114
    %p116 = pneg %p115
    // Predicated region
    $region25: #{conv_inflation_block.3} parent=5 // pred_check
      _
    $region26: #{conv_inflation_block.3} parent=5 // pred_check_branch
      %118 = sbr.rel (%p115) target = $region28
    $region27: #{conv_inflation_block.3} parent=5 // pred_region
      %s119 = ssub.s32 %s8, 1
      %s120 = smul.u32 2, %s13
      %p121 = scmp.lt.s32.totalorder %s120, 7
      %s122 = scalar_select %p121, %s120, 7
      %s123 = smul.addr %s122, 3
      %s124 = smul.addr %s123, 4
      %s125 = scalar_lea.vmem %s0, %s124
      %p126 = pneg %p34
      %p127 = pneg %p31
      %p128 = pneg %p55
      %p129 = pneg %p52
      %p130 = pneg %p81
      %p131 = pneg %p78
      %p132 = scmp.lt.s32.totalorder %s13, 3
      %s133 = scalar_select %p132, %s13, 3
      %s134 = smul.addr %s133, 2
      %s135 = scalar_lea.vmem %s2, %s134
      %s136 = smul.u32 2, %s13
      %p137 = scmp.lt.s32.totalorder %s136, 7
      %s138 = scalar_select %p137, %s136, 7
      %s139 = smul.addr %s138, 3
      %s140 = smul.addr %s139, 4
      %s141 = scalar_lea.vmem %s0, %s140
      %s142 = smul.u32 2, %s13
      %p143 = scmp.lt.s32.totalorder %s13, 3
      %s144 = scalar_select %p143, %s13, 3
      %s145 = smul.addr %s144, 2
      %s146 = scalar_lea.vmem %s2, %s145
      %v148 = vld [vmem:[%s141] sm:$0xf]
      %v149 = vld [vmem:[%s141 + $0x4] sm:$0xf]
      %v150 = vld [vmem:[%s1] sm:$0xf]
      %v151 = vld [vmem:[%s1 + $0x4] sm:$0xf]
      %v152 = vld [vmem:[%s1 + $0x8] sm:$0xf]
      %v153 = vld [vmem:[%s1 + $0xc] sm:$0xf]
      %v154 = vld [vmem:[%s1 + $0x10] sm:$0xf]
      %v155 = vld [vmem:[%s1 + $0x14] sm:$0xf]
      %v156 = vld [vmem:[%s1 + $0x18] sm:$0xf]
      %v157 = vld [vmem:[%s1 + $0x1c] sm:$0xf]
      %v158 = vld [vmem:[%s1 + $0x20] sm:$0xf]
      %v159 = vld [vmem:[%s141 + $0x8] sm:$0x1]
      %s160 = scalar_lea.vmem %s1, 36
      %v161 = vld [vmem:[%s160] sm:$0xf]
      %v162 = vld [vmem:[%s160 + $0x4] sm:$0xf]
      %v163 = vld [vmem:[%s160 + $0x8] sm:$0xf]
      %v164 = vld [vmem:[%s160 + $0xc] sm:$0xf]
      %v165 = vld [vmem:[%s160 + $0x10] sm:$0xf]
      %v166 = vld [vmem:[%s160 + $0x14] sm:$0xf]
      %v167 = vld [vmem:[%s160 + $0x18] sm:$0xf]
      %v168 = vld [vmem:[%s160 + $0x1c] sm:$0xf]
      %v169 = vld [vmem:[%s160 + $0x20] sm:$0xf]
      %v173 = vunpack.c.l.b16 %v148
      %v174 = vunpack.c.l.b16 %v149
      %v175 = vunpack.c.l.b16 %v159
      %v176 = vpack.c.b16 %v174, %v173
      %v177 = vpack.c.b16 %v175, %v175
      %vm178 = vsmask.f32 7424
      %v180 = vshrl.u32 %v176, 16
      %v182 = vshll.u32 %v176, 16
      %v184 = vrot.slane %v182, 1
      %v185 = vor.u32 %v180, %v184
      %v187 = vshll.u32 %v177, 16
      %v189 = vrot.slane %v187, 1
      %v190 = vsel %vm178, %v185, %v189
      %v200 = vunpack.c.l.b16 %v161
      %v201 = vunpack.c.l.b16 %v162
      %v202 = vunpack.c.l.b16 %v163
      %v203 = vunpack.c.l.b16 %v164
      %v204 = vunpack.c.l.b16 %v165
      %v205 = vunpack.c.l.b16 %v166
      %v206 = vunpack.c.l.b16 %v167
      %v207 = vunpack.c.l.b16 %v168
      %v208 = vunpack.c.l.b16 %v169
      %v209 = vpack.c.b16 %v201, %v200
      %v210 = vpack.c.b16 %v203, %v202
      %v211 = vpack.c.b16 %v205, %v204
      %v212 = vpack.c.b16 %v207, %v206
      %v213 = vpack.c.b16 %v208, %v208
      %vm218 = vcmask 588800
      %v220 = vsel %vm218, %v190, 0
      %vm222 = vcmask 1043456
      %v224 = vsel %vm222, %v213, 0
      %226 = vmatprep.subr.bf16.mxu0 0
      %227 = vmatpush1.bf16.msra.mxu0 %v209
      %228 = vmatprep.subr.bf16.mxu0 0
      %229 = vmatpush1.bf16.msra.mxu0 %v210
      %230 = vmatprep.subr.bf16.mxu0 0
      %231 = vmatpush1.bf16.msra.mxu0 %v211
      %232 = vmatprep.subr.bf16.mxu0 0
      %233 = vmatpush1.bf16.msra.mxu0 %v212
      %234 = vmatprep.subr.bf16.mxu0 0
      %235 = vmatpush1.bf16.msra.mxu0 %v224
      %236 = vmatprep.subr.bf16.mxu0 0
      %237 = vmatpush1.bf16.msra.mxu0 0
      %238 = vmatprep.subr.bf16.mxu0 0
      %239 = vmatpush1.bf16.msra.mxu0 0
      %240 = vmatprep.subr.bf16.mxu0 0
      %241 = vmatpush1.bf16.msra.mxu0 0
      %242 = vmatprep.subr.bf16.mxu0 0
      %243 = vmatpush1.bf16.msra.mxu0 0
      %244 = vmatprep.subr.bf16.mxu0 0
      %245 = vmatpush1.bf16.msra.mxu0 0
      %246 = vmatprep.subr.bf16.mxu0 0
      %247 = vmatpush1.bf16.msra.mxu0 0
      %248 = vmatprep.subr.bf16.mxu0 0
      %249 = vmatpush1.bf16.msra.mxu0 0
      %250 = vmatprep.subr.bf16.mxu0 0
      %251 = vmatpush1.bf16.msra.mxu0 0
      %252 = vmatprep.subr.bf16.mxu0 0
      %253 = vmatpush1.bf16.msra.mxu0 0
      %254 = vmatprep.subr.bf16.mxu0 0
      %255 = vmatpush1.bf16.msra.mxu0 0
      %256 = vmatprep.subr.bf16.mxu0 0
      %257 = vmatpush1.bf16.msra.mxu0 0
      %258 = vmatprep.mubr.bf16.mxu0 0
      %259 = vmatmul.mubr.bf16.gmra.mrb[0].mxu0 %v220
      %v260 = vpop.f32.mrb[0].mxu0
      %v261 = vadd.f32 0.0, %v260
      %v262 = vpop.f32.mrb[0].mxu0
      %v263 = vpop.f32.mrb[0].mxu0
      %v264 = vadd.f32 0.0, %v263
      %v265 = vpop.f32.mrb[0].mxu0
      %266 = vdwg.mxu0
      %v276 = vunpack.c.l.b16 %v150
      %v277 = vunpack.c.l.b16 %v151
      %v278 = vunpack.c.l.b16 %v152
      %v279 = vunpack.c.l.b16 %v153
      %v280 = vunpack.c.l.b16 %v154
      %v281 = vunpack.c.l.b16 %v155
      %v282 = vunpack.c.l.b16 %v156
      %v283 = vunpack.c.l.b16 %v157
      %v284 = vunpack.c.l.b16 %v158
      %v285 = vpack.c.b16 %v277, %v276
      %v286 = vpack.c.b16 %v279, %v278
      %v287 = vpack.c.b16 %v281, %v280
      %v288 = vpack.c.b16 %v283, %v282
      %v289 = vpack.c.b16 %v284, %v284
      %v294 = vsel %vm218, %v176, 0
      %v297 = vsel %vm222, %v289, 0
      %299 = vmatprep.subr.bf16.mxu0 0
      %300 = vmatpush1.bf16.msra.mxu0 %v285
      %301 = vmatprep.subr.bf16.mxu0 0
      %302 = vmatpush1.bf16.msra.mxu0 %v286
      %303 = vmatprep.subr.bf16.mxu0 0
      %304 = vmatpush1.bf16.msra.mxu0 %v287
      %305 = vmatprep.subr.bf16.mxu0 0
      %306 = vmatpush1.bf16.msra.mxu0 %v288
      %307 = vmatprep.subr.bf16.mxu0 0
      %308 = vmatpush1.bf16.msra.mxu0 %v297
      %309 = vmatprep.subr.bf16.mxu0 0
      %310 = vmatpush1.bf16.msra.mxu0 0
      %311 = vmatprep.subr.bf16.mxu0 0
      %312 = vmatpush1.bf16.msra.mxu0 0
      %313 = vmatprep.subr.bf16.mxu0 0
      %314 = vmatpush1.bf16.msra.mxu0 0
      %315 = vmatprep.subr.bf16.mxu0 0
      %316 = vmatpush1.bf16.msra.mxu0 0
      %317 = vmatprep.subr.bf16.mxu0 0
      %318 = vmatpush1.bf16.msra.mxu0 0
      %319 = vmatprep.subr.bf16.mxu0 0
      %320 = vmatpush1.bf16.msra.mxu0 0
      %321 = vmatprep.subr.bf16.mxu0 0
      %322 = vmatpush1.bf16.msra.mxu0 0
      %323 = vmatprep.subr.bf16.mxu0 0
      %324 = vmatpush1.bf16.msra.mxu0 0
      %325 = vmatprep.subr.bf16.mxu0 0
      %326 = vmatpush1.bf16.msra.mxu0 0
      %327 = vmatprep.subr.bf16.mxu0 0
      %328 = vmatpush1.bf16.msra.mxu0 0
      %329 = vmatprep.subr.bf16.mxu0 0
      %330 = vmatpush1.bf16.msra.mxu0 0
      %331 = vmatprep.mubr.bf16.mxu0 0
      %332 = vmatmul.mubr.bf16.gmra.mrb[0].mxu0 %v294
      %v333 = vpop.f32.mrb[0].mxu0
      %v334 = vadd.f32 %v261, %v333
      %v335 = vpop.f32.mrb[0].mxu0
      %v336 = vpop.f32.mrb[0].mxu0
      %v337 = vadd.f32 %v264, %v336
      %v338 = vpop.f32.mrb[0].mxu0
      %339 = vdwg.mxu0
      %v340 = vld [vmem:[%s141] sm:$0xe]
      %s341 = scalar_lea.vmem %s1, 72
      %v342 = vld [vmem:[%s341] sm:$0xf]
      %v343 = vld [vmem:[%s341 + $0x4] sm:$0xf]
      %v344 = vld [vmem:[%s341 + $0x8] sm:$0xf]
      %v345 = vld [vmem:[%s341 + $0xc] sm:$0xf]
      %v346 = vld [vmem:[%s341 + $0x10] sm:$0xf]
      %v347 = vld [vmem:[%s341 + $0x14] sm:$0xf]
      %v348 = vld [vmem:[%s341 + $0x18] sm:$0xf]
      %v349 = vld [vmem:[%s341 + $0x1c] sm:$0xf]
      %v350 = vld [vmem:[%s341 + $0x20] sm:$0xf]
      %v352 = vunpack.c.l.b16 %v340
      %v353 = vpack.c.b16 %v174, %v352
      %vm354 = vcmask 1046528
      %v355 = vrot.slane %v353, 1
      %v356 = vrot.slane %v177, 1
      %v357 = vsel %vm354, %v355, %v356
      %v367 = vunpack.c.l.b16 %v342
      %v368 = vunpack.c.l.b16 %v343
      %v369 = vunpack.c.l.b16 %v344
      %v370 = vunpack.c.l.b16 %v345
      %v371 = vunpack.c.l.b16 %v346
      %v372 = vunpack.c.l.b16 %v347
      %v373 = vunpack.c.l.b16 %v348
      %v374 = vunpack.c.l.b16 %v349
      %v375 = vunpack.c.l.b16 %v350
      %v376 = vpack.c.b16 %v368, %v367
      %v377 = vpack.c.b16 %v370, %v369
      %v378 = vpack.c.b16 %v372, %v371
      %v379 = vpack.c.b16 %v374, %v373
      %v380 = vpack.c.b16 %v375, %v375
      %v386 = vsel %vm218, %v357, 0
      %v389 = vsel %vm222, %v380, 0
      %391 = vmatprep.subr.bf16.mxu0 0
      %392 = vmatpush1.bf16.msra.mxu0 %v376
      %393 = vmatprep.subr.bf16.mxu0 0
      %394 = vmatpush1.bf16.msra.mxu0 %v377
      %395 = vmatprep.subr.bf16.mxu0 0
      %396 = vmatpush1.bf16.msra.mxu0 %v378
      %397 = vmatprep.subr.bf16.mxu0 0
      %398 = vmatpush1.bf16.msra.mxu0 %v379
      %399 = vmatprep.subr.bf16.mxu0 0
      %400 = vmatpush1.bf16.msra.mxu0 %v389
      %401 = vmatprep.subr.bf16.mxu0 0
      %402 = vmatpush1.bf16.msra.mxu0 0
      %403 = vmatprep.subr.bf16.mxu0 0
      %404 = vmatpush1.bf16.msra.mxu0 0
      %405 = vmatprep.subr.bf16.mxu0 0
      %406 = vmatpush1.bf16.msra.mxu0 0
      %407 = vmatprep.subr.bf16.mxu0 0
      %408 = vmatpush1.bf16.msra.mxu0 0
      %409 = vmatprep.subr.bf16.mxu0 0
      %410 = vmatpush1.bf16.msra.mxu0 0
      %411 = vmatprep.subr.bf16.mxu0 0
      %412 = vmatpush1.bf16.msra.mxu0 0
      %413 = vmatprep.subr.bf16.mxu0 0
      %414 = vmatpush1.bf16.msra.mxu0 0
      %415 = vmatprep.subr.bf16.mxu0 0
      %416 = vmatpush1.bf16.msra.mxu0 0
      %417 = vmatprep.subr.bf16.mxu0 0
      %418 = vmatpush1.bf16.msra.mxu0 0
      %419 = vmatprep.subr.bf16.mxu0 0
      %420 = vmatpush1.bf16.msra.mxu0 0
      %421 = vmatprep.subr.bf16.mxu0 0
      %422 = vmatpush1.bf16.msra.mxu0 0
      %423 = vmatprep.mubr.bf16.mxu0 0
      %424 = vmatmul.mubr.bf16.gmra.mrb[0].mxu0 %v386
      %v425 = vpop.f32.mrb[0].mxu0
      %v426 = vadd.f32 0.0, %v425
      %v427 = vpop.f32.mrb[0].mxu0
      %v428 = vpop.f32.mrb[0].mxu0
      %v429 = vadd.f32 0.0, %v428
      %v430 = vpop.f32.mrb[0].mxu0
      %431 = vdwg.mxu0
      %v432 = vadd.f32 %v334, %v426
      %v433 = vadd.f32 %v337, %v429
      %v434 = vadd.f32 %v432, %v433
      %v435 = vrot.slane %v434, 4
      %v436 = vadd.f32 %v434, %v435
      %v437 = vrot.slane %v436, 2
      %v438 = vadd.f32 %v436, %v437
      %v439 = vrot.slane %v438, 1
      %v440 = vadd.f32 %v438, %v439
      %v441 = vadd.f32 %v440, 0.0
      %v442 = vmul.f32 %v432, %v432
      %v443 = vmul.f32 %v433, %v433
      %v444 = vadd.f32 %v442, %v443
      %v445 = vrot.slane %v444, 4
      %v446 = vadd.f32 %v444, %v445
      %v447 = vrot.slane %v446, 2
      %v448 = vadd.f32 %v446, %v447
      %v449 = vrot.slane %v448, 1
      %v450 = vadd.f32 %v448, %v449
      %v451 = vadd.f32 %v450, 0.0
      %s452 = scalar_lea.vmem %s141, 12
      %v453 = vld [vmem:[%s452] sm:$0xf]
      %v454 = vld [vmem:[%s452 + $0x4] sm:$0xf]
      %v455 = vld [vmem:[%s452 + $0x8] sm:$0x1]
      %v459 = vunpack.c.l.b16 %v453
      %v460 = vunpack.c.l.b16 %v454
      %v461 = vunpack.c.l.b16 %v455
      %v462 = vpack.c.b16 %v460, %v459
      %v463 = vpack.c.b16 %v461, %v461
      %v465 = vshrl.u32 %v462, 16
      %v467 = vshll.u32 %v462, 16
      %v469 = vrot.slane %v467, 1
      %v470 = vor.u32 %v465, %v469
      %v472 = vshll.u32 %v463, 16
      %v474 = vrot.slane %v472, 1
      %v475 = vsel %vm178, %v470, %v474
      %v477 = vsel %vm218, %v475, 0
      %479 = vmatprep.subr.bf16.mxu0 0
      %480 = vmatpush1.bf16.msra.mxu0 %v209
      %481 = vmatprep.subr.bf16.mxu0 0
      %482 = vmatpush1.bf16.msra.mxu0 %v210
      %483 = vmatprep.subr.bf16.mxu0 0
      %484 = vmatpush1.bf16.msra.mxu0 %v211
      %485 = vmatprep.subr.bf16.mxu0 0
      %486 = vmatpush1.bf16.msra.mxu0 %v212
      %487 = vmatprep.subr.bf16.mxu0 0
      %488 = vmatpush1.bf16.msra.mxu0 %v224
      %489 = vmatprep.subr.bf16.mxu0 0
      %490 = vmatpush1.bf16.msra.mxu0 0
      %491 = vmatprep.subr.bf16.mxu0 0
      %492 = vmatpush1.bf16.msra.mxu0 0
      %493 = vmatprep.subr.bf16.mxu0 0
      %494 = vmatpush1.bf16.msra.mxu0 0
      %495 = vmatprep.subr.bf16.mxu0 0
      %496 = vmatpush1.bf16.msra.mxu0 0
      %497 = vmatprep.subr.bf16.mxu0 0
      %498 = vmatpush1.bf16.msra.mxu0 0
      %499 = vmatprep.subr.bf16.mxu0 0
      %500 = vmatpush1.bf16.msra.mxu0 0
      %501 = vmatprep.subr.bf16.mxu0 0
      %502 = vmatpush1.bf16.msra.mxu0 0
      %503 = vmatprep.subr.bf16.mxu0 0
      %504 = vmatpush1.bf16.msra.mxu0 0
      %505 = vmatprep.subr.bf16.mxu0 0
      %506 = vmatpush1.bf16.msra.mxu0 0
      %507 = vmatprep.subr.bf16.mxu0 0
      %508 = vmatpush1.bf16.msra.mxu0 0
      %509 = vmatprep.subr.bf16.mxu0 0
      %510 = vmatpush1.bf16.msra.mxu0 0
      %511 = vmatprep.mubr.bf16.mxu0 0
      %512 = vmatmul.mubr.bf16.gmra.mrb[0].mxu0 %v477
      %v513 = vpop.f32.mrb[0].mxu0
      %v514 = vadd.f32 0.0, %v513
      %v515 = vpop.f32.mrb[0].mxu0
      %v516 = vpop.f32.mrb[0].mxu0
      %v517 = vadd.f32 0.0, %v516
      %v518 = vpop.f32.mrb[0].mxu0
      %519 = vdwg.mxu0
      %v520 = vsel %vm218, %v462, 0
      %522 = vmatprep.subr.bf16.mxu0 0
      %523 = vmatpush1.bf16.msra.mxu0 %v285
      %524 = vmatprep.subr.bf16.mxu0 0
      %525 = vmatpush1.bf16.msra.mxu0 %v286
      %526 = vmatprep.subr.bf16.mxu0 0
      %527 = vmatpush1.bf16.msra.mxu0 %v287
      %528 = vmatprep.subr.bf16.mxu0 0
      %529 = vmatpush1.bf16.msra.mxu0 %v288
      %530 = vmatprep.subr.bf16.mxu0 0
      %531 = vmatpush1.bf16.msra.mxu0 %v297
      %532 = vmatprep.subr.bf16.mxu0 0
      %533 = vmatpush1.bf16.msra.mxu0 0
      %534 = vmatprep.subr.bf16.mxu0 0
      %535 = vmatpush1.bf16.msra.mxu0 0
      %536 = vmatprep.subr.bf16.mxu0 0
      %537 = vmatpush1.bf16.msra.mxu0 0
      %538 = vmatprep.subr.bf16.mxu0 0
      %539 = vmatpush1.bf16.msra.mxu0 0
      %540 = vmatprep.subr.bf16.mxu0 0
      %541 = vmatpush1.bf16.msra.mxu0 0
      %542 = vmatprep.subr.bf16.mxu0 0
      %543 = vmatpush1.bf16.msra.mxu0 0
      %544 = vmatprep.subr.bf16.mxu0 0
      %545 = vmatpush1.bf16.msra.mxu0 0
      %546 = vmatprep.subr.bf16.mxu0 0
      %547 = vmatpush1.bf16.msra.mxu0 0
      %548 = vmatprep.subr.bf16.mxu0 0
      %549 = vmatpush1.bf16.msra.mxu0 0
      %550 = vmatprep.subr.bf16.mxu0 0
      %551 = vmatpush1.bf16.msra.mxu0 0
      %552 = vmatprep.subr.bf16.mxu0 0
      %553 = vmatpush1.bf16.msra.mxu0 0
      %554 = vmatprep.mubr.bf16.mxu0 0
      %555 = vmatmul.mubr.bf16.gmra.mrb[0].mxu0 %v520
      %v556 = vpop.f32.mrb[0].mxu0
      %v557 = vadd.f32 %v514, %v556
      %v558 = vpop.f32.mrb[0].mxu0
      %v559 = vpop.f32.mrb[0].mxu0
      %v560 = vadd.f32 %v517, %v559
      %v561 = vpop.f32.mrb[0].mxu0
      %562 = vdwg.mxu0
      %v563 = vld [vmem:[%s452] sm:$0xe]
      %v565 = vunpack.c.l.b16 %v563
      %v566 = vpack.c.b16 %v460, %v565
      %v567 = vrot.slane %v566, 1
      %v568 = vrot.slane %v463, 1
      %v569 = vsel %vm354, %v567, %v568
      %v571 = vsel %vm218, %v569, 0
      %573 = vmatprep.subr.bf16.mxu0 0
      %574 = vmatpush1.bf16.msra.mxu0 %v376
      %575 = vmatprep.subr.bf16.mxu0 0
      %576 = vmatpush1.bf16.msra.mxu0 %v377
      %577 = vmatprep.subr.bf16.mxu0 0
      %578 = vmatpush1.bf16.msra.mxu0 %v378
      %579 = vmatprep.subr.bf16.mxu0 0
      %580 = vmatpush1.bf16.msra.mxu0 %v379
      %581 = vmatprep.subr.bf16.mxu0 0
      %582 = vmatpush1.bf16.msra.mxu0 %v389
      %583 = vmatprep.subr.bf16.mxu0 0
      %584 = vmatpush1.bf16.msra.mxu0 0
      %585 = vmatprep.subr.bf16.mxu0 0
      %586 = vmatpush1.bf16.msra.mxu0 0
      %587 = vmatprep.subr.bf16.mxu0 0
      %588 = vmatpush1.bf16.msra.mxu0 0
      %589 = vmatprep.subr.bf16.mxu0 0
      %590 = vmatpush1.bf16.msra.mxu0 0
      %591 = vmatprep.subr.bf16.mxu0 0
      %592 = vmatpush1.bf16.msra.mxu0 0
      %593 = vmatprep.subr.bf16.mxu0 0
      %594 = vmatpush1.bf16.msra.mxu0 0
      %595 = vmatprep.subr.bf16.mxu0 0
      %596 = vmatpush1.bf16.msra.mxu0 0
      %597 = vmatprep.subr.bf16.mxu0 0
      %598 = vmatpush1.bf16.msra.mxu0 0
      %599 = vmatprep.subr.bf16.mxu0 0
      %600 = vmatpush1.bf16.msra.mxu0 0
      %601 = vmatprep.subr.bf16.mxu0 0
      %602 = vmatpush1.bf16.msra.mxu0 0
      %603 = vmatprep.subr.bf16.mxu0 0
      %604 = vmatpush1.bf16.msra.mxu0 0
      %605 = vmatprep.mubr.bf16.mxu0 0
      %606 = vmatmul.mubr.bf16.gmra.mrb[0].mxu0 %v571
      %v607 = vpop.f32.mrb[0].mxu0
      %v608 = vadd.f32 0.0, %v607
      %v609 = vpop.f32.mrb[0].mxu0
      %v610 = vpop.f32.mrb[0].mxu0
      %v611 = vadd.f32 0.0, %v610
      %v612 = vpop.f32.mrb[0].mxu0
      %613 = vdwg.mxu0
      %v614 = vadd.f32 %v557, %v608
      %v615 = vadd.f32 %v560, %v611
      %v616 = vadd.f32 %v614, %v615
      %v617 = vrot.slane %v616, 4
      %v618 = vadd.f32 %v616, %v617
      %v619 = vrot.slane %v618, 2
      %v620 = vadd.f32 %v618, %v619
      %v621 = vrot.slane %v620, 1
      %v622 = vadd.f32 %v620, %v621
      %v623 = vadd.f32 %v441, %v622
      %v624 = vmul.f32 %v614, %v614
      %v625 = vmul.f32 %v615, %v615
      %v626 = vadd.f32 %v624, %v625
      %v627 = vrot.slane %v626, 4
      %v628 = vadd.f32 %v626, %v627
      %v629 = vrot.slane %v628, 2
      %v630 = vadd.f32 %v628, %v629
      %v631 = vrot.slane %v630, 1
      %v632 = vadd.f32 %v630, %v631
      %v633 = vadd.f32 %v451, %v632
      %634 = vst [vmem:[%s146] sm:$0x1] %v623
      %635 = vst [vmem:[%s146 + $0x1] sm:$0x1] %v633
      %p636 = scmp.lt.s32.totalorder %s13, 3
      %s637 = scalar_select %p636, %s13, 3
      %s638 = smul.addr %s637, 2
      %s639 = scalar_lea.vmem %s2, %s638
      // Predicated region
      $region29: #{conv_inflation_block.3} parent=27 // pred_check
        %p640 = pneg %p78
      $region30: #{conv_inflation_block.3} parent=27 // pred_check_branch
        %642 = sbr.rel (%p640) target = $region32
      $region31: #{conv_inflation_block.3} parent=27 // pred_region
        _
      $region32: #{conv_inflation_block.3} parent=27 // pred_fallthru
        _
    $region28: #{conv_inflation_block.3} parent=5 // pred_fallthru
      _
    %p643 = scmp.le.s32.totalorder 2, %s8
    // Predicated region
    $region33: #{conv_inflation_block.3} parent=5 // pred_check
      %p644 = pneg %p643
    $region34: #{conv_inflation_block.3} parent=5 // pred_check_branch
      %646 = sbr.rel (%p644) target = $region36
    $region35: #{conv_inflation_block.3} parent=5 // pred_region
      %s647 = ssub.s32 %s8, 2
      // Predicated region
      $region37: #{conv_inflation_block.3} parent=35 // pred_check
        %p648 = pneg %p84
      $region38: #{conv_inflation_block.3} parent=35 // pred_check_branch
        %650 = sbr.rel (%p648) target = $region40
      $region39: #{conv_inflation_block.3} parent=35 // pred_region
        %p651 = scmp.lt.s32.totalorder %s14, 3
        %s652 = scalar_select %p651, %s14, 3
        %s653 = smul.addr %s652, 2
        %s654 = scalar_lea.vmem %s2, %s653
      $region40: #{conv_inflation_block.3} parent=35 // pred_fallthru
        _
    $region36: #{conv_inflation_block.3} parent=5 // pred_fallthru
      _
  $region6: #{conv_inflation_block.3} parent=0 // loop_footer
    %s12 = sadd.s32 1, %s8
  $region7: #{conv_inflation_block.3} parent=0 // loop_footer_branch
    %7 = sbr.rel target = $region3
  $region8: #{conv_inflation_block.3} parent=0 // loop_exit
    _

// kernel: tile.18
$region0: #{tile.18}
  #allocation0 [shape = 's32[1]{0}', space=sflag, size = 0x4, scoped, tag = 'scoped memory for tile.18']
  %s0 = inlined_call_operand.vmem [shape: f32[8], index: 0, kind: input, shape index: {}]
  %s1 = inlined_call_operand.vmem [shape: f32[16,8], index: 1, kind: output, shape index: {}]
  // Predicated region
  $region2: #{tile.18} parent=0 // pred_check
    _
  $region3: #{tile.18} parent=0 // pred_check_branch
    %3 = sbr.rel (0) target = $region5
  $region4: #{tile.18} parent=0 // pred_region
    _
  $region5: #{tile.18} parent=0 // pred_fallthru
    _
  %v4 = vld [vmem:[%s0] ss:$0 sm:$0xff]
  %5 = vst [vmem:[%s1] sm:$0xff] %v4
  %s6 = scalar_lea.vmem %s1, 8
  %7 = vst [vmem:[%s6] sm:$0xff] %v4

// kernel: tile.19
$region0: #{tile.19}
  %s0 = inlined_call_operand.vmem [shape: f32[16,8], index: 0, kind: input, shape index: {}]
  %s1 = inlined_call_operand.vmem [shape: f32[1,128], index: 1, kind: output, shape index: {}]
  $region1: #{tile.19} parent=0
    #allocation0 [shape = 'u8[4096]{0}', space=vmem, size = 0x1000, scoped, tag = 'scoped mem for output reshape']
    %v2 = vld [vmem:[%s0] sm:$0x1]
    %vm3 = vcmask 64512
    %4 = vst.msk [vmem:[#allocation0] sm:$0x1] %vm3, %v2
    %s5 = scalar_lea.vmem %s0, 15
    %v6 = vld [vmem:[%s5] sm:$0x1]
    %7 = vrot.lane.b32.xlu0 %v6, 120
    %v8 = vpop.permute.xlu0 %7
    %vm9 = vcmask 1048512
    %10 = vst.msk [vmem:[#allocation0] sm:$0x1] %vm9, %v8
    %s11 = scalar_lea.vmem %s0, 14
    %v12 = vld [vmem:[%s11] sm:$0x1]
    %13 = vrot.lane.b32.xlu0 %v12, 112
    %v14 = vpop.permute.xlu0 %13
    %vm15 = vcmask 982912
    %16 = vst.msk [vmem:[#allocation0] sm:$0x1] %vm15, %v14
    %s17 = scalar_lea.vmem %s0, 13
    %v18 = vld [vmem:[%s17] sm:$0x1]
    %19 = vrot.lane.b32.xlu0 %v18, 104
    %v20 = vpop.permute.xlu0 %19
    %vm21 = vcmask 917312
    %22 = vst.msk [vmem:[#allocation0] sm:$0x1] %vm21, %v20
    %s23 = scalar_lea.vmem %s0, 12
    %v24 = vld [vmem:[%s23] sm:$0x1]
    %25 = vrot.lane.b32.xlu0 %v24, 96
    %v26 = vpop.permute.xlu0 %25
    %vm27 = vcmask 851712
    %28 = vst.msk [vmem:[#allocation0] sm:$0x1] %vm27, %v26
    %s29 = scalar_lea.vmem %s0, 11
    %v30 = vld [vmem:[%s29] sm:$0x1]
    %31 = vrot.lane.b32.xlu0 %v30, 88
    %v32 = vpop.permute.xlu0 %31
    %vm33 = vcmask 786112
    %34 = vst.msk [vmem:[#allocation0] sm:$0x1] %vm33, %v32
    %s35 = scalar_lea.vmem %s0, 10
    %v36 = vld [vmem:[%s35] sm:$0x1]
    %37 = vrot.lane.b32.xlu0 %v36, 80
    %v38 = vpop.permute.xlu0 %37
    %vm39 = vcmask 720512
    %40 = vst.msk [vmem:[#allocation0] sm:$0x1] %vm39, %v38
    %s41 = scalar_lea.vmem %s0, 9
    %v42 = vld [vmem:[%s41] sm:$0x1]
    %43 = vrot.lane.b32.xlu0 %v42, 72
    %v44 = vpop.permute.xlu0 %43
    %vm45 = vcmask 654912
    %46 = vst.msk [vmem:[#allocation0] sm:$0x1] %vm45, %v44
    %s47 = scalar_lea.vmem %s0, 8
    %v48 = vld [vmem:[%s47] sm:$0x1]
    %49 = vrot.lane.b32.xlu0 %v48, 64
    %v50 = vpop.permute.xlu0 %49
    %vm51 = vcmask 589312
    %52 = vst.msk [vmem:[#allocation0] sm:$0x1] %vm51, %v50
    %s53 = scalar_lea.vmem %s0, 7
    %v54 = vld [vmem:[%s53] sm:$0x1]
    %55 = vrot.lane.b32.xlu0 %v54, 56
    %v56 = vpop.permute.xlu0 %55
    %vm57 = vcmask 523712
    %58 = vst.msk [vmem:[#allocation0] sm:$0x1] %vm57, %v56
    %s59 = scalar_lea.vmem %s0, 6
    %v60 = vld [vmem:[%s59] sm:$0x1]
    %61 = vrot.lane.b32.xlu0 %v60, 48
    %v62 = vpop.permute.xlu0 %61
    %vm63 = vcmask 458112
    %64 = vst.msk [vmem:[#allocation0] sm:$0x1] %vm63, %v62
    %s65 = scalar_lea.vmem %s0, 5
    %v66 = vld [vmem:[%s65] sm:$0x1]
    %67 = vrot.lane.b32.xlu0 %v66, 40
    %v68 = vpop.permute.xlu0 %67
    %vm69 = vcmask 392512
    %70 = vst.msk [vmem:[#allocation0] sm:$0x1] %vm69, %v68
    %s71 = scalar_lea.vmem %s0, 4
    %v72 = vld [vmem:[%s71] sm:$0x1]
    %73 = vrot.lane.b32.xlu0 %v72, 32
    %v74 = vpop.permute.xlu0 %73
    %vm75 = vcmask 326912
    %76 = vst.msk [vmem:[#allocation0] sm:$0x1] %vm75, %v74
    %s77 = scalar_lea.vmem %s0, 3
    %v78 = vld [vmem:[%s77] sm:$0x1]
    %79 = vrot.lane.b32.xlu0 %v78, 24
    %v80 = vpop.permute.xlu0 %79
    %vm81 = vcmask 261312
    %82 = vst.msk [vmem:[#allocation0] sm:$0x1] %vm81, %v80
    %s83 = scalar_lea.vmem %s0, 2
    %v84 = vld [vmem:[%s83] sm:$0x1]
    %85 = vrot.lane.b32.xlu0 %v84, 16
    %v86 = vpop.permute.xlu0 %85
    %vm87 = vcmask 195712
    %88 = vst.msk [vmem:[#allocation0] sm:$0x1] %vm87, %v86
    %s89 = scalar_lea.vmem %s0, 1
    %v90 = vld [vmem:[%s89] sm:$0x1]
    %91 = vrot.lane.b32.xlu0 %v90, 8
    %v92 = vpop.permute.xlu0 %91
    %vm93 = vcmask 130112
    %94 = vst.msk [vmem:[#allocation0] sm:$0x1] %vm93, %v92
    %s96 = sshllo.u32 0, 1
    %v98 = vld [vmem:[#allocation0] sm:%s96]
    %s99 = sshllo.u32 0, 1
    %100 = vst [vmem:[%s1] sm:%s99] %v98

// kernel: conv_inflation_block.4
$region0: #{conv_inflation_block.4}
  #allocation0 [shape = 'u32[]', space=smem, size = 0x4, offset = 0x4, fixed_abs, tag = 'smem constant byte address 0x4 - core index']
  #allocation1 [shape = 'u32[144,128]{1,0:T(1,128)}', space=vmem, size = 0x12000, scoped, tag = 'internal scratch']
  %s0 = inlined_call_operand.vmem [shape: bf16[8,18,72], index: 0, kind: input, shape index: {}]
  %s1 = inlined_call_operand.vmem [shape: bf16[3,72,128], index: 1, kind: input, shape index: {}]
  %s2 = inlined_call_operand.vmem [shape: f32[8,16], index: 2, kind: input, shape index: {}]
  %s3 = inlined_call_operand.vmem [shape: f32[128,64], index: 3, kind: input, shape index: {}]
  %s4 = inlined_call_operand.vmem [shape: f32[1,128], index: 4, kind: input, shape index: {}]
  %s5 = inlined_call_operand.vmem [shape: f32[1,128], index: 5, kind: input, shape index: {}]
  %s6 = inlined_call_operand.vmem [shape: bf16[4,1,512], index: 6, kind: output, shape index: {}]
  %s7 = sld [smem:[#allocation0]]
  $region57: #{conv_inflation_block.4} parent=0
    _
  %s9 = ssub.s32 1, %s7
  %s10 = scalar_select 0, %s9, %s7
  loop: start=0, step=1, limit=6
  $region2: #{conv_inflation_block.4} parent=0 // loop_pre_header
    _
  $region3: #{conv_inflation_block.4} parent=0 // loop_header
    %s12 = sphi 0, %s16
    %p13 = scmp.ge.s32.totalorder %s12, 6
    %s22 = sphi 0, %s24
    %s25 = sphi 0, %s22
    %s26 = sphi 0, %s25
    %s42 = sphi 0, %s26
    %s46 = sphi 0, %s46
    %s48 = sphi 0, %s46
    %s49 = sphi 0, %s48
    %s63 = sphi 0, %s49
    %s67 = sphi 0, %s67
    %s69 = sphi 0, %s67
    %s70 = sphi 0, %s69
    %s84 = sphi 0, %s70
    %s88 = sphi 0, %s88
    %s90 = sphi 0, %s88
    %s91 = sphi 0, %s90
    %s105 = sphi 0, %s91
    %s109 = sphi 0, %s109
    %s111 = sphi 0, %s109
    %s112 = sphi 0, %s111
    %s126 = sphi 0, %s112
    %s130 = sphi 0, %s130
    %s132 = sphi 0, %s130
    %s133 = sphi 0, %s132
    %s147 = sphi 0, %s133
    %s153 = sphi 0, %s155
    %s156 = sphi 0, %s153
    %s157 = sphi 0, %s156
    %s173 = sphi 0, %s157
  $region4: #{conv_inflation_block.4} parent=0 // loop_header_branch
    %15 = sbr.rel (%p13) target = $region8
  $region5: #{conv_inflation_block.4} parent=0 // loop_body
    %s17 = ssub.s32 %s12, 1
    %s18 = ssub.s32 %s12, 2
    %s19 = sadd.s32 %s12, 1
    %s20 = ssub.s32 %s12, %s19
    %p21 = scmp.eq.s32.totalorder %s20, 0
    %s23 = sadd.s32 %s22, 1
    %s24 = scalar_select %p21, %s22, %s23
    %p27 = pneg %p21
    %p28 = scmp.eq.s32.totalorder %s12, 3
    %p29 = por %p27, %p28
    %p30 = scmp.ne.s32.totalorder %s22, %s25
    %p31 = scmp.eq.s32.totalorder %s12, 0
    %p32 = por %p30, %p31
    %p33 = scmp.ne.s32.totalorder %s22, %s25
    %p34 = scmp.eq.s32.totalorder %s17, 3
    %p35 = por %p33, %p34
    %p36 = scmp.ne.s32.totalorder %s25, %s26
    %p37 = scmp.eq.s32.totalorder %s17, 0
    %p38 = por %p36, %p37
    %p39 = scmp.ne.s32.totalorder %s25, %s26
    %p40 = scmp.eq.s32.totalorder %s18, 3
    %p41 = por %p39, %p40
    %p43 = scmp.ne.s32.totalorder %s26, %s42
    %p44 = scmp.eq.s32.totalorder %s18, 0
    %p45 = por %p43, %p44
    %s47 = sadd.s32 %s46, 1
    %p50 = scmp.eq.s32.totalorder %s12, 3
    %p51 = scmp.ne.s32.totalorder %s46, %s48
    %p52 = scmp.eq.s32.totalorder %s12, 0
    %p53 = por %p51, %p52
    %p54 = scmp.ne.s32.totalorder %s46, %s48
    %p55 = scmp.eq.s32.totalorder %s17, 3
    %p56 = por %p54, %p55
    %p57 = scmp.ne.s32.totalorder %s48, %s49
    %p58 = scmp.eq.s32.totalorder %s17, 0
    %p59 = por %p57, %p58
    %p60 = scmp.ne.s32.totalorder %s48, %s49
    %p61 = scmp.eq.s32.totalorder %s18, 3
    %p62 = por %p60, %p61
    %p64 = scmp.ne.s32.totalorder %s49, %s63
    %p65 = scmp.eq.s32.totalorder %s18, 0
    %p66 = por %p64, %p65
    %s68 = sadd.s32 %s67, 1
    %p71 = scmp.eq.s32.totalorder %s12, 3
    %p72 = scmp.ne.s32.totalorder %s67, %s69
    %p73 = scmp.eq.s32.totalorder %s12, 0
    %p74 = por %p72, %p73
    %p75 = scmp.ne.s32.totalorder %s67, %s69
    %p76 = scmp.eq.s32.totalorder %s17, 3
    %p77 = por %p75, %p76
    %p78 = scmp.ne.s32.totalorder %s69, %s70
    %p79 = scmp.eq.s32.totalorder %s17, 0
    %p80 = por %p78, %p79
    %p81 = scmp.ne.s32.totalorder %s69, %s70
    %p82 = scmp.eq.s32.totalorder %s18, 3
    %p83 = por %p81, %p82
    %p85 = scmp.ne.s32.totalorder %s70, %s84
    %p86 = scmp.eq.s32.totalorder %s18, 0
    %p87 = por %p85, %p86
    %s89 = sadd.s32 %s88, 1
    %p92 = scmp.eq.s32.totalorder %s12, 3
    %p93 = scmp.ne.s32.totalorder %s88, %s90
    %p94 = scmp.eq.s32.totalorder %s12, 0
    %p95 = por %p93, %p94
    %p96 = scmp.ne.s32.totalorder %s88, %s90
    %p97 = scmp.eq.s32.totalorder %s17, 3
    %p98 = por %p96, %p97
    %p99 = scmp.ne.s32.totalorder %s90, %s91
    %p100 = scmp.eq.s32.totalorder %s17, 0
    %p101 = por %p99, %p100
    %p102 = scmp.ne.s32.totalorder %s90, %s91
    %p103 = scmp.eq.s32.totalorder %s18, 3
    %p104 = por %p102, %p103
    %p106 = scmp.ne.s32.totalorder %s91, %s105
    %p107 = scmp.eq.s32.totalorder %s18, 0
    %p108 = por %p106, %p107
    %s110 = sadd.s32 %s109, 1
    %p113 = scmp.eq.s32.totalorder %s12, 3
    %p114 = scmp.ne.s32.totalorder %s109, %s111
    %p115 = scmp.eq.s32.totalorder %s12, 0
    %p116 = por %p114, %p115
    %p117 = scmp.ne.s32.totalorder %s109, %s111
    %p118 = scmp.eq.s32.totalorder %s17, 3
    %p119 = por %p117, %p118
    %p120 = scmp.ne.s32.totalorder %s111, %s112
    %p121 = scmp.eq.s32.totalorder %s17, 0
    %p122 = por %p120, %p121
    %p123 = scmp.ne.s32.totalorder %s111, %s112
    %p124 = scmp.eq.s32.totalorder %s18, 3
    %p125 = por %p123, %p124
    %p127 = scmp.ne.s32.totalorder %s112, %s126
    %p128 = scmp.eq.s32.totalorder %s18, 0
    %p129 = por %p127, %p128
    %s131 = sadd.s32 %s130, 1
    %p134 = scmp.eq.s32.totalorder %s12, 3
    %p135 = scmp.ne.s32.totalorder %s130, %s132
    %p136 = scmp.eq.s32.totalorder %s12, 0
    %p137 = por %p135, %p136
    %p138 = scmp.ne.s32.totalorder %s130, %s132
    %p139 = scmp.eq.s32.totalorder %s17, 3
    %p140 = por %p138, %p139
    %p141 = scmp.ne.s32.totalorder %s132, %s133
    %p142 = scmp.eq.s32.totalorder %s17, 0
    %p143 = por %p141, %p142
    %p144 = scmp.ne.s32.totalorder %s132, %s133
    %p145 = scmp.eq.s32.totalorder %s18, 3
    %p146 = por %p144, %p145
    %p148 = scmp.ne.s32.totalorder %s133, %s147
    %p149 = scmp.eq.s32.totalorder %s18, 0
    %p150 = por %p148, %p149
    %s151 = ssub.s32 %s12, %s19
    %p152 = scmp.eq.s32.totalorder %s151, 0
    %s154 = sadd.s32 %s153, 1
    %s155 = scalar_select %p152, %s153, %s154
    %p158 = pneg %p152
    %p159 = scmp.eq.s32.totalorder %s12, 3
    %p160 = por %p158, %p159
    %p161 = scmp.ne.s32.totalorder %s153, %s156
    %p162 = scmp.eq.s32.totalorder %s12, 0
    %p163 = por %p161, %p162
    %p164 = scmp.ne.s32.totalorder %s153, %s156
    %p165 = scmp.eq.s32.totalorder %s17, 3
    %p166 = por %p164, %p165
    %p167 = scmp.ne.s32.totalorder %s156, %s157
    %p168 = scmp.eq.s32.totalorder %s17, 0
    %p169 = por %p167, %p168
    %p170 = scmp.ne.s32.totalorder %s156, %s157
    %p171 = scmp.eq.s32.totalorder %s18, 3
    %p172 = por %p170, %p171
    %p174 = scmp.ne.s32.totalorder %s157, %s173
    %p175 = scmp.eq.s32.totalorder %s18, 0
    %p176 = por %p174, %p175
    %p177 = scmp.le.s32.totalorder 1, %s12
    %p178 = scmp.lt.s32.totalorder %s12, 5
    %p179 = pnand %p177, %p178
    %p180 = pneg %p179
    // Predicated region
    $region9: #{conv_inflation_block.4} parent=5 // pred_check
      _
    $region10: #{conv_inflation_block.4} parent=5 // pred_check_branch
      %182 = sbr.rel (%p179) target = $region12
    $region11: #{conv_inflation_block.4} parent=5 // pred_region
      %s183 = ssub.s32 %s12, 1
      // Predicated region
      $region13: #{conv_inflation_block.4} parent=11 // pred_check
        %p184 = pneg %p59
      $region14: #{conv_inflation_block.4} parent=11 // pred_check_branch
        %186 = sbr.rel (%p184) target = $region16
      $region15: #{conv_inflation_block.4} parent=11 // pred_region
        _
      $region16: #{conv_inflation_block.4} parent=11 // pred_fallthru
        _
      // Predicated region
      $region17: #{conv_inflation_block.4} parent=11 // pred_check
        %p187 = pneg %p80
      $region18: #{conv_inflation_block.4} parent=11 // pred_check_branch
        %189 = sbr.rel (%p187) target = $region20
      $region19: #{conv_inflation_block.4} parent=11 // pred_region
        _
      $region20: #{conv_inflation_block.4} parent=11 // pred_fallthru
        _
      // Predicated region
      $region21: #{conv_inflation_block.4} parent=11 // pred_check
        %p190 = pneg %p101
      $region22: #{conv_inflation_block.4} parent=11 // pred_check_branch
        %192 = sbr.rel (%p190) target = $region24
      $region23: #{conv_inflation_block.4} parent=11 // pred_region
        _
      $region24: #{conv_inflation_block.4} parent=11 // pred_fallthru
        _
      // Predicated region
      $region25: #{conv_inflation_block.4} parent=11 // pred_check
        %p193 = pneg %p122
      $region26: #{conv_inflation_block.4} parent=11 // pred_check_branch
        %195 = sbr.rel (%p193) target = $region28
      $region27: #{conv_inflation_block.4} parent=11 // pred_region
        _
      $region28: #{conv_inflation_block.4} parent=11 // pred_fallthru
        _
      // Predicated region
      $region29: #{conv_inflation_block.4} parent=11 // pred_check
        %p196 = pneg %p143
      $region30: #{conv_inflation_block.4} parent=11 // pred_check_branch
        %198 = sbr.rel (%p196) target = $region32
      $region31: #{conv_inflation_block.4} parent=11 // pred_region
        _
      $region32: #{conv_inflation_block.4} parent=11 // pred_fallthru
        _
    $region12: #{conv_inflation_block.4} parent=5 // pred_fallthru
      _
    %p199 = scmp.lt.s32.totalorder %s12, 4
    // Predicated region
    $region33: #{conv_inflation_block.4} parent=5 // pred_check
      %p200 = pneg %p199
    $region34: #{conv_inflation_block.4} parent=5 // pred_check_branch
      %202 = sbr.rel (%p200) target = $region36
    $region35: #{conv_inflation_block.4} parent=5 // pred_region
      // Predicated region
      $region37: #{conv_inflation_block.4} parent=35 // pred_check
        %p203 = pneg %p32
      $region38: #{conv_inflation_block.4} parent=35 // pred_check_branch
        %205 = sbr.rel (%p203) target = $region40
      $region39: #{conv_inflation_block.4} parent=35 // pred_region
        %s206 = smul.u32 2, %s12
        %p207 = scmp.lt.s32.totalorder %s206, 7
        %s208 = scalar_select %p207, %s206, 7
        %s209 = smul.addr %s208, 3
        %s210 = smul.addr %s209, 4
        %s211 = scalar_lea.vmem %s0, %s210
        %s212 = smul.u32 2, %s12
      $region40: #{conv_inflation_block.4} parent=35 // pred_fallthru
        _
    $region36: #{conv_inflation_block.4} parent=5 // pred_fallthru
      _
    %p213 = scmp.le.s32.totalorder 1, %s12
    %p214 = scmp.lt.s32.totalorder %s12, 5
    %p215 = pnand %p213, %p214
    %p216 = pneg %p215
    // Predicated region
    $region41: #{conv_inflation_block.4} parent=5 // pred_check
      _
    $region42: #{conv_inflation_block.4} parent=5 // pred_check_branch
      %218 = sbr.rel (%p215) target = $region44
    $region43: #{conv_inflation_block.4} parent=5 // pred_region
      %s219 = ssub.s32 %s12, 1
      %s220 = smul.u32 2, %s17
      %p221 = scmp.lt.s32.totalorder %s220, 7
      %s222 = scalar_select %p221, %s220, 7
      %s223 = smul.addr %s222, 3
      %s224 = smul.addr %s223, 4
      %s225 = scalar_lea.vmem %s0, %s224
      %p226 = pneg %p38
      %p227 = pneg %p35
      %p228 = pneg %p59
      %p229 = pneg %p56
      %p230 = pneg %p80
      %p231 = pneg %p77
      %p232 = pneg %p101
      %p233 = pneg %p98
      %p234 = pneg %p122
      %p235 = pneg %p119
      %p236 = pneg %p143
      %p237 = pneg %p140
      %p238 = pneg %p169
      %p239 = pneg %p166
      %p240 = scmp.lt.s32.totalorder %s17, 3
      %s241 = scalar_select %p240, %s17, 3
      %s242 = smul.addr %s241, 4
      %s243 = scalar_lea.vmem %s6, %s242
      %s244 = smul.u32 2, %s17
      %p245 = scmp.lt.s32.totalorder %s244, 7
      %s246 = scalar_select %p245, %s244, 7
      %s247 = smul.addr %s246, 3
      %s248 = smul.addr %s247, 4
      %s249 = scalar_lea.vmem %s0, %s248
      %s250 = smul.u32 2, %s17
      %p251 = scmp.lt.s32.totalorder %s17, 3
      %s252 = scalar_select %p251, %s17, 3
      %s253 = smul.addr %s252, 4
      %s254 = scalar_lea.vmem %s6, %s253
      %v256 = vld [vmem:[%s4] sm:$0x1]
      %v257 = vld [vmem:[%s5] sm:$0x1]
      %v258 = vld [vmem:[%s249] sm:$0xf]
      %v259 = vld [vmem:[%s249 + $0x4] sm:$0xf]
      %v260 = vld [vmem:[%s1] sm:$0xf]
      %v261 = vld [vmem:[%s1 + $0x4] sm:$0xf]
      %v262 = vld [vmem:[%s1 + $0x8] sm:$0xf]
      %v263 = vld [vmem:[%s1 + $0xc] sm:$0xf]
      %v264 = vld [vmem:[%s1 + $0x10] sm:$0xf]
      %v265 = vld [vmem:[%s1 + $0x14] sm:$0xf]
      %v266 = vld [vmem:[%s1 + $0x18] sm:$0xf]
      %v267 = vld [vmem:[%s1 + $0x1c] sm:$0xf]
      %v268 = vld [vmem:[%s1 + $0x20] sm:$0xf]
      %v269 = vld [vmem:[%s249 + $0x8] sm:$0x1]
      %s270 = scalar_lea.vmem %s1, 36
      %v271 = vld [vmem:[%s270] sm:$0xf]
      %v272 = vld [vmem:[%s270 + $0x4] sm:$0xf]
      %v273 = vld [vmem:[%s270 + $0x8] sm:$0xf]
      %v274 = vld [vmem:[%s270 + $0xc] sm:$0xf]
      %v275 = vld [vmem:[%s270 + $0x10] sm:$0xf]
      %v276 = vld [vmem:[%s270 + $0x14] sm:$0xf]
      %v277 = vld [vmem:[%s270 + $0x18] sm:$0xf]
      %v278 = vld [vmem:[%s270 + $0x1c] sm:$0xf]
      %v279 = vld [vmem:[%s270 + $0x20] sm:$0xf]
      %v283 = vunpack.c.l.b16 %v258
      %v284 = vunpack.c.l.b16 %v259
      %v285 = vunpack.c.l.b16 %v269
      %v286 = vpack.c.b16 %v284, %v283
      %v287 = vpack.c.b16 %v285, %v285
      %vm288 = vsmask.f32 7424
      %v290 = vshrl.u32 %v286, 16
      %v292 = vshll.u32 %v286, 16
      %v294 = vrot.slane %v292, 1
      %v295 = vor.u32 %v290, %v294
      %v297 = vshll.u32 %v287, 16
      %v299 = vrot.slane %v297, 1
      %v300 = vsel %vm288, %v295, %v299
      %v310 = vunpack.c.l.b16 %v271
      %v311 = vunpack.c.l.b16 %v272
      %v312 = vunpack.c.l.b16 %v273
      %v313 = vunpack.c.l.b16 %v274
      %v314 = vunpack.c.l.b16 %v275
      %v315 = vunpack.c.l.b16 %v276
      %v316 = vunpack.c.l.b16 %v277
      %v317 = vunpack.c.l.b16 %v278
      %v318 = vunpack.c.l.b16 %v279
      %v319 = vpack.c.b16 %v311, %v310
      %v320 = vpack.c.b16 %v313, %v312
      %v321 = vpack.c.b16 %v315, %v314
      %v322 = vpack.c.b16 %v317, %v316
      %v323 = vpack.c.b16 %v318, %v318
      %vm328 = vcmask 588800
      %v330 = vsel %vm328, %v300, 0
      %vm332 = vcmask 1043456
      %v334 = vsel %vm332, %v323, 0
      %336 = vmatprep.subr.bf16.mxu0 0
      %337 = vmatpush1.bf16.msra.mxu0 %v319
      %338 = vmatprep.subr.bf16.mxu0 0
      %339 = vmatpush1.bf16.msra.mxu0 %v320
      %340 = vmatprep.subr.bf16.mxu0 0
      %341 = vmatpush1.bf16.msra.mxu0 %v321
      %342 = vmatprep.subr.bf16.mxu0 0
      %343 = vmatpush1.bf16.msra.mxu0 %v322
      %344 = vmatprep.subr.bf16.mxu0 0
      %345 = vmatpush1.bf16.msra.mxu0 %v334
      %346 = vmatprep.subr.bf16.mxu0 0
      %347 = vmatpush1.bf16.msra.mxu0 0
      %348 = vmatprep.subr.bf16.mxu0 0
      %349 = vmatpush1.bf16.msra.mxu0 0
      %350 = vmatprep.subr.bf16.mxu0 0
      %351 = vmatpush1.bf16.msra.mxu0 0
      %352 = vmatprep.subr.bf16.mxu0 0
      %353 = vmatpush1.bf16.msra.mxu0 0
      %354 = vmatprep.subr.bf16.mxu0 0
      %355 = vmatpush1.bf16.msra.mxu0 0
      %356 = vmatprep.subr.bf16.mxu0 0
      %357 = vmatpush1.bf16.msra.mxu0 0
      %358 = vmatprep.subr.bf16.mxu0 0
      %359 = vmatpush1.bf16.msra.mxu0 0
      %360 = vmatprep.subr.bf16.mxu0 0
      %361 = vmatpush1.bf16.msra.mxu0 0
      %362 = vmatprep.subr.bf16.mxu0 0
      %363 = vmatpush1.bf16.msra.mxu0 0
      %364 = vmatprep.subr.bf16.mxu0 0
      %365 = vmatpush1.bf16.msra.mxu0 0
      %366 = vmatprep.subr.bf16.mxu0 0
      %367 = vmatpush1.bf16.msra.mxu0 0
      %368 = vmatprep.mubr.bf16.mxu0 0
      %369 = vmatmul.mubr.bf16.gmra.mrb[0].mxu0 %v330
      %v370 = vpop.f32.mrb[0].mxu0
      %v371 = vadd.f32 0.0, %v370
      %v372 = vpop.f32.mrb[0].mxu0
      %v373 = vpop.f32.mrb[0].mxu0
      %v374 = vadd.f32 0.0, %v373
      %v375 = vpop.f32.mrb[0].mxu0
      %376 = vdwg.mxu0
      %v386 = vunpack.c.l.b16 %v260
      %v387 = vunpack.c.l.b16 %v261
      %v388 = vunpack.c.l.b16 %v262
      %v389 = vunpack.c.l.b16 %v263
      %v390 = vunpack.c.l.b16 %v264
      %v391 = vunpack.c.l.b16 %v265
      %v392 = vunpack.c.l.b16 %v266
      %v393 = vunpack.c.l.b16 %v267
      %v394 = vunpack.c.l.b16 %v268
      %v395 = vpack.c.b16 %v387, %v386
      %v396 = vpack.c.b16 %v389, %v388
      %v397 = vpack.c.b16 %v391, %v390
      %v398 = vpack.c.b16 %v393, %v392
      %v399 = vpack.c.b16 %v394, %v394
      %v404 = vsel %vm328, %v286, 0
      %v407 = vsel %vm332, %v399, 0
      %409 = vmatprep.subr.bf16.mxu0 0
      %410 = vmatpush1.bf16.msra.mxu0 %v395
      %411 = vmatprep.subr.bf16.mxu0 0
      %412 = vmatpush1.bf16.msra.mxu0 %v396
      %413 = vmatprep.subr.bf16.mxu0 0
      %414 = vmatpush1.bf16.msra.mxu0 %v397
      %415 = vmatprep.subr.bf16.mxu0 0
      %416 = vmatpush1.bf16.msra.mxu0 %v398
      %417 = vmatprep.subr.bf16.mxu0 0
      %418 = vmatpush1.bf16.msra.mxu0 %v407
      %419 = vmatprep.subr.bf16.mxu0 0
      %420 = vmatpush1.bf16.msra.mxu0 0
      %421 = vmatprep.subr.bf16.mxu0 0
      %422 = vmatpush1.bf16.msra.mxu0 0
      %423 = vmatprep.subr.bf16.mxu0 0
      %424 = vmatpush1.bf16.msra.mxu0 0
      %425 = vmatprep.subr.bf16.mxu0 0
      %426 = vmatpush1.bf16.msra.mxu0 0
      %427 = vmatprep.subr.bf16.mxu0 0
      %428 = vmatpush1.bf16.msra.mxu0 0
      %429 = vmatprep.subr.bf16.mxu0 0
      %430 = vmatpush1.bf16.msra.mxu0 0
      %431 = vmatprep.subr.bf16.mxu0 0
      %432 = vmatpush1.bf16.msra.mxu0 0
      %433 = vmatprep.subr.bf16.mxu0 0
      %434 = vmatpush1.bf16.msra.mxu0 0
      %435 = vmatprep.subr.bf16.mxu0 0
      %436 = vmatpush1.bf16.msra.mxu0 0
      %437 = vmatprep.subr.bf16.mxu0 0
      %438 = vmatpush1.bf16.msra.mxu0 0
      %439 = vmatprep.subr.bf16.mxu0 0
      %440 = vmatpush1.bf16.msra.mxu0 0
      %441 = vmatprep.mubr.bf16.mxu0 0
      %442 = vmatmul.mubr.bf16.gmra.mrb[0].mxu0 %v404
      %v443 = vpop.f32.mrb[0].mxu0
      %v444 = vadd.f32 %v371, %v443
      %v445 = vpop.f32.mrb[0].mxu0
      %v446 = vpop.f32.mrb[0].mxu0
      %v447 = vadd.f32 %v374, %v446
      %v448 = vpop.f32.mrb[0].mxu0
      %449 = vdwg.mxu0
      %v450 = vld [vmem:[%s249] sm:$0xe]
      %s451 = scalar_lea.vmem %s1, 72
      %v452 = vld [vmem:[%s451] sm:$0xf]
      %v453 = vld [vmem:[%s451 + $0x4] sm:$0xf]
      %v454 = vld [vmem:[%s451 + $0x8] sm:$0xf]
      %v455 = vld [vmem:[%s451 + $0xc] sm:$0xf]
      %v456 = vld [vmem:[%s451 + $0x10] sm:$0xf]
      %v457 = vld [vmem:[%s451 + $0x14] sm:$0xf]
      %v458 = vld [vmem:[%s451 + $0x18] sm:$0xf]
      %v459 = vld [vmem:[%s451 + $0x1c] sm:$0xf]
      %v460 = vld [vmem:[%s451 + $0x20] sm:$0xf]
      %v462 = vunpack.c.l.b16 %v450
      %v463 = vpack.c.b16 %v284, %v462
      %vm464 = vcmask 1046528
      %v465 = vrot.slane %v463, 1
      %v466 = vrot.slane %v287, 1
      %v467 = vsel %vm464, %v465, %v466
      %v477 = vunpack.c.l.b16 %v452
      %v478 = vunpack.c.l.b16 %v453
      %v479 = vunpack.c.l.b16 %v454
      %v480 = vunpack.c.l.b16 %v455
      %v481 = vunpack.c.l.b16 %v456
      %v482 = vunpack.c.l.b16 %v457
      %v483 = vunpack.c.l.b16 %v458
      %v484 = vunpack.c.l.b16 %v459
      %v485 = vunpack.c.l.b16 %v460
      %v486 = vpack.c.b16 %v478, %v477
      %v487 = vpack.c.b16 %v480, %v479
      %v488 = vpack.c.b16 %v482, %v481
      %v489 = vpack.c.b16 %v484, %v483
      %v490 = vpack.c.b16 %v485, %v485
      %v496 = vsel %vm328, %v467, 0
      %v499 = vsel %vm332, %v490, 0
      %501 = vmatprep.subr.bf16.mxu0 0
      %502 = vmatpush1.bf16.msra.mxu0 %v486
      %503 = vmatprep.subr.bf16.mxu0 0
      %504 = vmatpush1.bf16.msra.mxu0 %v487
      %505 = vmatprep.subr.bf16.mxu0 0
      %506 = vmatpush1.bf16.msra.mxu0 %v488
      %507 = vmatprep.subr.bf16.mxu0 0
      %508 = vmatpush1.bf16.msra.mxu0 %v489
      %509 = vmatprep.subr.bf16.mxu0 0
      %510 = vmatpush1.bf16.msra.mxu0 %v499
      %511 = vmatprep.subr.bf16.mxu0 0
      %512 = vmatpush1.bf16.msra.mxu0 0
      %513 = vmatprep.subr.bf16.mxu0 0
      %514 = vmatpush1.bf16.msra.mxu0 0
      %515 = vmatprep.subr.bf16.mxu0 0
      %516 = vmatpush1.bf16.msra.mxu0 0
      %517 = vmatprep.subr.bf16.mxu0 0
      %518 = vmatpush1.bf16.msra.mxu0 0
      %519 = vmatprep.subr.bf16.mxu0 0
      %520 = vmatpush1.bf16.msra.mxu0 0
      %521 = vmatprep.subr.bf16.mxu0 0
      %522 = vmatpush1.bf16.msra.mxu0 0
      %523 = vmatprep.subr.bf16.mxu0 0
      %524 = vmatpush1.bf16.msra.mxu0 0
      %525 = vmatprep.subr.bf16.mxu0 0
      %526 = vmatpush1.bf16.msra.mxu0 0
      %527 = vmatprep.subr.bf16.mxu0 0
      %528 = vmatpush1.bf16.msra.mxu0 0
      %529 = vmatprep.subr.bf16.mxu0 0
      %530 = vmatpush1.bf16.msra.mxu0 0
      %531 = vmatprep.subr.bf16.mxu0 0
      %532 = vmatpush1.bf16.msra.mxu0 0
      %533 = vmatprep.mubr.bf16.mxu0 0
      %534 = vmatmul.mubr.bf16.gmra.mrb[0].mxu0 %v496
      %v535 = vpop.f32.mrb[0].mxu0
      %v536 = vadd.f32 0.0, %v535
      %v537 = vpop.f32.mrb[0].mxu0
      %v538 = vpop.f32.mrb[0].mxu0
      %v539 = vadd.f32 0.0, %v538
      %v540 = vpop.f32.mrb[0].mxu0
      %541 = vdwg.mxu0
      %v542 = vadd.f32 %v444, %v536
      %v543 = vadd.f32 %v447, %v539
      %v545 = vlaneseq
      %v546 = vshrl.u32 %v545, 7
      %v547 = vsub.s32 0, %v546
      %v548 = vrot.slane %v256, %v547
      %v550 = vmul.f32 %v542, %v548
      %v551 = vmul.f32 %v543, %v548
      %v553 = vlaneseq
      %v554 = vshrl.u32 %v553, 7
      %v555 = vsub.s32 0, %v554
      %v556 = vrot.slane %v257, %v555
      %v558 = vadd.f32 %v550, %v556
      %v559 = vadd.f32 %v551, %v556
      %v560 = vmax.f32 %v558, 0.0
      %v561 = vmax.f32 %v559, 0.0
      %v562 = vld [vmem:[%s2] sm:$0xff]
      %vm563 = vcmask 130048
      %v565 = vsel %vm563, %v562, 0
      %567 = vmatprep.subr.mxu0 0.0
      %568 = vmatpush1.msra.mxu0 %v560
      %569 = vmatprep.subr.mxu0 0.0
      %570 = vmatpush1.msra.mxu0 %v561
      %571 = vmatprep.subr.mxu0 0.0
      %572 = vmatpush1.msra.mxu0 0.0
      %573 = vmatprep.subr.mxu0 0.0
      %574 = vmatpush1.msra.mxu0 0.0
      %575 = vmatprep.subr.mxu0 0.0
      %576 = vmatpush1.msra.mxu0 0.0
      %577 = vmatprep.subr.mxu0 0.0
      %578 = vmatpush1.msra.mxu0 0.0
      %579 = vmatprep.subr.mxu0 0.0
      %580 = vmatpush1.msra.mxu0 0.0
      %581 = vmatprep.subr.mxu0 0.0
      %582 = vmatpush1.msra.mxu0 0.0
      %583 = vmatprep.subr.mxu0 0.0
      %584 = vmatpush1.msra.mxu0 0.0
      %585 = vmatprep.subr.mxu0 0.0
      %586 = vmatpush1.msra.mxu0 0.0
      %587 = vmatprep.subr.mxu0 0.0
      %588 = vmatpush1.msra.mxu0 0.0
      %589 = vmatprep.subr.mxu0 0.0
      %590 = vmatpush1.msra.mxu0 0.0
      %591 = vmatprep.subr.mxu0 0.0
      %592 = vmatpush1.msra.mxu0 0.0
      %593 = vmatprep.subr.mxu0 0.0
      %594 = vmatpush1.msra.mxu0 0.0
      %595 = vmatprep.subr.mxu0 0.0
      %596 = vmatpush1.msra.mxu0 0.0
      %597 = vmatprep.subr.mxu0 0.0
      %598 = vmatpush1.msra.mxu0 0.0
      %599 = vmatprep.subr.mxu0 0.0
      %600 = vmatpush1.msra.mxu0 0.0
      %601 = vmatprep.subr.mxu0 0.0
      %602 = vmatpush1.msra.mxu0 0.0
      %603 = vmatprep.subr.mxu0 0.0
      %604 = vmatpush1.msra.mxu0 0.0
      %605 = vmatprep.subr.mxu0 0.0
      %606 = vmatpush1.msra.mxu0 0.0
      %607 = vmatprep.subr.mxu0 0.0
      %608 = vmatpush1.msra.mxu0 0.0
      %609 = vmatprep.subr.mxu0 0.0
      %610 = vmatpush1.msra.mxu0 0.0
      %611 = vmatprep.subr.mxu0 0.0
      %612 = vmatpush1.msra.mxu0 0.0
      %613 = vmatprep.subr.mxu0 0.0
      %614 = vmatpush1.msra.mxu0 0.0
      %615 = vmatprep.subr.mxu0 0.0
      %616 = vmatpush1.msra.mxu0 0.0
      %617 = vmatprep.subr.mxu0 0.0
      %618 = vmatpush1.msra.mxu0 0.0
      %619 = vmatprep.subr.mxu0 0.0
      %620 = vmatpush1.msra.mxu0 0.0
      %621 = vmatprep.subr.mxu0 0.0
      %622 = vmatpush1.msra.mxu0 0.0
      %623 = vmatprep.subr.mxu0 0.0
      %624 = vmatpush1.msra.mxu0 0.0
      %625 = vmatprep.subr.mxu0 0.0
      %626 = vmatpush1.msra.mxu0 0.0
      %627 = vmatprep.subr.mxu0 0.0
      %628 = vmatpush1.msra.mxu0 0.0
      %629 = vmatprep.subr.mxu0 0.0
      %630 = vmatpush1.msra.mxu0 0.0
      %631 = vmatprep.mubr.f32.mxu0 0.0
      %632 = vmatmul.mubr.f32.gmra.mrb[0].mxu0 %v565
      %v633 = vpop.f32.mrb[0].mxu0
      %v634 = vadd.f32 0.0, %v633
      %v635 = vpop.f32.mrb[0].mxu0
      %636 = vdwg.mxu0
      %v637 = vld [vmem:[%s3] sm:$0xff]
      %v638 = vld [vmem:[%s3 + $0x8] sm:$0xff]
      %v639 = vld [vmem:[%s3 + $0x10] sm:$0xff]
      %v640 = vld [vmem:[%s3 + $0x18] sm:$0xff]
      %v641 = vld [vmem:[%s3 + $0x20] sm:$0xff]
      %v642 = vld [vmem:[%s3 + $0x28] sm:$0xff]
      %v643 = vld [vmem:[%s3 + $0x30] sm:$0xff]
      %v644 = vld [vmem:[%s3 + $0x38] sm:$0xff]
      %v645 = vld [vmem:[%s3 + $0x40] sm:$0xff]
      %v646 = vld [vmem:[%s3 + $0x48] sm:$0xff]
      %v647 = vld [vmem:[%s3 + $0x50] sm:$0xff]
      %v648 = vld [vmem:[%s3 + $0x58] sm:$0xff]
      %v649 = vld [vmem:[%s3 + $0x60] sm:$0xff]
      %v650 = vld [vmem:[%s3 + $0x68] sm:$0xff]
      %v651 = vld [vmem:[%s3 + $0x70] sm:$0xff]
      %v652 = vld [vmem:[%s3 + $0x78] sm:$0xff]
      %s653 = scalar_lea.vmem %s249, 12
      %v654 = vld [vmem:[%s653] sm:$0xf]
      %v655 = vld [vmem:[%s653 + $0x4] sm:$0xf]
      %v656 = vld [vmem:[%s653 + $0x8] sm:$0x1]
      %v660 = vunpack.c.l.b16 %v654
      %v661 = vunpack.c.l.b16 %v655
      %v662 = vunpack.c.l.b16 %v656
      %v663 = vpack.c.b16 %v661, %v660
      %v664 = vpack.c.b16 %v662, %v662
      %v666 = vshrl.u32 %v663, 16
      %v668 = vshll.u32 %v663, 16
      %v670 = vrot.slane %v668, 1
      %v671 = vor.u32 %v666, %v670
      %v673 = vshll.u32 %v664, 16
      %v675 = vrot.slane %v673, 1
      %v676 = vsel %vm288, %v671, %v675
      %v678 = vsel %vm328, %v676, 0
      %680 = vmatprep.subr.bf16.mxu0 0
      %681 = vmatpush1.bf16.msra.mxu0 %v319
      %682 = vmatprep.subr.bf16.mxu0 0
      %683 = vmatpush1.bf16.msra.mxu0 %v320
      %684 = vmatprep.subr.bf16.mxu0 0
      %685 = vmatpush1.bf16.msra.mxu0 %v321
      %686 = vmatprep.subr.bf16.mxu0 0
      %687 = vmatpush1.bf16.msra.mxu0 %v322
      %688 = vmatprep.subr.bf16.mxu0 0
      %689 = vmatpush1.bf16.msra.mxu0 %v334
      %690 = vmatprep.subr.bf16.mxu0 0
      %691 = vmatpush1.bf16.msra.mxu0 0
      %692 = vmatprep.subr.bf16.mxu0 0
      %693 = vmatpush1.bf16.msra.mxu0 0
      %694 = vmatprep.subr.bf16.mxu0 0
      %695 = vmatpush1.bf16.msra.mxu0 0
      %696 = vmatprep.subr.bf16.mxu0 0
      %697 = vmatpush1.bf16.msra.mxu0 0
      %698 = vmatprep.subr.bf16.mxu0 0
      %699 = vmatpush1.bf16.msra.mxu0 0
      %700 = vmatprep.subr.bf16.mxu0 0
      %701 = vmatpush1.bf16.msra.mxu0 0
      %702 = vmatprep.subr.bf16.mxu0 0
      %703 = vmatpush1.bf16.msra.mxu0 0
      %704 = vmatprep.subr.bf16.mxu0 0
      %705 = vmatpush1.bf16.msra.mxu0 0
      %706 = vmatprep.subr.bf16.mxu0 0
      %707 = vmatpush1.bf16.msra.mxu0 0
      %708 = vmatprep.subr.bf16.mxu0 0
      %709 = vmatpush1.bf16.msra.mxu0 0
      %710 = vmatprep.subr.bf16.mxu0 0
      %711 = vmatpush1.bf16.msra.mxu0 0
      %712 = vmatprep.mubr.bf16.mxu0 0
      %713 = vmatmul.mubr.bf16.gmra.mrb[0].mxu0 %v678
      %v714 = vpop.f32.mrb[0].mxu0
      %v715 = vadd.f32 0.0, %v714
      %v716 = vpop.f32.mrb[0].mxu0
      %v717 = vpop.f32.mrb[0].mxu0
      %v718 = vadd.f32 0.0, %v717
      %v719 = vpop.f32.mrb[0].mxu0
      %720 = vdwg.mxu0
      %v721 = vsel %vm328, %v663, 0
      %723 = vmatprep.subr.bf16.mxu0 0
      %724 = vmatpush1.bf16.msra.mxu0 %v395
      %725 = vmatprep.subr.bf16.mxu0 0
      %726 = vmatpush1.bf16.msra.mxu0 %v396
      %727 = vmatprep.subr.bf16.mxu0 0
      %728 = vmatpush1.bf16.msra.mxu0 %v397
      %729 = vmatprep.subr.bf16.mxu0 0
      %730 = vmatpush1.bf16.msra.mxu0 %v398
      %731 = vmatprep.subr.bf16.mxu0 0
      %732 = vmatpush1.bf16.msra.mxu0 %v407
      %733 = vmatprep.subr.bf16.mxu0 0
      %734 = vmatpush1.bf16.msra.mxu0 0
      %735 = vmatprep.subr.bf16.mxu0 0
      %736 = vmatpush1.bf16.msra.mxu0 0
      %737 = vmatprep.subr.bf16.mxu0 0
      %738 = vmatpush1.bf16.msra.mxu0 0
      %739 = vmatprep.subr.bf16.mxu0 0
      %740 = vmatpush1.bf16.msra.mxu0 0
      %741 = vmatprep.subr.bf16.mxu0 0
      %742 = vmatpush1.bf16.msra.mxu0 0
      %743 = vmatprep.subr.bf16.mxu0 0
      %744 = vmatpush1.bf16.msra.mxu0 0
      %745 = vmatprep.subr.bf16.mxu0 0
      %746 = vmatpush1.bf16.msra.mxu0 0
      %747 = vmatprep.subr.bf16.mxu0 0
      %748 = vmatpush1.bf16.msra.mxu0 0
      %749 = vmatprep.subr.bf16.mxu0 0
      %750 = vmatpush1.bf16.msra.mxu0 0
      %751 = vmatprep.subr.bf16.mxu0 0
      %752 = vmatpush1.bf16.msra.mxu0 0
      %753 = vmatprep.subr.bf16.mxu0 0
      %754 = vmatpush1.bf16.msra.mxu0 0
      %755 = vmatprep.mubr.bf16.mxu0 0
      %756 = vmatmul.mubr.bf16.gmra.mrb[0].mxu0 %v721
      %v757 = vpop.f32.mrb[0].mxu0
      %v758 = vadd.f32 %v715, %v757
      %v759 = vpop.f32.mrb[0].mxu0
      %v760 = vpop.f32.mrb[0].mxu0
      %v761 = vadd.f32 %v718, %v760
      %v762 = vpop.f32.mrb[0].mxu0
      %763 = vdwg.mxu0
      %v764 = vld [vmem:[%s653] sm:$0xe]
      %v766 = vunpack.c.l.b16 %v764
      %v767 = vpack.c.b16 %v661, %v766
      %v768 = vrot.slane %v767, 1
      %v769 = vrot.slane %v664, 1
      %v770 = vsel %vm464, %v768, %v769
      %v772 = vsel %vm328, %v770, 0
      %774 = vmatprep.subr.bf16.mxu0 0
      %775 = vmatpush1.bf16.msra.mxu0 %v486
      %776 = vmatprep.subr.bf16.mxu0 0
      %777 = vmatpush1.bf16.msra.mxu0 %v487
      %778 = vmatprep.subr.bf16.mxu0 0
      %779 = vmatpush1.bf16.msra.mxu0 %v488
      %780 = vmatprep.subr.bf16.mxu0 0
      %781 = vmatpush1.bf16.msra.mxu0 %v489
      %782 = vmatprep.subr.bf16.mxu0 0
      %783 = vmatpush1.bf16.msra.mxu0 %v499
      %784 = vmatprep.subr.bf16.mxu0 0
      %785 = vmatpush1.bf16.msra.mxu0 0
      %786 = vmatprep.subr.bf16.mxu0 0
      %787 = vmatpush1.bf16.msra.mxu0 0
      %788 = vmatprep.subr.bf16.mxu0 0
      %789 = vmatpush1.bf16.msra.mxu0 0
      %790 = vmatprep.subr.bf16.mxu0 0
      %791 = vmatpush1.bf16.msra.mxu0 0
      %792 = vmatprep.subr.bf16.mxu0 0
      %793 = vmatpush1.bf16.msra.mxu0 0
      %794 = vmatprep.subr.bf16.mxu0 0
      %795 = vmatpush1.bf16.msra.mxu0 0
      %796 = vmatprep.subr.bf16.mxu0 0
      %797 = vmatpush1.bf16.msra.mxu0 0
      %798 = vmatprep.subr.bf16.mxu0 0
      %799 = vmatpush1.bf16.msra.mxu0 0
      %800 = vmatprep.subr.bf16.mxu0 0
      %801 = vmatpush1.bf16.msra.mxu0 0
      %802 = vmatprep.subr.bf16.mxu0 0
      %803 = vmatpush1.bf16.msra.mxu0 0
      %804 = vmatprep.subr.bf16.mxu0 0
      %805 = vmatpush1.bf16.msra.mxu0 0
      %806 = vmatprep.mubr.bf16.mxu0 0
      %807 = vmatmul.mubr.bf16.gmra.mrb[0].mxu0 %v772
      %v808 = vpop.f32.mrb[0].mxu0
      %v809 = vadd.f32 0.0, %v808
      %v810 = vpop.f32.mrb[0].mxu0
      %v811 = vpop.f32.mrb[0].mxu0
      %v812 = vadd.f32 0.0, %v811
      %v813 = vpop.f32.mrb[0].mxu0
      %814 = vdwg.mxu0
      %v815 = vadd.f32 %v758, %v809
      %v816 = vadd.f32 %v761, %v812
      %v817 = vmul.f32 %v815, %v548
      %v818 = vmul.f32 %v816, %v548
      %v819 = vadd.f32 %v817, %v556
      %v820 = vadd.f32 %v818, %v556
      %v821 = vmax.f32 %v819, 0.0
      %v822 = vmax.f32 %v820, 0.0
      %823 = vmatprep.subr.mxu0 0.0
      %824 = vmatpush1.msra.mxu0 %v821
      %825 = vmatprep.subr.mxu0 0.0
      %826 = vmatpush1.msra.mxu0 %v822
      %827 = vmatprep.subr.mxu0 0.0
      %828 = vmatpush1.msra.mxu0 0.0
      %829 = vmatprep.subr.mxu0 0.0
      %830 = vmatpush1.msra.mxu0 0.0
      %831 = vmatprep.subr.mxu0 0.0
      %832 = vmatpush1.msra.mxu0 0.0
      %833 = vmatprep.subr.mxu0 0.0
      %834 = vmatpush1.msra.mxu0 0.0
      %835 = vmatprep.subr.mxu0 0.0
      %836 = vmatpush1.msra.mxu0 0.0
      %837 = vmatprep.subr.mxu0 0.0
      %838 = vmatpush1.msra.mxu0 0.0
      %839 = vmatprep.subr.mxu0 0.0
      %840 = vmatpush1.msra.mxu0 0.0
      %841 = vmatprep.subr.mxu0 0.0
      %842 = vmatpush1.msra.mxu0 0.0
      %843 = vmatprep.subr.mxu0 0.0
      %844 = vmatpush1.msra.mxu0 0.0
      %845 = vmatprep.subr.mxu0 0.0
      %846 = vmatpush1.msra.mxu0 0.0
      %847 = vmatprep.subr.mxu0 0.0
      %848 = vmatpush1.msra.mxu0 0.0
      %849 = vmatprep.subr.mxu0 0.0
      %850 = vmatpush1.msra.mxu0 0.0
      %851 = vmatprep.subr.mxu0 0.0
      %852 = vmatpush1.msra.mxu0 0.0
      %853 = vmatprep.subr.mxu0 0.0
      %854 = vmatpush1.msra.mxu0 0.0
      %855 = vmatprep.subr.mxu0 0.0
      %856 = vmatpush1.msra.mxu0 0.0
      %857 = vmatprep.subr.mxu0 0.0
      %858 = vmatpush1.msra.mxu0 0.0
      %859 = vmatprep.subr.mxu0 0.0
      %860 = vmatpush1.msra.mxu0 0.0
      %861 = vmatprep.subr.mxu0 0.0
      %862 = vmatpush1.msra.mxu0 0.0
      %863 = vmatprep.subr.mxu0 0.0
      %864 = vmatpush1.msra.mxu0 0.0
      %865 = vmatprep.subr.mxu0 0.0
      %866 = vmatpush1.msra.mxu0 0.0
      %867 = vmatprep.subr.mxu0 0.0
      %868 = vmatpush1.msra.mxu0 0.0
      %869 = vmatprep.subr.mxu0 0.0
      %870 = vmatpush1.msra.mxu0 0.0
      %871 = vmatprep.subr.mxu0 0.0
      %872 = vmatpush1.msra.mxu0 0.0
      %873 = vmatprep.subr.mxu0 0.0
      %874 = vmatpush1.msra.mxu0 0.0
      %875 = vmatprep.subr.mxu0 0.0
      %876 = vmatpush1.msra.mxu0 0.0
      %877 = vmatprep.subr.mxu0 0.0
      %878 = vmatpush1.msra.mxu0 0.0
      %879 = vmatprep.subr.mxu0 0.0
      %880 = vmatpush1.msra.mxu0 0.0
      %881 = vmatprep.subr.mxu0 0.0
      %882 = vmatpush1.msra.mxu0 0.0
      %883 = vmatprep.subr.mxu0 0.0
      %884 = vmatpush1.msra.mxu0 0.0
      %885 = vmatprep.subr.mxu0 0.0
      %886 = vmatpush1.msra.mxu0 0.0
      %887 = vmatprep.mubr.f32.mxu0 0.0
      %888 = vmatmul.mubr.f32.gmra.mrb[0].mxu0 %v565
      %v889 = vpop.f32.mrb[0].mxu0
      %v890 = vadd.f32 0.0, %v889
      %v891 = vpop.f32.mrb[0].mxu0
      %892 = vdwg.mxu0
      %893 = vmatprep.subr.mxu0 0.0
      %894 = vmatpush1.msra.mxu0 %v637
      %895 = vmatprep.subr.mxu0 0.0
      %896 = vmatpush1.msra.mxu0 %v638
      %897 = vmatprep.subr.mxu0 0.0
      %898 = vmatpush1.msra.mxu0 %v639
      %899 = vmatprep.subr.mxu0 0.0
      %900 = vmatpush1.msra.mxu0 %v640
      %901 = vmatprep.subr.mxu0 0.0
      %902 = vmatpush1.msra.mxu0 %v641
      %903 = vmatprep.subr.mxu0 0.0
      %904 = vmatpush1.msra.mxu0 %v642
      %905 = vmatprep.subr.mxu0 0.0
      %906 = vmatpush1.msra.mxu0 %v643
      %907 = vmatprep.subr.mxu0 0.0
      %908 = vmatpush1.msra.mxu0 %v644
      %909 = vmatprep.subr.mxu0 0.0
      %910 = vmatpush1.msra.mxu0 %v645
      %911 = vmatprep.subr.mxu0 0.0
      %912 = vmatpush1.msra.mxu0 %v646
      %913 = vmatprep.subr.mxu0 0.0
      %914 = vmatpush1.msra.mxu0 %v647
      %915 = vmatprep.subr.mxu0 0.0
      %916 = vmatpush1.msra.mxu0 %v648
      %917 = vmatprep.subr.mxu0 0.0
      %918 = vmatpush1.msra.mxu0 %v649
      %919 = vmatprep.subr.mxu0 0.0
      %920 = vmatpush1.msra.mxu0 %v650
      %921 = vmatprep.subr.mxu0 0.0
      %922 = vmatpush1.msra.mxu0 %v651
      %923 = vmatprep.subr.mxu0 0.0
      %924 = vmatpush1.msra.mxu0 %v652
      %925 = vmatprep.subr.mxu0 0.0
      %926 = vmatpush1.msra.mxu0 0.0
      %927 = vmatprep.subr.mxu0 0.0
      %928 = vmatpush1.msra.mxu0 0.0
      %929 = vmatprep.subr.mxu0 0.0
      %930 = vmatpush1.msra.mxu0 0.0
      %931 = vmatprep.subr.mxu0 0.0
      %932 = vmatpush1.msra.mxu0 0.0
      %933 = vmatprep.subr.mxu0 0.0
      %934 = vmatpush1.msra.mxu0 0.0
      %935 = vmatprep.subr.mxu0 0.0
      %936 = vmatpush1.msra.mxu0 0.0
      %937 = vmatprep.subr.mxu0 0.0
      %938 = vmatpush1.msra.mxu0 0.0
      %939 = vmatprep.subr.mxu0 0.0
      %940 = vmatpush1.msra.mxu0 0.0
      %941 = vmatprep.subr.mxu0 0.0
      %942 = vmatpush1.msra.mxu0 0.0
      %943 = vmatprep.subr.mxu0 0.0
      %944 = vmatpush1.msra.mxu0 0.0
      %945 = vmatprep.subr.mxu0 0.0
      %946 = vmatpush1.msra.mxu0 0.0
      %947 = vmatprep.subr.mxu0 0.0
      %948 = vmatpush1.msra.mxu0 0.0
      %949 = vmatprep.subr.mxu0 0.0
      %950 = vmatpush1.msra.mxu0 0.0
      %951 = vmatprep.subr.mxu0 0.0
      %952 = vmatpush1.msra.mxu0 0.0
      %953 = vmatprep.subr.mxu0 0.0
      %954 = vmatpush1.msra.mxu0 0.0
      %955 = vmatprep.subr.mxu0 0.0
      %956 = vmatpush1.msra.mxu0 0.0
      %957 = vmatprep.mubr.f32.mxu0 0.0
      %958 = vmatmul.mubr.f32.gmra.mrb[0].mxu0 %v890
      %v959 = vpop.f32.mrb[0].mxu0
      %v960 = vadd.f32 0.0, %v959
      %v961 = vpop.f32.mrb[0].mxu0
      %962 = vdwg.mxu0
      %963 = vmatprep.subr.mxu0 0.0
      %964 = vmatpush1.msra.mxu0 %v637
      %965 = vmatprep.subr.mxu0 0.0
      %966 = vmatpush1.msra.mxu0 %v638
      %967 = vmatprep.subr.mxu0 0.0
      %968 = vmatpush1.msra.mxu0 %v639
      %969 = vmatprep.subr.mxu0 0.0
      %970 = vmatpush1.msra.mxu0 %v640
      %971 = vmatprep.subr.mxu0 0.0
      %972 = vmatpush1.msra.mxu0 %v641
      %973 = vmatprep.subr.mxu0 0.0
      %974 = vmatpush1.msra.mxu0 %v642
      %975 = vmatprep.subr.mxu0 0.0
      %976 = vmatpush1.msra.mxu0 %v643
      %977 = vmatprep.subr.mxu0 0.0
      %978 = vmatpush1.msra.mxu0 %v644
      %979 = vmatprep.subr.mxu0 0.0
      %980 = vmatpush1.msra.mxu0 %v645
      %981 = vmatprep.subr.mxu0 0.0
      %982 = vmatpush1.msra.mxu0 %v646
      %983 = vmatprep.subr.mxu0 0.0
      %984 = vmatpush1.msra.mxu0 %v647
      %985 = vmatprep.subr.mxu0 0.0
      %986 = vmatpush1.msra.mxu0 %v648
      %987 = vmatprep.subr.mxu0 0.0
      %988 = vmatpush1.msra.mxu0 %v649
      %989 = vmatprep.subr.mxu0 0.0
      %990 = vmatpush1.msra.mxu0 %v650
      %991 = vmatprep.subr.mxu0 0.0
      %992 = vmatpush1.msra.mxu0 %v651
      %993 = vmatprep.subr.mxu0 0.0
      %994 = vmatpush1.msra.mxu0 %v652
      %995 = vmatprep.subr.mxu0 0.0
      %996 = vmatpush1.msra.mxu0 0.0
      %997 = vmatprep.subr.mxu0 0.0
      %998 = vmatpush1.msra.mxu0 0.0
      %999 = vmatprep.subr.mxu0 0.0
      %1000 = vmatpush1.msra.mxu0 0.0
      %1001 = vmatprep.subr.mxu0 0.0
      %1002 = vmatpush1.msra.mxu0 0.0
      %1003 = vmatprep.subr.mxu0 0.0
      %1004 = vmatpush1.msra.mxu0 0.0
      %1005 = vmatprep.subr.mxu0 0.0
      %1006 = vmatpush1.msra.mxu0 0.0
      %1007 = vmatprep.subr.mxu0 0.0
      %1008 = vmatpush1.msra.mxu0 0.0
      %1009 = vmatprep.subr.mxu0 0.0
      %1010 = vmatpush1.msra.mxu0 0.0
      %1011 = vmatprep.subr.mxu0 0.0
      %1012 = vmatpush1.msra.mxu0 0.0
      %1013 = vmatprep.subr.mxu0 0.0
      %1014 = vmatpush1.msra.mxu0 0.0
      %1015 = vmatprep.subr.mxu0 0.0
      %1016 = vmatpush1.msra.mxu0 0.0
      %1017 = vmatprep.subr.mxu0 0.0
      %1018 = vmatpush1.msra.mxu0 0.0
      %1019 = vmatprep.subr.mxu0 0.0
      %1020 = vmatpush1.msra.mxu0 0.0
      %1021 = vmatprep.subr.mxu0 0.0
      %1022 = vmatpush1.msra.mxu0 0.0
      %1023 = vmatprep.subr.mxu0 0.0
      %1024 = vmatpush1.msra.mxu0 0.0
      %1025 = vmatprep.subr.mxu0 0.0
      %1026 = vmatpush1.msra.mxu0 0.0
      %1027 = vmatprep.mubr.f32.mxu0 0.0
      %1028 = vmatmul.mubr.f32.gmra.mrb[0].mxu0 %v634
      %v1029 = vpop.f32.mrb[0].mxu0
      %v1030 = vadd.f32 %v960, %v1029
      %v1031 = vpop.f32.mrb[0].mxu0
      %1032 = vdwg.mxu0
      %v1034 = vrot.slane %v1030, 1
      %1035 = vrot.lane.b32.xlu0 %v1034, 64
      %v1036 = vpop.permute.xlu0 %1035
      %v1038 = vrot.slane %v1030, 2
      %v1040 = vrot.slane %v1030, 3
      %1041 = vrot.lane.b32.xlu0 %v1040, 64
      %v1042 = vpop.permute.xlu0 %1041
      %v1044 = vrot.slane %v1030, 4
      %v1046 = vrot.slane %v1030, 5
      %1047 = vrot.lane.b32.xlu0 %v1046, 64
      %v1048 = vpop.permute.xlu0 %1047
      %v1050 = vrot.slane %v1030, 6
      %v1052 = vrot.slane %v1030, 7
      %1053 = vrot.lane.b32.xlu0 %v1052, 64
      %v1054 = vpop.permute.xlu0 %1053
      %vm1056 = vcmask 523264
      %v1057 = vsel %vm1056, %v1030, %v1036
      %v1058 = vsel %vm1056, %v1038, %v1042
      %v1059 = vsel %vm1056, %v1044, %v1048
      %v1060 = vsel %vm1056, %v1050, %v1054
      %v1061 = vpack.c.bf16 %v1057, %v1057
      %v1062 = vpack.c.bf16 %v1058, %v1058
      %v1063 = vpack.c.bf16 %v1059, %v1059
      %v1064 = vpack.c.bf16 %v1060, %v1060
      %v1069 = vcombine.low %v1061, %v1062
      %v1070 = vcombine.low %v1063, %v1064
      %v1072 = vunpack.c.l.s4 1966171168
      %v1073 = vunpack.c.0.s8 %v1072
      %v1074 = vlaneseq
      %v1075 = vshrl.u32 %v1074, 7
      %v1076 = vsub.s32 %v1073, %v1075
      %v1077 = vrot.slane %v1069, %v1076
      %v1079 = vunpack.c.l.s4 1966171168
      %v1080 = vunpack.c.0.s8 %v1079
      %v1081 = vlaneseq
      %v1082 = vshrl.u32 %v1081, 7
      %v1083 = vsub.s32 %v1080, %v1082
      %v1084 = vrot.slane %v1070, %v1083
      %v1085 = vcombine.low %v1077, %v1084
      %v1087 = vunpack.c.l.s4 1966171168
      %v1088 = vunpack.c.0.s8 %v1087
      %v1089 = vlaneseq
      %v1090 = vshrl.u32 %v1089, 7
      %v1091 = vsub.s32 %v1088, %v1090
      %v1092 = vrot.slane %v1085, %v1091
      %vm1094 = vcmask 1040384
      %vm1095 = vsmask.f32 256
      %vm1096 = vmand %vm1094, %vm1095
      %vm1097 = vcmask 1041409
      %vm1098 = vsmask.f32 1280
      %vm1099 = vmand %vm1097, %vm1098
      %vm1100 = vmor %vm1099, %vm1096
      %vm1101 = vcmask 1042434
      %vm1102 = vsmask.f32 2304
      %vm1103 = vmand %vm1101, %vm1102
      %vm1104 = vmor %vm1103, %vm1100
      %vm1105 = vcmask 1043459
      %vm1106 = vsmask.f32 3328
      %vm1107 = vmand %vm1105, %vm1106
      %vm1108 = vmor %vm1107, %vm1104
      %v1109 = vld [vmem:[%s254] sm:$0xf]
      %v1110 = vsel %vm1108, %v1092, %v1109
      %1111 = vst [vmem:[%s254] sm:$0xf] %v1110
      %p1112 = scmp.lt.s32.totalorder %s17, 3
      %s1113 = scalar_select %p1112, %s17, 3
      %s1114 = smul.addr %s1113, 4
      %s1115 = scalar_lea.vmem %s6, %s1114
      // Predicated region
      $region45: #{conv_inflation_block.4} parent=43 // pred_check
        %p1116 = pneg %p166
      $region46: #{conv_inflation_block.4} parent=43 // pred_check_branch
        %1118 = sbr.rel (%p1116) target = $region48
      $region47: #{conv_inflation_block.4} parent=43 // pred_region
        _
      $region48: #{conv_inflation_block.4} parent=43 // pred_fallthru
        _
    $region44: #{conv_inflation_block.4} parent=5 // pred_fallthru
      _
    %p1119 = scmp.le.s32.totalorder 2, %s12
    // Predicated region
    $region49: #{conv_inflation_block.4} parent=5 // pred_check
      %p1120 = pneg %p1119
    $region50: #{conv_inflation_block.4} parent=5 // pred_check_branch
      %1122 = sbr.rel (%p1120) target = $region52
    $region51: #{conv_inflation_block.4} parent=5 // pred_region
      %s1123 = ssub.s32 %s12, 2
      // Predicated region
      $region53: #{conv_inflation_block.4} parent=51 // pred_check
        %p1124 = pneg %p172
      $region54: #{conv_inflation_block.4} parent=51 // pred_check_branch
        %1126 = sbr.rel (%p1124) target = $region56
      $region55: #{conv_inflation_block.4} parent=51 // pred_region
        %p1127 = scmp.lt.s32.totalorder %s18, 3
        %s1128 = scalar_select %p1127, %s18, 3
        %s1129 = smul.addr %s1128, 4
        %s1130 = scalar_lea.vmem %s6, %s1129
      $region56: #{conv_inflation_block.4} parent=51 // pred_fallthru
        _
    $region52: #{conv_inflation_block.4} parent=5 // pred_fallthru
      _
  $region6: #{conv_inflation_block.4} parent=0 // loop_footer
    %s16 = sadd.s32 1, %s12
  $region7: #{conv_inflation_block.4} parent=0 // loop_footer_branch
    %11 = sbr.rel target = $region3
  $region8: #{conv_inflation_block.4} parent=0 // loop_exit
    _

// kernel: conv_inflation_block.5
$region0: #{conv_inflation_block.5}
  #allocation0 [shape = 'u32[]', space=smem, size = 0x4, offset = 0x4, fixed_abs, tag = 'smem constant byte address 0x4 - core index']
  #allocation1 [shape = 'u32[144,128]{1,0:T(1,128)}', space=vmem, size = 0x12000, scoped, tag = 'internal scratch']
  #allocation2 [shape = 'f32[2,1024]{1,0:T(2,128)}', space=vmem, size = 0x2000, scoped, tag = 'scratch operand']
  %s0 = inlined_call_operand.vmem [shape: bf16[2,1024], index: 0, kind: input, shape index: {}]
  %s1 = inlined_call_operand.vmem [shape: bf16[1024,1024], index: 1, kind: input, shape index: {}]
  %s2 = inlined_call_operand.vmem [shape: f32[1,1024], index: 2, kind: input, shape index: {}]
  %s3 = inlined_call_operand.vmem [shape: f32[2,1024], index: 3, kind: output, shape index: {}]
  %s4 = sld [smem:[#allocation0]]
  $region30: #{conv_inflation_block.5} parent=0
    _
  %s6 = ssub.s32 1, %s4
  %s7 = scalar_select 0, %s6, %s4
  // Predicated region
  $region2: #{conv_inflation_block.5} parent=0 // pred_check
    _
  $region3: #{conv_inflation_block.5} parent=0 // pred_check_branch
    %9 = sbr.rel (0) target = $region5
  $region4: #{conv_inflation_block.5} parent=0 // pred_region
    _
  $region5: #{conv_inflation_block.5} parent=0 // pred_fallthru
    _
  // Predicated region
  $region6: #{conv_inflation_block.5} parent=0 // pred_check
    _
  $region7: #{conv_inflation_block.5} parent=0 // pred_check_branch
    %11 = sbr.rel (0) target = $region9
  $region8: #{conv_inflation_block.5} parent=0 // pred_region
    _
  $region9: #{conv_inflation_block.5} parent=0 // pred_fallthru
    _
  // Predicated region
  $region10: #{conv_inflation_block.5} parent=0 // pred_check
    _
  $region11: #{conv_inflation_block.5} parent=0 // pred_check_branch
    %13 = sbr.rel (0) target = $region13
  $region12: #{conv_inflation_block.5} parent=0 // pred_region
    _
  $region13: #{conv_inflation_block.5} parent=0 // pred_fallthru
    _
  %p14 = scmp.eq.s32.totalorder 0, 0
  // Predicated region
  $region14: #{conv_inflation_block.5} parent=0 // pred_check
    %p15 = pneg %p14
  $region15: #{conv_inflation_block.5} parent=0 // pred_check_branch
    %17 = sbr.rel (%p15) target = $region17
  $region16: #{conv_inflation_block.5} parent=0 // pred_region
    %18 = vst [vmem:[#allocation2] sm:$0xff] 0.0
    %19 = vst [vmem:[#allocation2 + $0x8] sm:$0xff] 0.0
  $region17: #{conv_inflation_block.5} parent=0 // pred_fallthru
    _
  %v20 = vld [vmem:[#allocation2] sm:$0xff]
  %v21 = vld [vmem:[#allocation2 + $0x8] sm:$0xff]
  %v22 = vld [vmem:[%s0] sm:$0xff]
  %v23 = vld [vmem:[%s1] sm:$0xff]
  %v24 = vld [vmem:[%s1 + $0x8] sm:$0xff]
  %v25 = vld [vmem:[%s1 + $0x10] sm:$0xff]
  %v26 = vld [vmem:[%s1 + $0x18] sm:$0xff]
  %v27 = vld [vmem:[%s1 + $0x20] sm:$0xff]
  %v28 = vld [vmem:[%s1 + $0x28] sm:$0xff]
  %v29 = vld [vmem:[%s1 + $0x30] sm:$0xff]
  %v30 = vld [vmem:[%s1 + $0x38] sm:$0xff]
  %v31 = vld [vmem:[%s1 + $0x40] sm:$0xff]
  %v32 = vld [vmem:[%s1 + $0x48] sm:$0xff]
  %v33 = vld [vmem:[%s1 + $0x50] sm:$0xff]
  %v34 = vld [vmem:[%s1 + $0x58] sm:$0xff]
  %v35 = vld [vmem:[%s1 + $0x60] sm:$0xff]
  %v36 = vld [vmem:[%s1 + $0x68] sm:$0xff]
  %v37 = vld [vmem:[%s1 + $0x70] sm:$0xff]
  %v38 = vld [vmem:[%s1 + $0x78] sm:$0xff]
  %v39 = vld [vmem:[%s1 + $0x80] sm:$0xff]
  %v40 = vld [vmem:[%s1 + $0x88] sm:$0xff]
  %v41 = vld [vmem:[%s1 + $0x90] sm:$0xff]
  %v42 = vld [vmem:[%s1 + $0x98] sm:$0xff]
  %v43 = vld [vmem:[%s1 + $0xa0] sm:$0xff]
  %v44 = vld [vmem:[%s1 + $0xa8] sm:$0xff]
  %v45 = vld [vmem:[%s1 + $0xb0] sm:$0xff]
  %v46 = vld [vmem:[%s1 + $0xb8] sm:$0xff]
  %v47 = vld [vmem:[%s1 + $0xc0] sm:$0xff]
  %v48 = vld [vmem:[%s1 + $0xc8] sm:$0xff]
  %v49 = vld [vmem:[%s1 + $0xd0] sm:$0xff]
  %v50 = vld [vmem:[%s1 + $0xd8] sm:$0xff]
  %v51 = vld [vmem:[%s1 + $0xe0] sm:$0xff]
  %v52 = vld [vmem:[%s1 + $0xe8] sm:$0xff]
  %v53 = vld [vmem:[%s1 + $0xf0] sm:$0xff]
  %v54 = vld [vmem:[%s1 + $0xf8] sm:$0xff]
  %v55 = vld [vmem:[%s1 + $0x100] sm:$0xff]
  %v56 = vld [vmem:[%s1 + $0x108] sm:$0xff]
  %v57 = vld [vmem:[%s1 + $0x110] sm:$0xff]
  %v58 = vld [vmem:[%s1 + $0x118] sm:$0xff]
  %v59 = vld [vmem:[%s1 + $0x120] sm:$0xff]
  %v60 = vld [vmem:[%s1 + $0x128] sm:$0xff]
  %v61 = vld [vmem:[%s1 + $0x130] sm:$0xff]
  %v62 = vld [vmem:[%s1 + $0x138] sm:$0xff]
  %v63 = vld [vmem:[%s1 + $0x140] sm:$0xff]
  %v64 = vld [vmem:[%s1 + $0x148] sm:$0xff]
  %v65 = vld [vmem:[%s1 + $0x150] sm:$0xff]
  %v66 = vld [vmem:[%s1 + $0x158] sm:$0xff]
  %v67 = vld [vmem:[%s1 + $0x160] sm:$0xff]
  %v68 = vld [vmem:[%s1 + $0x168] sm:$0xff]
  %v69 = vld [vmem:[%s1 + $0x170] sm:$0xff]
  %v70 = vld [vmem:[%s1 + $0x178] sm:$0xff]
  %v71 = vld [vmem:[%s1 + $0x180] sm:$0xff]
  %v72 = vld [vmem:[%s1 + $0x188] sm:$0xff]
  %v73 = vld [vmem:[%s1 + $0x190] sm:$0xff]
  %v74 = vld [vmem:[%s1 + $0x198] sm:$0xff]
  %v75 = vld [vmem:[%s1 + $0x1a0] sm:$0xff]
  %v76 = vld [vmem:[%s1 + $0x1a8] sm:$0xff]
  %v77 = vld [vmem:[%s1 + $0x1b0] sm:$0xff]
  %v78 = vld [vmem:[%s1 + $0x1b8] sm:$0xff]
  %v79 = vld [vmem:[%s1 + $0x1c0] sm:$0xff]
  %v80 = vld [vmem:[%s1 + $0x1c8] sm:$0xff]
  %v81 = vld [vmem:[%s1 + $0x1d0] sm:$0xff]
  %v82 = vld [vmem:[%s1 + $0x1d8] sm:$0xff]
  %v83 = vld [vmem:[%s1 + $0x1e0] sm:$0xff]
  %v84 = vld [vmem:[%s1 + $0x1e8] sm:$0xff]
  %v85 = vld [vmem:[%s1 + $0x1f0] sm:$0xff]
  %v86 = vld [vmem:[%s1 + $0x1f8] sm:$0xff]
  %v87 = vld [vmem:[%s1 + $0x200] sm:$0xff]
  %v88 = vld [vmem:[%s1 + $0x208] sm:$0xff]
  %v89 = vld [vmem:[%s1 + $0x210] sm:$0xff]
  %v90 = vld [vmem:[%s1 + $0x218] sm:$0xff]
  %v91 = vld [vmem:[%s1 + $0x220] sm:$0xff]
  %v92 = vld [vmem:[%s1 + $0x228] sm:$0xff]
  %v93 = vld [vmem:[%s1 + $0x230] sm:$0xff]
  %v94 = vld [vmem:[%s1 + $0x238] sm:$0xff]
  %v95 = vld [vmem:[%s1 + $0x240] sm:$0xff]
  %v96 = vld [vmem:[%s1 + $0x248] sm:$0xff]
  %v97 = vld [vmem:[%s1 + $0x250] sm:$0xff]
  %v98 = vld [vmem:[%s1 + $0x258] sm:$0xff]
  %v99 = vld [vmem:[%s1 + $0x260] sm:$0xff]
  %v100 = vld [vmem:[%s1 + $0x268] sm:$0xff]
  %v101 = vld [vmem:[%s1 + $0x270] sm:$0xff]
  %v102 = vld [vmem:[%s1 + $0x278] sm:$0xff]
  %v103 = vld [vmem:[%s1 + $0x280] sm:$0xff]
  %v104 = vld [vmem:[%s1 + $0x288] sm:$0xff]
  %v105 = vld [vmem:[%s1 + $0x290] sm:$0xff]
  %v106 = vld [vmem:[%s1 + $0x298] sm:$0xff]
  %v107 = vld [vmem:[%s1 + $0x2a0] sm:$0xff]
  %v108 = vld [vmem:[%s1 + $0x2a8] sm:$0xff]
  %v109 = vld [vmem:[%s1 + $0x2b0] sm:$0xff]
  %v110 = vld [vmem:[%s1 + $0x2b8] sm:$0xff]
  %v111 = vld [vmem:[%s1 + $0x2c0] sm:$0xff]
  %v112 = vld [vmem:[%s1 + $0x2c8] sm:$0xff]
  %v113 = vld [vmem:[%s1 + $0x2d0] sm:$0xff]
  %v114 = vld [vmem:[%s1 + $0x2d8] sm:$0xff]
  %v115 = vld [vmem:[%s1 + $0x2e0] sm:$0xff]
  %v116 = vld [vmem:[%s1 + $0x2e8] sm:$0xff]
  %v117 = vld [vmem:[%s1 + $0x2f0] sm:$0xff]
  %v118 = vld [vmem:[%s1 + $0x2f8] sm:$0xff]
  %v119 = vld [vmem:[%s1 + $0x300] sm:$0xff]
  %v120 = vld [vmem:[%s1 + $0x308] sm:$0xff]
  %v121 = vld [vmem:[%s1 + $0x310] sm:$0xff]
  %v122 = vld [vmem:[%s1 + $0x318] sm:$0xff]
  %v123 = vld [vmem:[%s1 + $0x320] sm:$0xff]
  %v124 = vld [vmem:[%s1 + $0x328] sm:$0xff]
  %v125 = vld [vmem:[%s1 + $0x330] sm:$0xff]
  %v126 = vld [vmem:[%s1 + $0x338] sm:$0xff]
  %v127 = vld [vmem:[%s1 + $0x340] sm:$0xff]
  %v128 = vld [vmem:[%s1 + $0x348] sm:$0xff]
  %v129 = vld [vmem:[%s1 + $0x350] sm:$0xff]
  %v130 = vld [vmem:[%s1 + $0x358] sm:$0xff]
  %v131 = vld [vmem:[%s1 + $0x360] sm:$0xff]
  %v132 = vld [vmem:[%s1 + $0x368] sm:$0xff]
  %v133 = vld [vmem:[%s1 + $0x370] sm:$0xff]
  %v134 = vld [vmem:[%s1 + $0x378] sm:$0xff]
  %v135 = vld [vmem:[%s1 + $0x380] sm:$0xff]
  %v136 = vld [vmem:[%s1 + $0x388] sm:$0xff]
  %v137 = vld [vmem:[%s1 + $0x390] sm:$0xff]
  %v138 = vld [vmem:[%s1 + $0x398] sm:$0xff]
  %v139 = vld [vmem:[%s1 + $0x3a0] sm:$0xff]
  %v140 = vld [vmem:[%s1 + $0x3a8] sm:$0xff]
  %v141 = vld [vmem:[%s1 + $0x3b0] sm:$0xff]
  %v142 = vld [vmem:[%s1 + $0x3b8] sm:$0xff]
  %v143 = vld [vmem:[%s1 + $0x3c0] sm:$0xff]
  %v144 = vld [vmem:[%s1 + $0x3c8] sm:$0xff]
  %v145 = vld [vmem:[%s1 + $0x3d0] sm:$0xff]
  %v146 = vld [vmem:[%s1 + $0x3d8] sm:$0xff]
  %v147 = vld [vmem:[%s1 + $0x3e0] sm:$0xff]
  %v148 = vld [vmem:[%s1 + $0x3e8] sm:$0xff]
  %v149 = vld [vmem:[%s1 + $0x3f0] sm:$0xff]
  %v150 = vld [vmem:[%s1 + $0x3f8] sm:$0xff]
  %v151 = vld [vmem:[%s1 + $0x400] sm:$0xff]
  %v152 = vld [vmem:[%s1 + $0x408] sm:$0xff]
  %v153 = vld [vmem:[%s1 + $0x410] sm:$0xff]
  %v154 = vld [vmem:[%s1 + $0x418] sm:$0xff]
  %v155 = vld [vmem:[%s1 + $0x420] sm:$0xff]
  %v156 = vld [vmem:[%s1 + $0x428] sm:$0xff]
  %v157 = vld [vmem:[%s1 + $0x430] sm:$0xff]
  %v158 = vld [vmem:[%s1 + $0x438] sm:$0xff]
  %v159 = vld [vmem:[%s1 + $0x440] sm:$0xff]
  %v160 = vld [vmem:[%s1 + $0x448] sm:$0xff]
  %v161 = vld [vmem:[%s1 + $0x450] sm:$0xff]
  %v162 = vld [vmem:[%s1 + $0x458] sm:$0xff]
  %v163 = vld [vmem:[%s1 + $0x460] sm:$0xff]
  %v164 = vld [vmem:[%s1 + $0x468] sm:$0xff]
  %v165 = vld [vmem:[%s1 + $0x470] sm:$0xff]
  %v166 = vld [vmem:[%s1 + $0x478] sm:$0xff]
  %v167 = vld [vmem:[%s1 + $0x480] sm:$0xff]
  %v168 = vld [vmem:[%s1 + $0x488] sm:$0xff]
  %v169 = vld [vmem:[%s1 + $0x490] sm:$0xff]
  %v170 = vld [vmem:[%s1 + $0x498] sm:$0xff]
  %v171 = vld [vmem:[%s1 + $0x4a0] sm:$0xff]
  %v172 = vld [vmem:[%s1 + $0x4a8] sm:$0xff]
  %v173 = vld [vmem:[%s1 + $0x4b0] sm:$0xff]
  %v174 = vld [vmem:[%s1 + $0x4b8] sm:$0xff]
  %v175 = vld [vmem:[%s1 + $0x4c0] sm:$0xff]
  %v176 = vld [vmem:[%s1 + $0x4c8] sm:$0xff]
  %v177 = vld [vmem:[%s1 + $0x4d0] sm:$0xff]
  %v178 = vld [vmem:[%s1 + $0x4d8] sm:$0xff]
  %v179 = vld [vmem:[%s1 + $0x4e0] sm:$0xff]
  %v180 = vld [vmem:[%s1 + $0x4e8] sm:$0xff]
  %v181 = vld [vmem:[%s1 + $0x4f0] sm:$0xff]
  %v182 = vld [vmem:[%s1 + $0x4f8] sm:$0xff]
  %v183 = vld [vmem:[%s1 + $0x500] sm:$0xff]
  %v184 = vld [vmem:[%s1 + $0x508] sm:$0xff]
  %v185 = vld [vmem:[%s1 + $0x510] sm:$0xff]
  %v186 = vld [vmem:[%s1 + $0x518] sm:$0xff]
  %v187 = vld [vmem:[%s1 + $0x520] sm:$0xff]
  %v188 = vld [vmem:[%s1 + $0x528] sm:$0xff]
  %v189 = vld [vmem:[%s1 + $0x530] sm:$0xff]
  %v190 = vld [vmem:[%s1 + $0x538] sm:$0xff]
  %v191 = vld [vmem:[%s1 + $0x540] sm:$0xff]
  %v192 = vld [vmem:[%s1 + $0x548] sm:$0xff]
  %v193 = vld [vmem:[%s1 + $0x550] sm:$0xff]
  %v194 = vld [vmem:[%s1 + $0x558] sm:$0xff]
  %v195 = vld [vmem:[%s1 + $0x560] sm:$0xff]
  %v196 = vld [vmem:[%s1 + $0x568] sm:$0xff]
  %v197 = vld [vmem:[%s1 + $0x570] sm:$0xff]
  %v198 = vld [vmem:[%s1 + $0x578] sm:$0xff]
  %v199 = vld [vmem:[%s1 + $0x580] sm:$0xff]
  %v200 = vld [vmem:[%s1 + $0x588] sm:$0xff]
  %v201 = vld [vmem:[%s1 + $0x590] sm:$0xff]
  %v202 = vld [vmem:[%s1 + $0x598] sm:$0xff]
  %v203 = vld [vmem:[%s1 + $0x5a0] sm:$0xff]
  %v204 = vld [vmem:[%s1 + $0x5a8] sm:$0xff]
  %v205 = vld [vmem:[%s1 + $0x5b0] sm:$0xff]
  %v206 = vld [vmem:[%s1 + $0x5b8] sm:$0xff]
  %v207 = vld [vmem:[%s1 + $0x5c0] sm:$0xff]
  %v208 = vld [vmem:[%s1 + $0x5c8] sm:$0xff]
  %v209 = vld [vmem:[%s1 + $0x5d0] sm:$0xff]
  %v210 = vld [vmem:[%s1 + $0x5d8] sm:$0xff]
  %v211 = vld [vmem:[%s1 + $0x5e0] sm:$0xff]
  %v212 = vld [vmem:[%s1 + $0x5e8] sm:$0xff]
  %v213 = vld [vmem:[%s1 + $0x5f0] sm:$0xff]
  %v214 = vld [vmem:[%s1 + $0x5f8] sm:$0xff]
  %v215 = vld [vmem:[%s1 + $0x600] sm:$0xff]
  %v216 = vld [vmem:[%s1 + $0x608] sm:$0xff]
  %v217 = vld [vmem:[%s1 + $0x610] sm:$0xff]
  %v218 = vld [vmem:[%s1 + $0x618] sm:$0xff]
  %v219 = vld [vmem:[%s1 + $0x620] sm:$0xff]
  %v220 = vld [vmem:[%s1 + $0x628] sm:$0xff]
  %v221 = vld [vmem:[%s1 + $0x630] sm:$0xff]
  %v222 = vld [vmem:[%s1 + $0x638] sm:$0xff]
  %v223 = vld [vmem:[%s1 + $0x640] sm:$0xff]
  %v224 = vld [vmem:[%s1 + $0x648] sm:$0xff]
  %v225 = vld [vmem:[%s1 + $0x650] sm:$0xff]
  %v226 = vld [vmem:[%s1 + $0x658] sm:$0xff]
  %v227 = vld [vmem:[%s1 + $0x660] sm:$0xff]
  %v228 = vld [vmem:[%s1 + $0x668] sm:$0xff]
  %v229 = vld [vmem:[%s1 + $0x670] sm:$0xff]
  %v230 = vld [vmem:[%s1 + $0x678] sm:$0xff]
  %v231 = vld [vmem:[%s1 + $0x680] sm:$0xff]
  %v232 = vld [vmem:[%s1 + $0x688] sm:$0xff]
  %v233 = vld [vmem:[%s1 + $0x690] sm:$0xff]
  %v234 = vld [vmem:[%s1 + $0x698] sm:$0xff]
  %v235 = vld [vmem:[%s1 + $0x6a0] sm:$0xff]
  %v236 = vld [vmem:[%s1 + $0x6a8] sm:$0xff]
  %v237 = vld [vmem:[%s1 + $0x6b0] sm:$0xff]
  %v238 = vld [vmem:[%s1 + $0x6b8] sm:$0xff]
  %v239 = vld [vmem:[%s1 + $0x6c0] sm:$0xff]
  %v240 = vld [vmem:[%s1 + $0x6c8] sm:$0xff]
  %v241 = vld [vmem:[%s1 + $0x6d0] sm:$0xff]
  %v242 = vld [vmem:[%s1 + $0x6d8] sm:$0xff]
  %v243 = vld [vmem:[%s1 + $0x6e0] sm:$0xff]
  %v244 = vld [vmem:[%s1 + $0x6e8] sm:$0xff]
  %v245 = vld [vmem:[%s1 + $0x6f0] sm:$0xff]
  %v246 = vld [vmem:[%s1 + $0x6f8] sm:$0xff]
  %v247 = vld [vmem:[%s1 + $0x700] sm:$0xff]
  %v248 = vld [vmem:[%s1 + $0x708] sm:$0xff]
  %v249 = vld [vmem:[%s1 + $0x710] sm:$0xff]
  %v250 = vld [vmem:[%s1 + $0x718] sm:$0xff]
  %v251 = vld [vmem:[%s1 + $0x720] sm:$0xff]
  %v252 = vld [vmem:[%s1 + $0x728] sm:$0xff]
  %v253 = vld [vmem:[%s1 + $0x730] sm:$0xff]
  %v254 = vld [vmem:[%s1 + $0x738] sm:$0xff]
  %v255 = vld [vmem:[%s1 + $0x740] sm:$0xff]
  %v256 = vld [vmem:[%s1 + $0x748] sm:$0xff]
  %v257 = vld [vmem:[%s1 + $0x750] sm:$0xff]
  %v258 = vld [vmem:[%s1 + $0x758] sm:$0xff]
  %v259 = vld [vmem:[%s1 + $0x760] sm:$0xff]
  %v260 = vld [vmem:[%s1 + $0x768] sm:$0xff]
  %v261 = vld [vmem:[%s1 + $0x770] sm:$0xff]
  %v262 = vld [vmem:[%s1 + $0x778] sm:$0xff]
  %v263 = vld [vmem:[%s1 + $0x780] sm:$0xff]
  %v264 = vld [vmem:[%s1 + $0x788] sm:$0xff]
  %v265 = vld [vmem:[%s1 + $0x790] sm:$0xff]
  %v266 = vld [vmem:[%s1 + $0x798] sm:$0xff]
  %v267 = vld [vmem:[%s1 + $0x7a0] sm:$0xff]
  %v268 = vld [vmem:[%s1 + $0x7a8] sm:$0xff]
  %v269 = vld [vmem:[%s1 + $0x7b0] sm:$0xff]
  %v270 = vld [vmem:[%s1 + $0x7b8] sm:$0xff]
  %v271 = vld [vmem:[%s1 + $0x7c0] sm:$0xff]
  %v272 = vld [vmem:[%s1 + $0x7c8] sm:$0xff]
  %v273 = vld [vmem:[%s1 + $0x7d0] sm:$0xff]
  %v274 = vld [vmem:[%s1 + $0x7d8] sm:$0xff]
  %v275 = vld [vmem:[%s1 + $0x7e0] sm:$0xff]
  %v276 = vld [vmem:[%s1 + $0x7e8] sm:$0xff]
  %v277 = vld [vmem:[%s1 + $0x7f0] sm:$0xff]
  %v278 = vld [vmem:[%s1 + $0x7f8] sm:$0xff]
  %v279 = vld [vmem:[%s1 + $0x800] sm:$0xff]
  %v280 = vld [vmem:[%s1 + $0x808] sm:$0xff]
  %v281 = vld [vmem:[%s1 + $0x810] sm:$0xff]
  %v282 = vld [vmem:[%s1 + $0x818] sm:$0xff]
  %v283 = vld [vmem:[%s1 + $0x820] sm:$0xff]
  %v284 = vld [vmem:[%s1 + $0x828] sm:$0xff]
  %v285 = vld [vmem:[%s1 + $0x830] sm:$0xff]
  %v286 = vld [vmem:[%s1 + $0x838] sm:$0xff]
  %v287 = vld [vmem:[%s1 + $0x840] sm:$0xff]
  %v288 = vld [vmem:[%s1 + $0x848] sm:$0xff]
  %v289 = vld [vmem:[%s1 + $0x850] sm:$0xff]
  %v290 = vld [vmem:[%s1 + $0x858] sm:$0xff]
  %v291 = vld [vmem:[%s1 + $0x860] sm:$0xff]
  %v292 = vld [vmem:[%s1 + $0x868] sm:$0xff]
  %v293 = vld [vmem:[%s1 + $0x870] sm:$0xff]
  %v294 = vld [vmem:[%s1 + $0x878] sm:$0xff]
  %v295 = vld [vmem:[%s1 + $0x880] sm:$0xff]
  %v296 = vld [vmem:[%s1 + $0x888] sm:$0xff]
  %v297 = vld [vmem:[%s1 + $0x890] sm:$0xff]
  %v298 = vld [vmem:[%s1 + $0x898] sm:$0xff]
  %v299 = vld [vmem:[%s1 + $0x8a0] sm:$0xff]
  %v300 = vld [vmem:[%s1 + $0x8a8] sm:$0xff]
  %v301 = vld [vmem:[%s1 + $0x8b0] sm:$0xff]
  %v302 = vld [vmem:[%s1 + $0x8b8] sm:$0xff]
  %v303 = vld [vmem:[%s1 + $0x8c0] sm:$0xff]
  %v304 = vld [vmem:[%s1 + $0x8c8] sm:$0xff]
  %v305 = vld [vmem:[%s1 + $0x8d0] sm:$0xff]
  %v306 = vld [vmem:[%s1 + $0x8d8] sm:$0xff]
  %v307 = vld [vmem:[%s1 + $0x8e0] sm:$0xff]
  %v308 = vld [vmem:[%s1 + $0x8e8] sm:$0xff]
  %v309 = vld [vmem:[%s1 + $0x8f0] sm:$0xff]
  %v310 = vld [vmem:[%s1 + $0x8f8] sm:$0xff]
  %v311 = vld [vmem:[%s1 + $0x900] sm:$0xff]
  %v312 = vld [vmem:[%s1 + $0x908] sm:$0xff]
  %v313 = vld [vmem:[%s1 + $0x910] sm:$0xff]
  %v314 = vld [vmem:[%s1 + $0x918] sm:$0xff]
  %v315 = vld [vmem:[%s1 + $0x920] sm:$0xff]
  %v316 = vld [vmem:[%s1 + $0x928] sm:$0xff]
  %v317 = vld [vmem:[%s1 + $0x930] sm:$0xff]
  %v318 = vld [vmem:[%s1 + $0x938] sm:$0xff]
  %v319 = vld [vmem:[%s1 + $0x940] sm:$0xff]
  %v320 = vld [vmem:[%s1 + $0x948] sm:$0xff]
  %v321 = vld [vmem:[%s1 + $0x950] sm:$0xff]
  %v322 = vld [vmem:[%s1 + $0x958] sm:$0xff]
  %v323 = vld [vmem:[%s1 + $0x960] sm:$0xff]
  %v324 = vld [vmem:[%s1 + $0x968] sm:$0xff]
  %v325 = vld [vmem:[%s1 + $0x970] sm:$0xff]
  %v326 = vld [vmem:[%s1 + $0x978] sm:$0xff]
  %v327 = vld [vmem:[%s1 + $0x980] sm:$0xff]
  %v328 = vld [vmem:[%s1 + $0x988] sm:$0xff]
  %v329 = vld [vmem:[%s1 + $0x990] sm:$0xff]
  %v330 = vld [vmem:[%s1 + $0x998] sm:$0xff]
  %v331 = vld [vmem:[%s1 + $0x9a0] sm:$0xff]
  %v332 = vld [vmem:[%s1 + $0x9a8] sm:$0xff]
  %v333 = vld [vmem:[%s1 + $0x9b0] sm:$0xff]
  %v334 = vld [vmem:[%s1 + $0x9b8] sm:$0xff]
  %v335 = vld [vmem:[%s1 + $0x9c0] sm:$0xff]
  %v336 = vld [vmem:[%s1 + $0x9c8] sm:$0xff]
  %v337 = vld [vmem:[%s1 + $0x9d0] sm:$0xff]
  %v338 = vld [vmem:[%s1 + $0x9d8] sm:$0xff]
  %v339 = vld [vmem:[%s1 + $0x9e0] sm:$0xff]
  %v340 = vld [vmem:[%s1 + $0x9e8] sm:$0xff]
  %v341 = vld [vmem:[%s1 + $0x9f0] sm:$0xff]
  %v342 = vld [vmem:[%s1 + $0x9f8] sm:$0xff]
  %v343 = vld [vmem:[%s1 + $0xa00] sm:$0xff]
  %v344 = vld [vmem:[%s1 + $0xa08] sm:$0xff]
  %v345 = vld [vmem:[%s1 + $0xa10] sm:$0xff]
  %v346 = vld [vmem:[%s1 + $0xa18] sm:$0xff]
  %v347 = vld [vmem:[%s1 + $0xa20] sm:$0xff]
  %v348 = vld [vmem:[%s1 + $0xa28] sm:$0xff]
  %v349 = vld [vmem:[%s1 + $0xa30] sm:$0xff]
  %v350 = vld [vmem:[%s1 + $0xa38] sm:$0xff]
  %v351 = vld [vmem:[%s1 + $0xa40] sm:$0xff]
  %v352 = vld [vmem:[%s1 + $0xa48] sm:$0xff]
  %v353 = vld [vmem:[%s1 + $0xa50] sm:$0xff]
  %v354 = vld [vmem:[%s1 + $0xa58] sm:$0xff]
  %v355 = vld [vmem:[%s1 + $0xa60] sm:$0xff]
  %v356 = vld [vmem:[%s1 + $0xa68] sm:$0xff]
  %v357 = vld [vmem:[%s1 + $0xa70] sm:$0xff]
  %v358 = vld [vmem:[%s1 + $0xa78] sm:$0xff]
  %v359 = vld [vmem:[%s1 + $0xa80] sm:$0xff]
  %v360 = vld [vmem:[%s1 + $0xa88] sm:$0xff]
  %v361 = vld [vmem:[%s1 + $0xa90] sm:$0xff]
  %v362 = vld [vmem:[%s1 + $0xa98] sm:$0xff]
  %v363 = vld [vmem:[%s1 + $0xaa0] sm:$0xff]
  %v364 = vld [vmem:[%s1 + $0xaa8] sm:$0xff]
  %v365 = vld [vmem:[%s1 + $0xab0] sm:$0xff]
  %v366 = vld [vmem:[%s1 + $0xab8] sm:$0xff]
  %v367 = vld [vmem:[%s1 + $0xac0] sm:$0xff]
  %v368 = vld [vmem:[%s1 + $0xac8] sm:$0xff]
  %v369 = vld [vmem:[%s1 + $0xad0] sm:$0xff]
  %v370 = vld [vmem:[%s1 + $0xad8] sm:$0xff]
  %v371 = vld [vmem:[%s1 + $0xae0] sm:$0xff]
  %v372 = vld [vmem:[%s1 + $0xae8] sm:$0xff]
  %v373 = vld [vmem:[%s1 + $0xaf0] sm:$0xff]
  %v374 = vld [vmem:[%s1 + $0xaf8] sm:$0xff]
  %v375 = vld [vmem:[%s1 + $0xb00] sm:$0xff]
  %v376 = vld [vmem:[%s1 + $0xb08] sm:$0xff]
  %v377 = vld [vmem:[%s1 + $0xb10] sm:$0xff]
  %v378 = vld [vmem:[%s1 + $0xb18] sm:$0xff]
  %v379 = vld [vmem:[%s1 + $0xb20] sm:$0xff]
  %v380 = vld [vmem:[%s1 + $0xb28] sm:$0xff]
  %v381 = vld [vmem:[%s1 + $0xb30] sm:$0xff]
  %v382 = vld [vmem:[%s1 + $0xb38] sm:$0xff]
  %v383 = vld [vmem:[%s1 + $0xb40] sm:$0xff]
  %v384 = vld [vmem:[%s1 + $0xb48] sm:$0xff]
  %v385 = vld [vmem:[%s1 + $0xb50] sm:$0xff]
  %v386 = vld [vmem:[%s1 + $0xb58] sm:$0xff]
  %v387 = vld [vmem:[%s1 + $0xb60] sm:$0xff]
  %v388 = vld [vmem:[%s1 + $0xb68] sm:$0xff]
  %v389 = vld [vmem:[%s1 + $0xb70] sm:$0xff]
  %v390 = vld [vmem:[%s1 + $0xb78] sm:$0xff]
  %v391 = vld [vmem:[%s1 + $0xb80] sm:$0xff]
  %v392 = vld [vmem:[%s1 + $0xb88] sm:$0xff]
  %v393 = vld [vmem:[%s1 + $0xb90] sm:$0xff]
  %v394 = vld [vmem:[%s1 + $0xb98] sm:$0xff]
  %v395 = vld [vmem:[%s1 + $0xba0] sm:$0xff]
  %v396 = vld [vmem:[%s1 + $0xba8] sm:$0xff]
  %v397 = vld [vmem:[%s1 + $0xbb0] sm:$0xff]
  %v398 = vld [vmem:[%s1 + $0xbb8] sm:$0xff]
  %v399 = vld [vmem:[%s1 + $0xbc0] sm:$0xff]
  %v400 = vld [vmem:[%s1 + $0xbc8] sm:$0xff]
  %v401 = vld [vmem:[%s1 + $0xbd0] sm:$0xff]
  %v402 = vld [vmem:[%s1 + $0xbd8] sm:$0xff]
  %v403 = vld [vmem:[%s1 + $0xbe0] sm:$0xff]
  %v404 = vld [vmem:[%s1 + $0xbe8] sm:$0xff]
  %v405 = vld [vmem:[%s1 + $0xbf0] sm:$0xff]
  %v406 = vld [vmem:[%s1 + $0xbf8] sm:$0xff]
  %v407 = vld [vmem:[%s1 + $0xc00] sm:$0xff]
  %v408 = vld [vmem:[%s1 + $0xc08] sm:$0xff]
  %v409 = vld [vmem:[%s1 + $0xc10] sm:$0xff]
  %v410 = vld [vmem:[%s1 + $0xc18] sm:$0xff]
  %v411 = vld [vmem:[%s1 + $0xc20] sm:$0xff]
  %v412 = vld [vmem:[%s1 + $0xc28] sm:$0xff]
  %v413 = vld [vmem:[%s1 + $0xc30] sm:$0xff]
  %v414 = vld [vmem:[%s1 + $0xc38] sm:$0xff]
  %v415 = vld [vmem:[%s1 + $0xc40] sm:$0xff]
  %v416 = vld [vmem:[%s1 + $0xc48] sm:$0xff]
  %v417 = vld [vmem:[%s1 + $0xc50] sm:$0xff]
  %v418 = vld [vmem:[%s1 + $0xc58] sm:$0xff]
  %v419 = vld [vmem:[%s1 + $0xc60] sm:$0xff]
  %v420 = vld [vmem:[%s1 + $0xc68] sm:$0xff]
  %v421 = vld [vmem:[%s1 + $0xc70] sm:$0xff]
  %v422 = vld [vmem:[%s1 + $0xc78] sm:$0xff]
  %v423 = vld [vmem:[%s1 + $0xc80] sm:$0xff]
  %v424 = vld [vmem:[%s1 + $0xc88] sm:$0xff]
  %v425 = vld [vmem:[%s1 + $0xc90] sm:$0xff]
  %v426 = vld [vmem:[%s1 + $0xc98] sm:$0xff]
  %v427 = vld [vmem:[%s1 + $0xca0] sm:$0xff]
  %v428 = vld [vmem:[%s1 + $0xca8] sm:$0xff]
  %v429 = vld [vmem:[%s1 + $0xcb0] sm:$0xff]
  %v430 = vld [vmem:[%s1 + $0xcb8] sm:$0xff]
  %v431 = vld [vmem:[%s1 + $0xcc0] sm:$0xff]
  %v432 = vld [vmem:[%s1 + $0xcc8] sm:$0xff]
  %v433 = vld [vmem:[%s1 + $0xcd0] sm:$0xff]
  %v434 = vld [vmem:[%s1 + $0xcd8] sm:$0xff]
  %v435 = vld [vmem:[%s1 + $0xce0] sm:$0xff]
  %v436 = vld [vmem:[%s1 + $0xce8] sm:$0xff]
  %v437 = vld [vmem:[%s1 + $0xcf0] sm:$0xff]
  %v438 = vld [vmem:[%s1 + $0xcf8] sm:$0xff]
  %v439 = vld [vmem:[%s1 + $0xd00] sm:$0xff]
  %v440 = vld [vmem:[%s1 + $0xd08] sm:$0xff]
  %v441 = vld [vmem:[%s1 + $0xd10] sm:$0xff]
  %v442 = vld [vmem:[%s1 + $0xd18] sm:$0xff]
  %v443 = vld [vmem:[%s1 + $0xd20] sm:$0xff]
  %v444 = vld [vmem:[%s1 + $0xd28] sm:$0xff]
  %v445 = vld [vmem:[%s1 + $0xd30] sm:$0xff]
  %v446 = vld [vmem:[%s1 + $0xd38] sm:$0xff]
  %v447 = vld [vmem:[%s1 + $0xd40] sm:$0xff]
  %v448 = vld [vmem:[%s1 + $0xd48] sm:$0xff]
  %v449 = vld [vmem:[%s1 + $0xd50] sm:$0xff]
  %v450 = vld [vmem:[%s1 + $0xd58] sm:$0xff]
  %v451 = vld [vmem:[%s1 + $0xd60] sm:$0xff]
  %v452 = vld [vmem:[%s1 + $0xd68] sm:$0xff]
  %v453 = vld [vmem:[%s1 + $0xd70] sm:$0xff]
  %v454 = vld [vmem:[%s1 + $0xd78] sm:$0xff]
  %v455 = vld [vmem:[%s1 + $0xd80] sm:$0xff]
  %v456 = vld [vmem:[%s1 + $0xd88] sm:$0xff]
  %v457 = vld [vmem:[%s1 + $0xd90] sm:$0xff]
  %v458 = vld [vmem:[%s1 + $0xd98] sm:$0xff]
  %v459 = vld [vmem:[%s1 + $0xda0] sm:$0xff]
  %v460 = vld [vmem:[%s1 + $0xda8] sm:$0xff]
  %v461 = vld [vmem:[%s1 + $0xdb0] sm:$0xff]
  %v462 = vld [vmem:[%s1 + $0xdb8] sm:$0xff]
  %v463 = vld [vmem:[%s1 + $0xdc0] sm:$0xff]
  %v464 = vld [vmem:[%s1 + $0xdc8] sm:$0xff]
  %v465 = vld [vmem:[%s1 + $0xdd0] sm:$0xff]
  %v466 = vld [vmem:[%s1 + $0xdd8] sm:$0xff]
  %v467 = vld [vmem:[%s1 + $0xde0] sm:$0xff]
  %v468 = vld [vmem:[%s1 + $0xde8] sm:$0xff]
  %v469 = vld [vmem:[%s1 + $0xdf0] sm:$0xff]
  %v470 = vld [vmem:[%s1 + $0xdf8] sm:$0xff]
  %v471 = vld [vmem:[%s1 + $0xe00] sm:$0xff]
  %v472 = vld [vmem:[%s1 + $0xe08] sm:$0xff]
  %v473 = vld [vmem:[%s1 + $0xe10] sm:$0xff]
  %v474 = vld [vmem:[%s1 + $0xe18] sm:$0xff]
  %v475 = vld [vmem:[%s1 + $0xe20] sm:$0xff]
  %v476 = vld [vmem:[%s1 + $0xe28] sm:$0xff]
  %v477 = vld [vmem:[%s1 + $0xe30] sm:$0xff]
  %v478 = vld [vmem:[%s1 + $0xe38] sm:$0xff]
  %v479 = vld [vmem:[%s1 + $0xe40] sm:$0xff]
  %v480 = vld [vmem:[%s1 + $0xe48] sm:$0xff]
  %v481 = vld [vmem:[%s1 + $0xe50] sm:$0xff]
  %v482 = vld [vmem:[%s1 + $0xe58] sm:$0xff]
  %v483 = vld [vmem:[%s1 + $0xe60] sm:$0xff]
  %v484 = vld [vmem:[%s1 + $0xe68] sm:$0xff]
  %v485 = vld [vmem:[%s1 + $0xe70] sm:$0xff]
  %v486 = vld [vmem:[%s1 + $0xe78] sm:$0xff]
  %v487 = vld [vmem:[%s1 + $0xe80] sm:$0xff]
  %v488 = vld [vmem:[%s1 + $0xe88] sm:$0xff]
  %v489 = vld [vmem:[%s1 + $0xe90] sm:$0xff]
  %v490 = vld [vmem:[%s1 + $0xe98] sm:$0xff]
  %v491 = vld [vmem:[%s1 + $0xea0] sm:$0xff]
  %v492 = vld [vmem:[%s1 + $0xea8] sm:$0xff]
  %v493 = vld [vmem:[%s1 + $0xeb0] sm:$0xff]
  %v494 = vld [vmem:[%s1 + $0xeb8] sm:$0xff]
  %v495 = vld [vmem:[%s1 + $0xec0] sm:$0xff]
  %v496 = vld [vmem:[%s1 + $0xec8] sm:$0xff]
  %v497 = vld [vmem:[%s1 + $0xed0] sm:$0xff]
  %v498 = vld [vmem:[%s1 + $0xed8] sm:$0xff]
  %v499 = vld [vmem:[%s1 + $0xee0] sm:$0xff]
  %v500 = vld [vmem:[%s1 + $0xee8] sm:$0xff]
  %v501 = vld [vmem:[%s1 + $0xef0] sm:$0xff]
  %v502 = vld [vmem:[%s1 + $0xef8] sm:$0xff]
  %v503 = vld [vmem:[%s1 + $0xf00] sm:$0xff]
  %v504 = vld [vmem:[%s1 + $0xf08] sm:$0xff]
  %v505 = vld [vmem:[%s1 + $0xf10] sm:$0xff]
  %v506 = vld [vmem:[%s1 + $0xf18] sm:$0xff]
  %v507 = vld [vmem:[%s1 + $0xf20] sm:$0xff]
  %v508 = vld [vmem:[%s1 + $0xf28] sm:$0xff]
  %v509 = vld [vmem:[%s1 + $0xf30] sm:$0xff]
  %v510 = vld [vmem:[%s1 + $0xf38] sm:$0xff]
  %v511 = vld [vmem:[%s1 + $0xf40] sm:$0xff]
  %v512 = vld [vmem:[%s1 + $0xf48] sm:$0xff]
  %v513 = vld [vmem:[%s1 + $0xf50] sm:$0xff]
  %v514 = vld [vmem:[%s1 + $0xf58] sm:$0xff]
  %v515 = vld [vmem:[%s1 + $0xf60] sm:$0xff]
  %v516 = vld [vmem:[%s1 + $0xf68] sm:$0xff]
  %v517 = vld [vmem:[%s1 + $0xf70] sm:$0xff]
  %v518 = vld [vmem:[%s1 + $0xf78] sm:$0xff]
  %v519 = vld [vmem:[%s1 + $0xf80] sm:$0xff]
  %v520 = vld [vmem:[%s1 + $0xf88] sm:$0xff]
  %v521 = vld [vmem:[%s1 + $0xf90] sm:$0xff]
  %v522 = vld [vmem:[%s1 + $0xf98] sm:$0xff]
  %v523 = vld [vmem:[%s1 + $0xfa0] sm:$0xff]
  %v524 = vld [vmem:[%s1 + $0xfa8] sm:$0xff]
  %v525 = vld [vmem:[%s1 + $0xfb0] sm:$0xff]
  %v526 = vld [vmem:[%s1 + $0xfb8] sm:$0xff]
  %v527 = vld [vmem:[%s1 + $0xfc0] sm:$0xff]
  %v528 = vld [vmem:[%s1 + $0xfc8] sm:$0xff]
  %v529 = vld [vmem:[%s1 + $0xfd0] sm:$0xff]
  %v530 = vld [vmem:[%s1 + $0xfd8] sm:$0xff]
  %v531 = vld [vmem:[%s1 + $0xfe0] sm:$0xff]
  %v532 = vld [vmem:[%s1 + $0xfe8] sm:$0xff]
  %v533 = vld [vmem:[%s1 + $0xff0] sm:$0xff]
  %v534 = vld [vmem:[%s1 + $0xff8] sm:$0xff]
  %v536 = vcombine.high %v22, %v22
  %v538 = vunpack.c.l.s4 1966171168
  %v539 = vunpack.c.0.s8 %v538
  %v540 = vlaneseq
  %v541 = vshrl.u32 %v540, 7
  %v542 = vsub.s32 %v539, %v541
  %v543 = vrot.slane %v22, %v542
  %v545 = vunpack.c.l.s4 1966171168
  %v546 = vunpack.c.0.s8 %v545
  %v547 = vlaneseq
  %v548 = vshrl.u32 %v547, 7
  %v549 = vsub.s32 %v546, %v548
  %v550 = vrot.slane %v536, %v549
  %v551 = vcombine.high %v543, %v543
  %v552 = vcombine.high %v550, %v550
  %v554 = vunpack.c.l.s4 1966171168
  %v555 = vunpack.c.0.s8 %v554
  %v556 = vlaneseq
  %v557 = vshrl.u32 %v556, 7
  %v558 = vsub.s32 %v555, %v557
  %v559 = vrot.slane %v543, %v558
  %v561 = vunpack.c.l.s4 1966171168
  %v562 = vunpack.c.0.s8 %v561
  %v563 = vlaneseq
  %v564 = vshrl.u32 %v563, 7
  %v565 = vsub.s32 %v562, %v564
  %v566 = vrot.slane %v550, %v565
  %v568 = vunpack.c.l.s4 1966171168
  %v569 = vunpack.c.0.s8 %v568
  %v570 = vlaneseq
  %v571 = vshrl.u32 %v570, 7
  %v572 = vsub.s32 %v569, %v571
  %v573 = vrot.slane %v551, %v572
  %v575 = vunpack.c.l.s4 1966171168
  %v576 = vunpack.c.0.s8 %v575
  %v577 = vlaneseq
  %v578 = vshrl.u32 %v577, 7
  %v579 = vsub.s32 %v576, %v578
  %v580 = vrot.slane %v552, %v579
  %v581 = vcombine.high %v559, %v559
  %v582 = vcombine.high %v566, %v566
  %v583 = vcombine.high %v573, %v573
  %v584 = vcombine.high %v580, %v580
  %v1105 = vunpack.c.l.b16 %v23
  %v1106 = vunpack.c.h.b16 %v23
  %v1107 = vunpack.c.l.b16 %v24
  %v1108 = vunpack.c.h.b16 %v24
  %v1109 = vunpack.c.l.b16 %v25
  %v1110 = vunpack.c.h.b16 %v25
  %v1111 = vunpack.c.l.b16 %v26
  %v1112 = vunpack.c.h.b16 %v26
  %v1113 = vunpack.c.l.b16 %v27
  %v1114 = vunpack.c.h.b16 %v27
  %v1115 = vunpack.c.l.b16 %v28
  %v1116 = vunpack.c.h.b16 %v28
  %v1117 = vunpack.c.l.b16 %v29
  %v1118 = vunpack.c.h.b16 %v29
  %v1119 = vunpack.c.l.b16 %v30
  %v1120 = vunpack.c.h.b16 %v30
  %v1121 = vunpack.c.l.b16 %v31
  %v1122 = vunpack.c.h.b16 %v31
  %v1123 = vunpack.c.l.b16 %v32
  %v1124 = vunpack.c.h.b16 %v32
  %v1125 = vunpack.c.l.b16 %v33
  %v1126 = vunpack.c.h.b16 %v33
  %v1127 = vunpack.c.l.b16 %v34
  %v1128 = vunpack.c.h.b16 %v34
  %v1129 = vunpack.c.l.b16 %v35
  %v1130 = vunpack.c.h.b16 %v35
  %v1131 = vunpack.c.l.b16 %v36
  %v1132 = vunpack.c.h.b16 %v36
  %v1133 = vunpack.c.l.b16 %v37
  %v1134 = vunpack.c.h.b16 %v37
  %v1135 = vunpack.c.l.b16 %v38
  %v1136 = vunpack.c.h.b16 %v38
  %v1137 = vunpack.c.l.b16 %v39
  %v1138 = vunpack.c.h.b16 %v39
  %v1139 = vunpack.c.l.b16 %v40
  %v1140 = vunpack.c.h.b16 %v40
  %v1141 = vunpack.c.l.b16 %v41
  %v1142 = vunpack.c.h.b16 %v41
  %v1143 = vunpack.c.l.b16 %v42
  %v1144 = vunpack.c.h.b16 %v42
  %v1145 = vunpack.c.l.b16 %v43
  %v1146 = vunpack.c.h.b16 %v43
  %v1147 = vunpack.c.l.b16 %v44
  %v1148 = vunpack.c.h.b16 %v44
  %v1149 = vunpack.c.l.b16 %v45
  %v1150 = vunpack.c.h.b16 %v45
  %v1151 = vunpack.c.l.b16 %v46
  %v1152 = vunpack.c.h.b16 %v46
  %v1153 = vunpack.c.l.b16 %v47
  %v1154 = vunpack.c.h.b16 %v47
  %v1155 = vunpack.c.l.b16 %v48
  %v1156 = vunpack.c.h.b16 %v48
  %v1157 = vunpack.c.l.b16 %v49
  %v1158 = vunpack.c.h.b16 %v49
  %v1159 = vunpack.c.l.b16 %v50
  %v1160 = vunpack.c.h.b16 %v50
  %v1161 = vunpack.c.l.b16 %v51
  %v1162 = vunpack.c.h.b16 %v51
  %v1163 = vunpack.c.l.b16 %v52
  %v1164 = vunpack.c.h.b16 %v52
  %v1165 = vunpack.c.l.b16 %v53
  %v1166 = vunpack.c.h.b16 %v53
  %v1167 = vunpack.c.l.b16 %v54
  %v1168 = vunpack.c.h.b16 %v54
  %v1169 = vunpack.c.l.b16 %v55
  %v1170 = vunpack.c.h.b16 %v55
  %v1171 = vunpack.c.l.b16 %v56
  %v1172 = vunpack.c.h.b16 %v56
  %v1173 = vunpack.c.l.b16 %v57
  %v1174 = vunpack.c.h.b16 %v57
  %v1175 = vunpack.c.l.b16 %v58
  %v1176 = vunpack.c.h.b16 %v58
  %v1177 = vunpack.c.l.b16 %v59
  %v1178 = vunpack.c.h.b16 %v59
  %v1179 = vunpack.c.l.b16 %v60
  %v1180 = vunpack.c.h.b16 %v60
  %v1181 = vunpack.c.l.b16 %v61
  %v1182 = vunpack.c.h.b16 %v61
  %v1183 = vunpack.c.l.b16 %v62
  %v1184 = vunpack.c.h.b16 %v62
  %v1185 = vunpack.c.l.b16 %v63
  %v1186 = vunpack.c.h.b16 %v63
  %v1187 = vunpack.c.l.b16 %v64
  %v1188 = vunpack.c.h.b16 %v64
  %v1189 = vunpack.c.l.b16 %v65
  %v1190 = vunpack.c.h.b16 %v65
  %v1191 = vunpack.c.l.b16 %v66
  %v1192 = vunpack.c.h.b16 %v66
  %v1193 = vunpack.c.l.b16 %v67
  %v1194 = vunpack.c.h.b16 %v67
  %v1195 = vunpack.c.l.b16 %v68
  %v1196 = vunpack.c.h.b16 %v68
  %v1197 = vunpack.c.l.b16 %v69
  %v1198 = vunpack.c.h.b16 %v69
  %v1199 = vunpack.c.l.b16 %v70
  %v1200 = vunpack.c.h.b16 %v70
  %v1201 = vunpack.c.l.b16 %v71
  %v1202 = vunpack.c.h.b16 %v71
  %v1203 = vunpack.c.l.b16 %v72
  %v1204 = vunpack.c.h.b16 %v72
  %v1205 = vunpack.c.l.b16 %v73
  %v1206 = vunpack.c.h.b16 %v73
  %v1207 = vunpack.c.l.b16 %v74
  %v1208 = vunpack.c.h.b16 %v74
  %v1209 = vunpack.c.l.b16 %v75
  %v1210 = vunpack.c.h.b16 %v75
  %v1211 = vunpack.c.l.b16 %v76
  %v1212 = vunpack.c.h.b16 %v76
  %v1213 = vunpack.c.l.b16 %v77
  %v1214 = vunpack.c.h.b16 %v77
  %v1215 = vunpack.c.l.b16 %v78
  %v1216 = vunpack.c.h.b16 %v78
  %v1217 = vunpack.c.l.b16 %v79
  %v1218 = vunpack.c.h.b16 %v79
  %v1219 = vunpack.c.l.b16 %v80
  %v1220 = vunpack.c.h.b16 %v80
  %v1221 = vunpack.c.l.b16 %v81
  %v1222 = vunpack.c.h.b16 %v81
  %v1223 = vunpack.c.l.b16 %v82
  %v1224 = vunpack.c.h.b16 %v82
  %v1225 = vunpack.c.l.b16 %v83
  %v1226 = vunpack.c.h.b16 %v83
  %v1227 = vunpack.c.l.b16 %v84
  %v1228 = vunpack.c.h.b16 %v84
  %v1229 = vunpack.c.l.b16 %v85
  %v1230 = vunpack.c.h.b16 %v85
  %v1231 = vunpack.c.l.b16 %v86
  %v1232 = vunpack.c.h.b16 %v86
  %v1233 = vunpack.c.l.b16 %v87
  %v1234 = vunpack.c.h.b16 %v87
  %v1235 = vunpack.c.l.b16 %v88
  %v1236 = vunpack.c.h.b16 %v88
  %v1237 = vunpack.c.l.b16 %v89
  %v1238 = vunpack.c.h.b16 %v89
  %v1239 = vunpack.c.l.b16 %v90
  %v1240 = vunpack.c.h.b16 %v90
  %v1241 = vunpack.c.l.b16 %v91
  %v1242 = vunpack.c.h.b16 %v91
  %v1243 = vunpack.c.l.b16 %v92
  %v1244 = vunpack.c.h.b16 %v92
  %v1245 = vunpack.c.l.b16 %v93
  %v1246 = vunpack.c.h.b16 %v93
  %v1247 = vunpack.c.l.b16 %v94
  %v1248 = vunpack.c.h.b16 %v94
  %v1249 = vunpack.c.l.b16 %v95
  %v1250 = vunpack.c.h.b16 %v95
  %v1251 = vunpack.c.l.b16 %v96
  %v1252 = vunpack.c.h.b16 %v96
  %v1253 = vunpack.c.l.b16 %v97
  %v1254 = vunpack.c.h.b16 %v97
  %v1255 = vunpack.c.l.b16 %v98
  %v1256 = vunpack.c.h.b16 %v98
  %v1257 = vunpack.c.l.b16 %v99
  %v1258 = vunpack.c.h.b16 %v99
  %v1259 = vunpack.c.l.b16 %v100
  %v1260 = vunpack.c.h.b16 %v100
  %v1261 = vunpack.c.l.b16 %v101
  %v1262 = vunpack.c.h.b16 %v101
  %v1263 = vunpack.c.l.b16 %v102
  %v1264 = vunpack.c.h.b16 %v102
  %v1265 = vunpack.c.l.b16 %v103
  %v1266 = vunpack.c.h.b16 %v103
  %v1267 = vunpack.c.l.b16 %v104
  %v1268 = vunpack.c.h.b16 %v104
  %v1269 = vunpack.c.l.b16 %v105
  %v1270 = vunpack.c.h.b16 %v105
  %v1271 = vunpack.c.l.b16 %v106
  %v1272 = vunpack.c.h.b16 %v106
  %v1273 = vunpack.c.l.b16 %v107
  %v1274 = vunpack.c.h.b16 %v107
  %v1275 = vunpack.c.l.b16 %v108
  %v1276 = vunpack.c.h.b16 %v108
  %v1277 = vunpack.c.l.b16 %v109
  %v1278 = vunpack.c.h.b16 %v109
  %v1279 = vunpack.c.l.b16 %v110
  %v1280 = vunpack.c.h.b16 %v110
  %v1281 = vunpack.c.l.b16 %v111
  %v1282 = vunpack.c.h.b16 %v111
  %v1283 = vunpack.c.l.b16 %v112
  %v1284 = vunpack.c.h.b16 %v112
  %v1285 = vunpack.c.l.b16 %v113
  %v1286 = vunpack.c.h.b16 %v113
  %v1287 = vunpack.c.l.b16 %v114
  %v1288 = vunpack.c.h.b16 %v114
  %v1289 = vunpack.c.l.b16 %v115
  %v1290 = vunpack.c.h.b16 %v115
  %v1291 = vunpack.c.l.b16 %v116
  %v1292 = vunpack.c.h.b16 %v116
  %v1293 = vunpack.c.l.b16 %v117
  %v1294 = vunpack.c.h.b16 %v117
  %v1295 = vunpack.c.l.b16 %v118
  %v1296 = vunpack.c.h.b16 %v118
  %v1297 = vunpack.c.l.b16 %v119
  %v1298 = vunpack.c.h.b16 %v119
  %v1299 = vunpack.c.l.b16 %v120
  %v1300 = vunpack.c.h.b16 %v120
  %v1301 = vunpack.c.l.b16 %v121
  %v1302 = vunpack.c.h.b16 %v121
  %v1303 = vunpack.c.l.b16 %v122
  %v1304 = vunpack.c.h.b16 %v122
  %v1305 = vunpack.c.l.b16 %v123
  %v1306 = vunpack.c.h.b16 %v123
  %v1307 = vunpack.c.l.b16 %v124
  %v1308 = vunpack.c.h.b16 %v124
  %v1309 = vunpack.c.l.b16 %v125
  %v1310 = vunpack.c.h.b16 %v125
  %v1311 = vunpack.c.l.b16 %v126
  %v1312 = vunpack.c.h.b16 %v126
  %v1313 = vunpack.c.l.b16 %v127
  %v1314 = vunpack.c.h.b16 %v127
  %v1315 = vunpack.c.l.b16 %v128
  %v1316 = vunpack.c.h.b16 %v128
  %v1317 = vunpack.c.l.b16 %v129
  %v1318 = vunpack.c.h.b16 %v129
  %v1319 = vunpack.c.l.b16 %v130
  %v1320 = vunpack.c.h.b16 %v130
  %v1321 = vunpack.c.l.b16 %v131
  %v1322 = vunpack.c.h.b16 %v131
  %v1323 = vunpack.c.l.b16 %v132
  %v1324 = vunpack.c.h.b16 %v132
  %v1325 = vunpack.c.l.b16 %v133
  %v1326 = vunpack.c.h.b16 %v133
  %v1327 = vunpack.c.l.b16 %v134
  %v1328 = vunpack.c.h.b16 %v134
  %v1329 = vunpack.c.l.b16 %v135
  %v1330 = vunpack.c.h.b16 %v135
  %v1331 = vunpack.c.l.b16 %v136
  %v1332 = vunpack.c.h.b16 %v136
  %v1333 = vunpack.c.l.b16 %v137
  %v1334 = vunpack.c.h.b16 %v137
  %v1335 = vunpack.c.l.b16 %v138
  %v1336 = vunpack.c.h.b16 %v138
  %v1337 = vunpack.c.l.b16 %v139
  %v1338 = vunpack.c.h.b16 %v139
  %v1339 = vunpack.c.l.b16 %v140
  %v1340 = vunpack.c.h.b16 %v140
  %v1341 = vunpack.c.l.b16 %v141
  %v1342 = vunpack.c.h.b16 %v141
  %v1343 = vunpack.c.l.b16 %v142
  %v1344 = vunpack.c.h.b16 %v142
  %v1345 = vunpack.c.l.b16 %v143
  %v1346 = vunpack.c.h.b16 %v143
  %v1347 = vunpack.c.l.b16 %v144
  %v1348 = vunpack.c.h.b16 %v144
  %v1349 = vunpack.c.l.b16 %v145
  %v1350 = vunpack.c.h.b16 %v145
  %v1351 = vunpack.c.l.b16 %v146
  %v1352 = vunpack.c.h.b16 %v146
  %v1353 = vunpack.c.l.b16 %v147
  %v1354 = vunpack.c.h.b16 %v147
  %v1355 = vunpack.c.l.b16 %v148
  %v1356 = vunpack.c.h.b16 %v148
  %v1357 = vunpack.c.l.b16 %v149
  %v1358 = vunpack.c.h.b16 %v149
  %v1359 = vunpack.c.l.b16 %v150
  %v1360 = vunpack.c.h.b16 %v150
  %v1361 = vunpack.c.l.b16 %v151
  %v1362 = vunpack.c.h.b16 %v151
  %v1363 = vunpack.c.l.b16 %v152
  %v1364 = vunpack.c.h.b16 %v152
  %v1365 = vunpack.c.l.b16 %v153
  %v1366 = vunpack.c.h.b16 %v153
  %v1367 = vunpack.c.l.b16 %v154
  %v1368 = vunpack.c.h.b16 %v154
  %v1369 = vunpack.c.l.b16 %v155
  %v1370 = vunpack.c.h.b16 %v155
  %v1371 = vunpack.c.l.b16 %v156
  %v1372 = vunpack.c.h.b16 %v156
  %v1373 = vunpack.c.l.b16 %v157
  %v1374 = vunpack.c.h.b16 %v157
  %v1375 = vunpack.c.l.b16 %v158
  %v1376 = vunpack.c.h.b16 %v158
  %v1377 = vunpack.c.l.b16 %v159
  %v1378 = vunpack.c.h.b16 %v159
  %v1379 = vunpack.c.l.b16 %v160
  %v1380 = vunpack.c.h.b16 %v160
  %v1381 = vunpack.c.l.b16 %v161
  %v1382 = vunpack.c.h.b16 %v161
  %v1383 = vunpack.c.l.b16 %v162
  %v1384 = vunpack.c.h.b16 %v162
  %v1385 = vunpack.c.l.b16 %v163
  %v1386 = vunpack.c.h.b16 %v163
  %v1387 = vunpack.c.l.b16 %v164
  %v1388 = vunpack.c.h.b16 %v164
  %v1389 = vunpack.c.l.b16 %v165
  %v1390 = vunpack.c.h.b16 %v165
  %v1391 = vunpack.c.l.b16 %v166
  %v1392 = vunpack.c.h.b16 %v166
  %v1393 = vunpack.c.l.b16 %v167
  %v1394 = vunpack.c.h.b16 %v167
  %v1395 = vunpack.c.l.b16 %v168
  %v1396 = vunpack.c.h.b16 %v168
  %v1397 = vunpack.c.l.b16 %v169
  %v1398 = vunpack.c.h.b16 %v169
  %v1399 = vunpack.c.l.b16 %v170
  %v1400 = vunpack.c.h.b16 %v170
  %v1401 = vunpack.c.l.b16 %v171
  %v1402 = vunpack.c.h.b16 %v171
  %v1403 = vunpack.c.l.b16 %v172
  %v1404 = vunpack.c.h.b16 %v172
  %v1405 = vunpack.c.l.b16 %v173
  %v1406 = vunpack.c.h.b16 %v173
  %v1407 = vunpack.c.l.b16 %v174
  %v1408 = vunpack.c.h.b16 %v174
  %v1409 = vunpack.c.l.b16 %v175
  %v1410 = vunpack.c.h.b16 %v175
  %v1411 = vunpack.c.l.b16 %v176
  %v1412 = vunpack.c.h.b16 %v176
  %v1413 = vunpack.c.l.b16 %v177
  %v1414 = vunpack.c.h.b16 %v177
  %v1415 = vunpack.c.l.b16 %v178
  %v1416 = vunpack.c.h.b16 %v178
  %v1417 = vunpack.c.l.b16 %v179
  %v1418 = vunpack.c.h.b16 %v179
  %v1419 = vunpack.c.l.b16 %v180
  %v1420 = vunpack.c.h.b16 %v180
  %v1421 = vunpack.c.l.b16 %v181
  %v1422 = vunpack.c.h.b16 %v181
  %v1423 = vunpack.c.l.b16 %v182
  %v1424 = vunpack.c.h.b16 %v182
  %v1425 = vunpack.c.l.b16 %v183
  %v1426 = vunpack.c.h.b16 %v183
  %v1427 = vunpack.c.l.b16 %v184
  %v1428 = vunpack.c.h.b16 %v184
  %v1429 = vunpack.c.l.b16 %v185
  %v1430 = vunpack.c.h.b16 %v185
  %v1431 = vunpack.c.l.b16 %v186
  %v1432 = vunpack.c.h.b16 %v186
  %v1433 = vunpack.c.l.b16 %v187
  %v1434 = vunpack.c.h.b16 %v187
  %v1435 = vunpack.c.l.b16 %v188
  %v1436 = vunpack.c.h.b16 %v188
  %v1437 = vunpack.c.l.b16 %v189
  %v1438 = vunpack.c.h.b16 %v189
  %v1439 = vunpack.c.l.b16 %v190
  %v1440 = vunpack.c.h.b16 %v190
  %v1441 = vunpack.c.l.b16 %v191
  %v1442 = vunpack.c.h.b16 %v191
  %v1443 = vunpack.c.l.b16 %v192
  %v1444 = vunpack.c.h.b16 %v192
  %v1445 = vunpack.c.l.b16 %v193
  %v1446 = vunpack.c.h.b16 %v193
  %v1447 = vunpack.c.l.b16 %v194
  %v1448 = vunpack.c.h.b16 %v194
  %v1449 = vunpack.c.l.b16 %v195
  %v1450 = vunpack.c.h.b16 %v195
  %v1451 = vunpack.c.l.b16 %v196
  %v1452 = vunpack.c.h.b16 %v196
  %v1453 = vunpack.c.l.b16 %v197
  %v1454 = vunpack.c.h.b16 %v197
  %v1455 = vunpack.c.l.b16 %v198
  %v1456 = vunpack.c.h.b16 %v198
  %v1457 = vunpack.c.l.b16 %v199
  %v1458 = vunpack.c.h.b16 %v199
  %v1459 = vunpack.c.l.b16 %v200
  %v1460 = vunpack.c.h.b16 %v200
  %v1461 = vunpack.c.l.b16 %v201
  %v1462 = vunpack.c.h.b16 %v201
  %v1463 = vunpack.c.l.b16 %v202
  %v1464 = vunpack.c.h.b16 %v202
  %v1465 = vunpack.c.l.b16 %v203
  %v1466 = vunpack.c.h.b16 %v203
  %v1467 = vunpack.c.l.b16 %v204
  %v1468 = vunpack.c.h.b16 %v204
  %v1469 = vunpack.c.l.b16 %v205
  %v1470 = vunpack.c.h.b16 %v205
  %v1471 = vunpack.c.l.b16 %v206
  %v1472 = vunpack.c.h.b16 %v206
  %v1473 = vunpack.c.l.b16 %v207
  %v1474 = vunpack.c.h.b16 %v207
  %v1475 = vunpack.c.l.b16 %v208
  %v1476 = vunpack.c.h.b16 %v208
  %v1477 = vunpack.c.l.b16 %v209
  %v1478 = vunpack.c.h.b16 %v209
  %v1479 = vunpack.c.l.b16 %v210
  %v1480 = vunpack.c.h.b16 %v210
  %v1481 = vunpack.c.l.b16 %v211
  %v1482 = vunpack.c.h.b16 %v211
  %v1483 = vunpack.c.l.b16 %v212
  %v1484 = vunpack.c.h.b16 %v212
  %v1485 = vunpack.c.l.b16 %v213
  %v1486 = vunpack.c.h.b16 %v213
  %v1487 = vunpack.c.l.b16 %v214
  %v1488 = vunpack.c.h.b16 %v214
  %v1489 = vunpack.c.l.b16 %v215
  %v1490 = vunpack.c.h.b16 %v215
  %v1491 = vunpack.c.l.b16 %v216
  %v1492 = vunpack.c.h.b16 %v216
  %v1493 = vunpack.c.l.b16 %v217
  %v1494 = vunpack.c.h.b16 %v217
  %v1495 = vunpack.c.l.b16 %v218
  %v1496 = vunpack.c.h.b16 %v218
  %v1497 = vunpack.c.l.b16 %v219
  %v1498 = vunpack.c.h.b16 %v219
  %v1499 = vunpack.c.l.b16 %v220
  %v1500 = vunpack.c.h.b16 %v220
  %v1501 = vunpack.c.l.b16 %v221
  %v1502 = vunpack.c.h.b16 %v221
  %v1503 = vunpack.c.l.b16 %v222
  %v1504 = vunpack.c.h.b16 %v222
  %v1505 = vunpack.c.l.b16 %v223
  %v1506 = vunpack.c.h.b16 %v223
  %v1507 = vunpack.c.l.b16 %v224
  %v1508 = vunpack.c.h.b16 %v224
  %v1509 = vunpack.c.l.b16 %v225
  %v1510 = vunpack.c.h.b16 %v225
  %v1511 = vunpack.c.l.b16 %v226
  %v1512 = vunpack.c.h.b16 %v226
  %v1513 = vunpack.c.l.b16 %v227
  %v1514 = vunpack.c.h.b16 %v227
  %v1515 = vunpack.c.l.b16 %v228
  %v1516 = vunpack.c.h.b16 %v228
  %v1517 = vunpack.c.l.b16 %v229
  %v1518 = vunpack.c.h.b16 %v229
  %v1519 = vunpack.c.l.b16 %v230
  %v1520 = vunpack.c.h.b16 %v230
  %v1521 = vunpack.c.l.b16 %v231
  %v1522 = vunpack.c.h.b16 %v231
  %v1523 = vunpack.c.l.b16 %v232
  %v1524 = vunpack.c.h.b16 %v232
  %v1525 = vunpack.c.l.b16 %v233
  %v1526 = vunpack.c.h.b16 %v233
  %v1527 = vunpack.c.l.b16 %v234
  %v1528 = vunpack.c.h.b16 %v234
  %v1529 = vunpack.c.l.b16 %v235
  %v1530 = vunpack.c.h.b16 %v235
  %v1531 = vunpack.c.l.b16 %v236
  %v1532 = vunpack.c.h.b16 %v236
  %v1533 = vunpack.c.l.b16 %v237
  %v1534 = vunpack.c.h.b16 %v237
  %v1535 = vunpack.c.l.b16 %v238
  %v1536 = vunpack.c.h.b16 %v238
  %v1537 = vunpack.c.l.b16 %v239
  %v1538 = vunpack.c.h.b16 %v239
  %v1539 = vunpack.c.l.b16 %v240
  %v1540 = vunpack.c.h.b16 %v240
  %v1541 = vunpack.c.l.b16 %v241
  %v1542 = vunpack.c.h.b16 %v241
  %v1543 = vunpack.c.l.b16 %v242
  %v1544 = vunpack.c.h.b16 %v242
  %v1545 = vunpack.c.l.b16 %v243
  %v1546 = vunpack.c.h.b16 %v243
  %v1547 = vunpack.c.l.b16 %v244
  %v1548 = vunpack.c.h.b16 %v244
  %v1549 = vunpack.c.l.b16 %v245
  %v1550 = vunpack.c.h.b16 %v245
  %v1551 = vunpack.c.l.b16 %v246
  %v1552 = vunpack.c.h.b16 %v246
  %v1553 = vunpack.c.l.b16 %v247
  %v1554 = vunpack.c.h.b16 %v247
  %v1555 = vunpack.c.l.b16 %v248
  %v1556 = vunpack.c.h.b16 %v248
  %v1557 = vunpack.c.l.b16 %v249
  %v1558 = vunpack.c.h.b16 %v249
  %v1559 = vunpack.c.l.b16 %v250
  %v1560 = vunpack.c.h.b16 %v250
  %v1561 = vunpack.c.l.b16 %v251
  %v1562 = vunpack.c.h.b16 %v251
  %v1563 = vunpack.c.l.b16 %v252
  %v1564 = vunpack.c.h.b16 %v252
  %v1565 = vunpack.c.l.b16 %v253
  %v1566 = vunpack.c.h.b16 %v253
  %v1567 = vunpack.c.l.b16 %v254
  %v1568 = vunpack.c.h.b16 %v254
  %v1569 = vunpack.c.l.b16 %v255
  %v1570 = vunpack.c.h.b16 %v255
  %v1571 = vunpack.c.l.b16 %v256
  %v1572 = vunpack.c.h.b16 %v256
  %v1573 = vunpack.c.l.b16 %v257
  %v1574 = vunpack.c.h.b16 %v257
  %v1575 = vunpack.c.l.b16 %v258
  %v1576 = vunpack.c.h.b16 %v258
  %v1577 = vunpack.c.l.b16 %v259
  %v1578 = vunpack.c.h.b16 %v259
  %v1579 = vunpack.c.l.b16 %v260
  %v1580 = vunpack.c.h.b16 %v260
  %v1581 = vunpack.c.l.b16 %v261
  %v1582 = vunpack.c.h.b16 %v261
  %v1583 = vunpack.c.l.b16 %v262
  %v1584 = vunpack.c.h.b16 %v262
  %v1585 = vunpack.c.l.b16 %v263
  %v1586 = vunpack.c.h.b16 %v263
  %v1587 = vunpack.c.l.b16 %v264
  %v1588 = vunpack.c.h.b16 %v264
  %v1589 = vunpack.c.l.b16 %v265
  %v1590 = vunpack.c.h.b16 %v265
  %v1591 = vunpack.c.l.b16 %v266
  %v1592 = vunpack.c.h.b16 %v266
  %v1593 = vunpack.c.l.b16 %v267
  %v1594 = vunpack.c.h.b16 %v267
  %v1595 = vunpack.c.l.b16 %v268
  %v1596 = vunpack.c.h.b16 %v268
  %v1597 = vunpack.c.l.b16 %v269
  %v1598 = vunpack.c.h.b16 %v269
  %v1599 = vunpack.c.l.b16 %v270
  %v1600 = vunpack.c.h.b16 %v270
  %v1601 = vunpack.c.l.b16 %v271
  %v1602 = vunpack.c.h.b16 %v271
  %v1603 = vunpack.c.l.b16 %v272
  %v1604 = vunpack.c.h.b16 %v272
  %v1605 = vunpack.c.l.b16 %v273
  %v1606 = vunpack.c.h.b16 %v273
  %v1607 = vunpack.c.l.b16 %v274
  %v1608 = vunpack.c.h.b16 %v274
  %v1609 = vunpack.c.l.b16 %v275
  %v1610 = vunpack.c.h.b16 %v275
  %v1611 = vunpack.c.l.b16 %v276
  %v1612 = vunpack.c.h.b16 %v276
  %v1613 = vunpack.c.l.b16 %v277
  %v1614 = vunpack.c.h.b16 %v277
  %v1615 = vunpack.c.l.b16 %v278
  %v1616 = vunpack.c.h.b16 %v278
  %v1617 = vunpack.c.l.b16 %v279
  %v1618 = vunpack.c.h.b16 %v279
  %v1619 = vunpack.c.l.b16 %v280
  %v1620 = vunpack.c.h.b16 %v280
  %v1621 = vunpack.c.l.b16 %v281
  %v1622 = vunpack.c.h.b16 %v281
  %v1623 = vunpack.c.l.b16 %v282
  %v1624 = vunpack.c.h.b16 %v282
  %v1625 = vunpack.c.l.b16 %v283
  %v1626 = vunpack.c.h.b16 %v283
  %v1627 = vunpack.c.l.b16 %v284
  %v1628 = vunpack.c.h.b16 %v284
  %v1629 = vunpack.c.l.b16 %v285
  %v1630 = vunpack.c.h.b16 %v285
  %v1631 = vunpack.c.l.b16 %v286
  %v1632 = vunpack.c.h.b16 %v286
  %v1633 = vunpack.c.l.b16 %v287
  %v1634 = vunpack.c.h.b16 %v287
  %v1635 = vunpack.c.l.b16 %v288
  %v1636 = vunpack.c.h.b16 %v288
  %v1637 = vunpack.c.l.b16 %v289
  %v1638 = vunpack.c.h.b16 %v289
  %v1639 = vunpack.c.l.b16 %v290
  %v1640 = vunpack.c.h.b16 %v290
  %v1641 = vunpack.c.l.b16 %v291
  %v1642 = vunpack.c.h.b16 %v291
  %v1643 = vunpack.c.l.b16 %v292
  %v1644 = vunpack.c.h.b16 %v292
  %v1645 = vunpack.c.l.b16 %v293
  %v1646 = vunpack.c.h.b16 %v293
  %v1647 = vunpack.c.l.b16 %v294
  %v1648 = vunpack.c.h.b16 %v294
  %v1649 = vunpack.c.l.b16 %v295
  %v1650 = vunpack.c.h.b16 %v295
  %v1651 = vunpack.c.l.b16 %v296
  %v1652 = vunpack.c.h.b16 %v296
  %v1653 = vunpack.c.l.b16 %v297
  %v1654 = vunpack.c.h.b16 %v297
  %v1655 = vunpack.c.l.b16 %v298
  %v1656 = vunpack.c.h.b16 %v298
  %v1657 = vunpack.c.l.b16 %v299
  %v1658 = vunpack.c.h.b16 %v299
  %v1659 = vunpack.c.l.b16 %v300
  %v1660 = vunpack.c.h.b16 %v300
  %v1661 = vunpack.c.l.b16 %v301
  %v1662 = vunpack.c.h.b16 %v301
  %v1663 = vunpack.c.l.b16 %v302
  %v1664 = vunpack.c.h.b16 %v302
  %v1665 = vunpack.c.l.b16 %v303
  %v1666 = vunpack.c.h.b16 %v303
  %v1667 = vunpack.c.l.b16 %v304
  %v1668 = vunpack.c.h.b16 %v304
  %v1669 = vunpack.c.l.b16 %v305
  %v1670 = vunpack.c.h.b16 %v305
  %v1671 = vunpack.c.l.b16 %v306
  %v1672 = vunpack.c.h.b16 %v306
  %v1673 = vunpack.c.l.b16 %v307
  %v1674 = vunpack.c.h.b16 %v307
  %v1675 = vunpack.c.l.b16 %v308
  %v1676 = vunpack.c.h.b16 %v308
  %v1677 = vunpack.c.l.b16 %v309
  %v1678 = vunpack.c.h.b16 %v309
  %v1679 = vunpack.c.l.b16 %v310
  %v1680 = vunpack.c.h.b16 %v310
  %v1681 = vunpack.c.l.b16 %v311
  %v1682 = vunpack.c.h.b16 %v311
  %v1683 = vunpack.c.l.b16 %v312
  %v1684 = vunpack.c.h.b16 %v312
  %v1685 = vunpack.c.l.b16 %v313
  %v1686 = vunpack.c.h.b16 %v313
  %v1687 = vunpack.c.l.b16 %v314
  %v1688 = vunpack.c.h.b16 %v314
  %v1689 = vunpack.c.l.b16 %v315
  %v1690 = vunpack.c.h.b16 %v315
  %v1691 = vunpack.c.l.b16 %v316
  %v1692 = vunpack.c.h.b16 %v316
  %v1693 = vunpack.c.l.b16 %v317
  %v1694 = vunpack.c.h.b16 %v317
  %v1695 = vunpack.c.l.b16 %v318
  %v1696 = vunpack.c.h.b16 %v318
  %v1697 = vunpack.c.l.b16 %v319
  %v1698 = vunpack.c.h.b16 %v319
  %v1699 = vunpack.c.l.b16 %v320
  %v1700 = vunpack.c.h.b16 %v320
  %v1701 = vunpack.c.l.b16 %v321
  %v1702 = vunpack.c.h.b16 %v321
  %v1703 = vunpack.c.l.b16 %v322
  %v1704 = vunpack.c.h.b16 %v322
  %v1705 = vunpack.c.l.b16 %v323
  %v1706 = vunpack.c.h.b16 %v323
  %v1707 = vunpack.c.l.b16 %v324
  %v1708 = vunpack.c.h.b16 %v324
  %v1709 = vunpack.c.l.b16 %v325
  %v1710 = vunpack.c.h.b16 %v325
  %v1711 = vunpack.c.l.b16 %v326
  %v1712 = vunpack.c.h.b16 %v326
  %v1713 = vunpack.c.l.b16 %v327
  %v1714 = vunpack.c.h.b16 %v327
  %v1715 = vunpack.c.l.b16 %v328
  %v1716 = vunpack.c.h.b16 %v328
  %v1717 = vunpack.c.l.b16 %v329
  %v1718 = vunpack.c.h.b16 %v329
  %v1719 = vunpack.c.l.b16 %v330
  %v1720 = vunpack.c.h.b16 %v330
  %v1721 = vunpack.c.l.b16 %v331
  %v1722 = vunpack.c.h.b16 %v331
  %v1723 = vunpack.c.l.b16 %v332
  %v1724 = vunpack.c.h.b16 %v332
  %v1725 = vunpack.c.l.b16 %v333
  %v1726 = vunpack.c.h.b16 %v333
  %v1727 = vunpack.c.l.b16 %v334
  %v1728 = vunpack.c.h.b16 %v334
  %v1729 = vunpack.c.l.b16 %v335
  %v1730 = vunpack.c.h.b16 %v335
  %v1731 = vunpack.c.l.b16 %v336
  %v1732 = vunpack.c.h.b16 %v336
  %v1733 = vunpack.c.l.b16 %v337
  %v1734 = vunpack.c.h.b16 %v337
  %v1735 = vunpack.c.l.b16 %v338
  %v1736 = vunpack.c.h.b16 %v338
  %v1737 = vunpack.c.l.b16 %v339
  %v1738 = vunpack.c.h.b16 %v339
  %v1739 = vunpack.c.l.b16 %v340
  %v1740 = vunpack.c.h.b16 %v340
  %v1741 = vunpack.c.l.b16 %v341
  %v1742 = vunpack.c.h.b16 %v341
  %v1743 = vunpack.c.l.b16 %v342
  %v1744 = vunpack.c.h.b16 %v342
  %v1745 = vunpack.c.l.b16 %v343
  %v1746 = vunpack.c.h.b16 %v343
  %v1747 = vunpack.c.l.b16 %v344
  %v1748 = vunpack.c.h.b16 %v344
  %v1749 = vunpack.c.l.b16 %v345
  %v1750 = vunpack.c.h.b16 %v345
  %v1751 = vunpack.c.l.b16 %v346
  %v1752 = vunpack.c.h.b16 %v346
  %v1753 = vunpack.c.l.b16 %v347
  %v1754 = vunpack.c.h.b16 %v347
  %v1755 = vunpack.c.l.b16 %v348
  %v1756 = vunpack.c.h.b16 %v348
  %v1757 = vunpack.c.l.b16 %v349
  %v1758 = vunpack.c.h.b16 %v349
  %v1759 = vunpack.c.l.b16 %v350
  %v1760 = vunpack.c.h.b16 %v350
  %v1761 = vunpack.c.l.b16 %v351
  %v1762 = vunpack.c.h.b16 %v351
  %v1763 = vunpack.c.l.b16 %v352
  %v1764 = vunpack.c.h.b16 %v352
  %v1765 = vunpack.c.l.b16 %v353
  %v1766 = vunpack.c.h.b16 %v353
  %v1767 = vunpack.c.l.b16 %v354
  %v1768 = vunpack.c.h.b16 %v354
  %v1769 = vunpack.c.l.b16 %v355
  %v1770 = vunpack.c.h.b16 %v355
  %v1771 = vunpack.c.l.b16 %v356
  %v1772 = vunpack.c.h.b16 %v356
  %v1773 = vunpack.c.l.b16 %v357
  %v1774 = vunpack.c.h.b16 %v357
  %v1775 = vunpack.c.l.b16 %v358
  %v1776 = vunpack.c.h.b16 %v358
  %v1777 = vunpack.c.l.b16 %v359
  %v1778 = vunpack.c.h.b16 %v359
  %v1779 = vunpack.c.l.b16 %v360
  %v1780 = vunpack.c.h.b16 %v360
  %v1781 = vunpack.c.l.b16 %v361
  %v1782 = vunpack.c.h.b16 %v361
  %v1783 = vunpack.c.l.b16 %v362
  %v1784 = vunpack.c.h.b16 %v362
  %v1785 = vunpack.c.l.b16 %v363
  %v1786 = vunpack.c.h.b16 %v363
  %v1787 = vunpack.c.l.b16 %v364
  %v1788 = vunpack.c.h.b16 %v364
  %v1789 = vunpack.c.l.b16 %v365
  %v1790 = vunpack.c.h.b16 %v365
  %v1791 = vunpack.c.l.b16 %v366
  %v1792 = vunpack.c.h.b16 %v366
  %v1793 = vunpack.c.l.b16 %v367
  %v1794 = vunpack.c.h.b16 %v367
  %v1795 = vunpack.c.l.b16 %v368
  %v1796 = vunpack.c.h.b16 %v368
  %v1797 = vunpack.c.l.b16 %v369
  %v1798 = vunpack.c.h.b16 %v369
  %v1799 = vunpack.c.l.b16 %v370
  %v1800 = vunpack.c.h.b16 %v370
  %v1801 = vunpack.c.l.b16 %v371
  %v1802 = vunpack.c.h.b16 %v371
  %v1803 = vunpack.c.l.b16 %v372
  %v1804 = vunpack.c.h.b16 %v372
  %v1805 = vunpack.c.l.b16 %v373
  %v1806 = vunpack.c.h.b16 %v373
  %v1807 = vunpack.c.l.b16 %v374
  %v1808 = vunpack.c.h.b16 %v374
  %v1809 = vunpack.c.l.b16 %v375
  %v1810 = vunpack.c.h.b16 %v375
  %v1811 = vunpack.c.l.b16 %v376
  %v1812 = vunpack.c.h.b16 %v376
  %v1813 = vunpack.c.l.b16 %v377
  %v1814 = vunpack.c.h.b16 %v377
  %v1815 = vunpack.c.l.b16 %v378
  %v1816 = vunpack.c.h.b16 %v378
  %v1817 = vunpack.c.l.b16 %v379
  %v1818 = vunpack.c.h.b16 %v379
  %v1819 = vunpack.c.l.b16 %v380
  %v1820 = vunpack.c.h.b16 %v380
  %v1821 = vunpack.c.l.b16 %v381
  %v1822 = vunpack.c.h.b16 %v381
  %v1823 = vunpack.c.l.b16 %v382
  %v1824 = vunpack.c.h.b16 %v382
  %v1825 = vunpack.c.l.b16 %v383
  %v1826 = vunpack.c.h.b16 %v383
  %v1827 = vunpack.c.l.b16 %v384
  %v1828 = vunpack.c.h.b16 %v384
  %v1829 = vunpack.c.l.b16 %v385
  %v1830 = vunpack.c.h.b16 %v385
  %v1831 = vunpack.c.l.b16 %v386
  %v1832 = vunpack.c.h.b16 %v386
  %v1833 = vunpack.c.l.b16 %v387
  %v1834 = vunpack.c.h.b16 %v387
  %v1835 = vunpack.c.l.b16 %v388
  %v1836 = vunpack.c.h.b16 %v388
  %v1837 = vunpack.c.l.b16 %v389
  %v1838 = vunpack.c.h.b16 %v389
  %v1839 = vunpack.c.l.b16 %v390
  %v1840 = vunpack.c.h.b16 %v390
  %v1841 = vunpack.c.l.b16 %v391
  %v1842 = vunpack.c.h.b16 %v391
  %v1843 = vunpack.c.l.b16 %v392
  %v1844 = vunpack.c.h.b16 %v392
  %v1845 = vunpack.c.l.b16 %v393
  %v1846 = vunpack.c.h.b16 %v393
  %v1847 = vunpack.c.l.b16 %v394
  %v1848 = vunpack.c.h.b16 %v394
  %v1849 = vunpack.c.l.b16 %v395
  %v1850 = vunpack.c.h.b16 %v395
  %v1851 = vunpack.c.l.b16 %v396
  %v1852 = vunpack.c.h.b16 %v396
  %v1853 = vunpack.c.l.b16 %v397
  %v1854 = vunpack.c.h.b16 %v397
  %v1855 = vunpack.c.l.b16 %v398
  %v1856 = vunpack.c.h.b16 %v398
  %v1857 = vunpack.c.l.b16 %v399
  %v1858 = vunpack.c.h.b16 %v399
  %v1859 = vunpack.c.l.b16 %v400
  %v1860 = vunpack.c.h.b16 %v400
  %v1861 = vunpack.c.l.b16 %v401
  %v1862 = vunpack.c.h.b16 %v401
  %v1863 = vunpack.c.l.b16 %v402
  %v1864 = vunpack.c.h.b16 %v402
  %v1865 = vunpack.c.l.b16 %v403
  %v1866 = vunpack.c.h.b16 %v403
  %v1867 = vunpack.c.l.b16 %v404
  %v1868 = vunpack.c.h.b16 %v404
  %v1869 = vunpack.c.l.b16 %v405
  %v1870 = vunpack.c.h.b16 %v405
  %v1871 = vunpack.c.l.b16 %v406
  %v1872 = vunpack.c.h.b16 %v406
  %v1873 = vunpack.c.l.b16 %v407
  %v1874 = vunpack.c.h.b16 %v407
  %v1875 = vunpack.c.l.b16 %v408
  %v1876 = vunpack.c.h.b16 %v408
  %v1877 = vunpack.c.l.b16 %v409
  %v1878 = vunpack.c.h.b16 %v409
  %v1879 = vunpack.c.l.b16 %v410
  %v1880 = vunpack.c.h.b16 %v410
  %v1881 = vunpack.c.l.b16 %v411
  %v1882 = vunpack.c.h.b16 %v411
  %v1883 = vunpack.c.l.b16 %v412
  %v1884 = vunpack.c.h.b16 %v412
  %v1885 = vunpack.c.l.b16 %v413
  %v1886 = vunpack.c.h.b16 %v413
  %v1887 = vunpack.c.l.b16 %v414
  %v1888 = vunpack.c.h.b16 %v414
  %v1889 = vunpack.c.l.b16 %v415
  %v1890 = vunpack.c.h.b16 %v415
  %v1891 = vunpack.c.l.b16 %v416
  %v1892 = vunpack.c.h.b16 %v416
  %v1893 = vunpack.c.l.b16 %v417
  %v1894 = vunpack.c.h.b16 %v417
  %v1895 = vunpack.c.l.b16 %v418
  %v1896 = vunpack.c.h.b16 %v418
  %v1897 = vunpack.c.l.b16 %v419
  %v1898 = vunpack.c.h.b16 %v419
  %v1899 = vunpack.c.l.b16 %v420
  %v1900 = vunpack.c.h.b16 %v420
  %v1901 = vunpack.c.l.b16 %v421
  %v1902 = vunpack.c.h.b16 %v421
  %v1903 = vunpack.c.l.b16 %v422
  %v1904 = vunpack.c.h.b16 %v422
  %v1905 = vunpack.c.l.b16 %v423
  %v1906 = vunpack.c.h.b16 %v423
  %v1907 = vunpack.c.l.b16 %v424
  %v1908 = vunpack.c.h.b16 %v424
  %v1909 = vunpack.c.l.b16 %v425
  %v1910 = vunpack.c.h.b16 %v425
  %v1911 = vunpack.c.l.b16 %v426
  %v1912 = vunpack.c.h.b16 %v426
  %v1913 = vunpack.c.l.b16 %v427
  %v1914 = vunpack.c.h.b16 %v427
  %v1915 = vunpack.c.l.b16 %v428
  %v1916 = vunpack.c.h.b16 %v428
  %v1917 = vunpack.c.l.b16 %v429
  %v1918 = vunpack.c.h.b16 %v429
  %v1919 = vunpack.c.l.b16 %v430
  %v1920 = vunpack.c.h.b16 %v430
  %v1921 = vunpack.c.l.b16 %v431
  %v1922 = vunpack.c.h.b16 %v431
  %v1923 = vunpack.c.l.b16 %v432
  %v1924 = vunpack.c.h.b16 %v432
  %v1925 = vunpack.c.l.b16 %v433
  %v1926 = vunpack.c.h.b16 %v433
  %v1927 = vunpack.c.l.b16 %v434
  %v1928 = vunpack.c.h.b16 %v434
  %v1929 = vunpack.c.l.b16 %v435
  %v1930 = vunpack.c.h.b16 %v435
  %v1931 = vunpack.c.l.b16 %v436
  %v1932 = vunpack.c.h.b16 %v436
  %v1933 = vunpack.c.l.b16 %v437
  %v1934 = vunpack.c.h.b16 %v437
  %v1935 = vunpack.c.l.b16 %v438
  %v1936 = vunpack.c.h.b16 %v438
  %v1937 = vunpack.c.l.b16 %v439
  %v1938 = vunpack.c.h.b16 %v439
  %v1939 = vunpack.c.l.b16 %v440
  %v1940 = vunpack.c.h.b16 %v440
  %v1941 = vunpack.c.l.b16 %v441
  %v1942 = vunpack.c.h.b16 %v441
  %v1943 = vunpack.c.l.b16 %v442
  %v1944 = vunpack.c.h.b16 %v442
  %v1945 = vunpack.c.l.b16 %v443
  %v1946 = vunpack.c.h.b16 %v443
  %v1947 = vunpack.c.l.b16 %v444
  %v1948 = vunpack.c.h.b16 %v444
  %v1949 = vunpack.c.l.b16 %v445
  %v1950 = vunpack.c.h.b16 %v445
  %v1951 = vunpack.c.l.b16 %v446
  %v1952 = vunpack.c.h.b16 %v446
  %v1953 = vunpack.c.l.b16 %v447
  %v1954 = vunpack.c.h.b16 %v447
  %v1955 = vunpack.c.l.b16 %v448
  %v1956 = vunpack.c.h.b16 %v448
  %v1957 = vunpack.c.l.b16 %v449
  %v1958 = vunpack.c.h.b16 %v449
  %v1959 = vunpack.c.l.b16 %v450
  %v1960 = vunpack.c.h.b16 %v450
  %v1961 = vunpack.c.l.b16 %v451
  %v1962 = vunpack.c.h.b16 %v451
  %v1963 = vunpack.c.l.b16 %v452
  %v1964 = vunpack.c.h.b16 %v452
  %v1965 = vunpack.c.l.b16 %v453
  %v1966 = vunpack.c.h.b16 %v453
  %v1967 = vunpack.c.l.b16 %v454
  %v1968 = vunpack.c.h.b16 %v454
  %v1969 = vunpack.c.l.b16 %v455
  %v1970 = vunpack.c.h.b16 %v455
  %v1971 = vunpack.c.l.b16 %v456
  %v1972 = vunpack.c.h.b16 %v456
  %v1973 = vunpack.c.l.b16 %v457
  %v1974 = vunpack.c.h.b16 %v457
  %v1975 = vunpack.c.l.b16 %v458
  %v1976 = vunpack.c.h.b16 %v458
  %v1977 = vunpack.c.l.b16 %v459
  %v1978 = vunpack.c.h.b16 %v459
  %v1979 = vunpack.c.l.b16 %v460
  %v1980 = vunpack.c.h.b16 %v460
  %v1981 = vunpack.c.l.b16 %v461
  %v1982 = vunpack.c.h.b16 %v461
  %v1983 = vunpack.c.l.b16 %v462
  %v1984 = vunpack.c.h.b16 %v462
  %v1985 = vunpack.c.l.b16 %v463
  %v1986 = vunpack.c.h.b16 %v463
  %v1987 = vunpack.c.l.b16 %v464
  %v1988 = vunpack.c.h.b16 %v464
  %v1989 = vunpack.c.l.b16 %v465
  %v1990 = vunpack.c.h.b16 %v465
  %v1991 = vunpack.c.l.b16 %v466
  %v1992 = vunpack.c.h.b16 %v466
  %v1993 = vunpack.c.l.b16 %v467
  %v1994 = vunpack.c.h.b16 %v467
  %v1995 = vunpack.c.l.b16 %v468
  %v1996 = vunpack.c.h.b16 %v468
  %v1997 = vunpack.c.l.b16 %v469
  %v1998 = vunpack.c.h.b16 %v469
  %v1999 = vunpack.c.l.b16 %v470
  %v2000 = vunpack.c.h.b16 %v470
  %v2001 = vunpack.c.l.b16 %v471
  %v2002 = vunpack.c.h.b16 %v471
  %v2003 = vunpack.c.l.b16 %v472
  %v2004 = vunpack.c.h.b16 %v472
  %v2005 = vunpack.c.l.b16 %v473
  %v2006 = vunpack.c.h.b16 %v473
  %v2007 = vunpack.c.l.b16 %v474
  %v2008 = vunpack.c.h.b16 %v474
  %v2009 = vunpack.c.l.b16 %v475
  %v2010 = vunpack.c.h.b16 %v475
  %v2011 = vunpack.c.l.b16 %v476
  %v2012 = vunpack.c.h.b16 %v476
  %v2013 = vunpack.c.l.b16 %v477
  %v2014 = vunpack.c.h.b16 %v477
  %v2015 = vunpack.c.l.b16 %v478
  %v2016 = vunpack.c.h.b16 %v478
  %v2017 = vunpack.c.l.b16 %v479
  %v2018 = vunpack.c.h.b16 %v479
  %v2019 = vunpack.c.l.b16 %v480
  %v2020 = vunpack.c.h.b16 %v480
  %v2021 = vunpack.c.l.b16 %v481
  %v2022 = vunpack.c.h.b16 %v481
  %v2023 = vunpack.c.l.b16 %v482
  %v2024 = vunpack.c.h.b16 %v482
  %v2025 = vunpack.c.l.b16 %v483
  %v2026 = vunpack.c.h.b16 %v483
  %v2027 = vunpack.c.l.b16 %v484
  %v2028 = vunpack.c.h.b16 %v484
  %v2029 = vunpack.c.l.b16 %v485
  %v2030 = vunpack.c.h.b16 %v485
  %v2031 = vunpack.c.l.b16 %v486
  %v2032 = vunpack.c.h.b16 %v486
  %v2033 = vunpack.c.l.b16 %v487
  %v2034 = vunpack.c.h.b16 %v487
  %v2035 = vunpack.c.l.b16 %v488
  %v2036 = vunpack.c.h.b16 %v488
  %v2037 = vunpack.c.l.b16 %v489
  %v2038 = vunpack.c.h.b16 %v489
  %v2039 = vunpack.c.l.b16 %v490
  %v2040 = vunpack.c.h.b16 %v490
  %v2041 = vunpack.c.l.b16 %v491
  %v2042 = vunpack.c.h.b16 %v491
  %v2043 = vunpack.c.l.b16 %v492
  %v2044 = vunpack.c.h.b16 %v492
  %v2045 = vunpack.c.l.b16 %v493
  %v2046 = vunpack.c.h.b16 %v493
  %v2047 = vunpack.c.l.b16 %v494
  %v2048 = vunpack.c.h.b16 %v494
  %v2049 = vunpack.c.l.b16 %v495
  %v2050 = vunpack.c.h.b16 %v495
  %v2051 = vunpack.c.l.b16 %v496
  %v2052 = vunpack.c.h.b16 %v496
  %v2053 = vunpack.c.l.b16 %v497
  %v2054 = vunpack.c.h.b16 %v497
  %v2055 = vunpack.c.l.b16 %v498
  %v2056 = vunpack.c.h.b16 %v498
  %v2057 = vunpack.c.l.b16 %v499
  %v2058 = vunpack.c.h.b16 %v499
  %v2059 = vunpack.c.l.b16 %v500
  %v2060 = vunpack.c.h.b16 %v500
  %v2061 = vunpack.c.l.b16 %v501
  %v2062 = vunpack.c.h.b16 %v501
  %v2063 = vunpack.c.l.b16 %v502
  %v2064 = vunpack.c.h.b16 %v502
  %v2065 = vunpack.c.l.b16 %v503
  %v2066 = vunpack.c.h.b16 %v503
  %v2067 = vunpack.c.l.b16 %v504
  %v2068 = vunpack.c.h.b16 %v504
  %v2069 = vunpack.c.l.b16 %v505
  %v2070 = vunpack.c.h.b16 %v505
  %v2071 = vunpack.c.l.b16 %v506
  %v2072 = vunpack.c.h.b16 %v506
  %v2073 = vunpack.c.l.b16 %v507
  %v2074 = vunpack.c.h.b16 %v507
  %v2075 = vunpack.c.l.b16 %v508
  %v2076 = vunpack.c.h.b16 %v508
  %v2077 = vunpack.c.l.b16 %v509
  %v2078 = vunpack.c.h.b16 %v509
  %v2079 = vunpack.c.l.b16 %v510
  %v2080 = vunpack.c.h.b16 %v510
  %v2081 = vunpack.c.l.b16 %v511
  %v2082 = vunpack.c.h.b16 %v511
  %v2083 = vunpack.c.l.b16 %v512
  %v2084 = vunpack.c.h.b16 %v512
  %v2085 = vunpack.c.l.b16 %v513
  %v2086 = vunpack.c.h.b16 %v513
  %v2087 = vunpack.c.l.b16 %v514
  %v2088 = vunpack.c.h.b16 %v514
  %v2089 = vunpack.c.l.b16 %v515
  %v2090 = vunpack.c.h.b16 %v515
  %v2091 = vunpack.c.l.b16 %v516
  %v2092 = vunpack.c.h.b16 %v516
  %v2093 = vunpack.c.l.b16 %v517
  %v2094 = vunpack.c.h.b16 %v517
  %v2095 = vunpack.c.l.b16 %v518
  %v2096 = vunpack.c.h.b16 %v518
  %v2097 = vunpack.c.l.b16 %v519
  %v2098 = vunpack.c.h.b16 %v519
  %v2099 = vunpack.c.l.b16 %v520
  %v2100 = vunpack.c.h.b16 %v520
  %v2101 = vunpack.c.l.b16 %v521
  %v2102 = vunpack.c.h.b16 %v521
  %v2103 = vunpack.c.l.b16 %v522
  %v2104 = vunpack.c.h.b16 %v522
  %v2105 = vunpack.c.l.b16 %v523
  %v2106 = vunpack.c.h.b16 %v523
  %v2107 = vunpack.c.l.b16 %v524
  %v2108 = vunpack.c.h.b16 %v524
  %v2109 = vunpack.c.l.b16 %v525
  %v2110 = vunpack.c.h.b16 %v525
  %v2111 = vunpack.c.l.b16 %v526
  %v2112 = vunpack.c.h.b16 %v526
  %v2113 = vunpack.c.l.b16 %v527
  %v2114 = vunpack.c.h.b16 %v527
  %v2115 = vunpack.c.l.b16 %v528
  %v2116 = vunpack.c.h.b16 %v528
  %v2117 = vunpack.c.l.b16 %v529
  %v2118 = vunpack.c.h.b16 %v529
  %v2119 = vunpack.c.l.b16 %v530
  %v2120 = vunpack.c.h.b16 %v530
  %v2121 = vunpack.c.l.b16 %v531
  %v2122 = vunpack.c.h.b16 %v531
  %v2123 = vunpack.c.l.b16 %v532
  %v2124 = vunpack.c.h.b16 %v532
  %v2125 = vunpack.c.l.b16 %v533
  %v2126 = vunpack.c.h.b16 %v533
  %v2127 = vunpack.c.l.b16 %v534
  %v2128 = vunpack.c.h.b16 %v534
  %v2129 = vpack.c.b16 %v1113, %v1105
  %v2130 = vpack.c.b16 %v1114, %v1106
  %v2131 = vpack.c.b16 %v1115, %v1107
  %v2132 = vpack.c.b16 %v1116, %v1108
  %v2133 = vpack.c.b16 %v1117, %v1109
  %v2134 = vpack.c.b16 %v1118, %v1110
  %v2135 = vpack.c.b16 %v1119, %v1111
  %v2136 = vpack.c.b16 %v1120, %v1112
  %v2137 = vpack.c.b16 %v1129, %v1121
  %v2138 = vpack.c.b16 %v1130, %v1122
  %v2139 = vpack.c.b16 %v1131, %v1123
  %v2140 = vpack.c.b16 %v1132, %v1124
  %v2141 = vpack.c.b16 %v1133, %v1125
  %v2142 = vpack.c.b16 %v1134, %v1126
  %v2143 = vpack.c.b16 %v1135, %v1127
  %v2144 = vpack.c.b16 %v1136, %v1128
  %v2145 = vpack.c.b16 %v1145, %v1137
  %v2146 = vpack.c.b16 %v1146, %v1138
  %v2147 = vpack.c.b16 %v1147, %v1139
  %v2148 = vpack.c.b16 %v1148, %v1140
  %v2149 = vpack.c.b16 %v1149, %v1141
  %v2150 = vpack.c.b16 %v1150, %v1142
  %v2151 = vpack.c.b16 %v1151, %v1143
  %v2152 = vpack.c.b16 %v1152, %v1144
  %v2153 = vpack.c.b16 %v1161, %v1153
  %v2154 = vpack.c.b16 %v1162, %v1154
  %v2155 = vpack.c.b16 %v1163, %v1155
  %v2156 = vpack.c.b16 %v1164, %v1156
  %v2157 = vpack.c.b16 %v1165, %v1157
  %v2158 = vpack.c.b16 %v1166, %v1158
  %v2159 = vpack.c.b16 %v1167, %v1159
  %v2160 = vpack.c.b16 %v1168, %v1160
  %v2161 = vpack.c.b16 %v1177, %v1169
  %v2162 = vpack.c.b16 %v1178, %v1170
  %v2163 = vpack.c.b16 %v1179, %v1171
  %v2164 = vpack.c.b16 %v1180, %v1172
  %v2165 = vpack.c.b16 %v1181, %v1173
  %v2166 = vpack.c.b16 %v1182, %v1174
  %v2167 = vpack.c.b16 %v1183, %v1175
  %v2168 = vpack.c.b16 %v1184, %v1176
  %v2169 = vpack.c.b16 %v1193, %v1185
  %v2170 = vpack.c.b16 %v1194, %v1186
  %v2171 = vpack.c.b16 %v1195, %v1187
  %v2172 = vpack.c.b16 %v1196, %v1188
  %v2173 = vpack.c.b16 %v1197, %v1189
  %v2174 = vpack.c.b16 %v1198, %v1190
  %v2175 = vpack.c.b16 %v1199, %v1191
  %v2176 = vpack.c.b16 %v1200, %v1192
  %v2177 = vpack.c.b16 %v1209, %v1201
  %v2178 = vpack.c.b16 %v1210, %v1202
  %v2179 = vpack.c.b16 %v1211, %v1203
  %v2180 = vpack.c.b16 %v1212, %v1204
  %v2181 = vpack.c.b16 %v1213, %v1205
  %v2182 = vpack.c.b16 %v1214, %v1206
  %v2183 = vpack.c.b16 %v1215, %v1207
  %v2184 = vpack.c.b16 %v1216, %v1208
  %v2185 = vpack.c.b16 %v1225, %v1217
  %v2186 = vpack.c.b16 %v1226, %v1218
  %v2187 = vpack.c.b16 %v1227, %v1219
  %v2188 = vpack.c.b16 %v1228, %v1220
  %v2189 = vpack.c.b16 %v1229, %v1221
  %v2190 = vpack.c.b16 %v1230, %v1222
  %v2191 = vpack.c.b16 %v1231, %v1223
  %v2192 = vpack.c.b16 %v1232, %v1224
  %v2193 = vpack.c.b16 %v1241, %v1233
  %v2194 = vpack.c.b16 %v1242, %v1234
  %v2195 = vpack.c.b16 %v1243, %v1235
  %v2196 = vpack.c.b16 %v1244, %v1236
  %v2197 = vpack.c.b16 %v1245, %v1237
  %v2198 = vpack.c.b16 %v1246, %v1238
  %v2199 = vpack.c.b16 %v1247, %v1239
  %v2200 = vpack.c.b16 %v1248, %v1240
  %v2201 = vpack.c.b16 %v1257, %v1249
  %v2202 = vpack.c.b16 %v1258, %v1250
  %v2203 = vpack.c.b16 %v1259, %v1251
  %v2204 = vpack.c.b16 %v1260, %v1252
  %v2205 = vpack.c.b16 %v1261, %v1253
  %v2206 = vpack.c.b16 %v1262, %v1254
  %v2207 = vpack.c.b16 %v1263, %v1255
  %v2208 = vpack.c.b16 %v1264, %v1256
  %v2209 = vpack.c.b16 %v1273, %v1265
  %v2210 = vpack.c.b16 %v1274, %v1266
  %v2211 = vpack.c.b16 %v1275, %v1267
  %v2212 = vpack.c.b16 %v1276, %v1268
  %v2213 = vpack.c.b16 %v1277, %v1269
  %v2214 = vpack.c.b16 %v1278, %v1270
  %v2215 = vpack.c.b16 %v1279, %v1271
  %v2216 = vpack.c.b16 %v1280, %v1272
  %v2217 = vpack.c.b16 %v1289, %v1281
  %v2218 = vpack.c.b16 %v1290, %v1282
  %v2219 = vpack.c.b16 %v1291, %v1283
  %v2220 = vpack.c.b16 %v1292, %v1284
  %v2221 = vpack.c.b16 %v1293, %v1285
  %v2222 = vpack.c.b16 %v1294, %v1286
  %v2223 = vpack.c.b16 %v1295, %v1287
  %v2224 = vpack.c.b16 %v1296, %v1288
  %v2225 = vpack.c.b16 %v1305, %v1297
  %v2226 = vpack.c.b16 %v1306, %v1298
  %v2227 = vpack.c.b16 %v1307, %v1299
  %v2228 = vpack.c.b16 %v1308, %v1300
  %v2229 = vpack.c.b16 %v1309, %v1301
  %v2230 = vpack.c.b16 %v1310, %v1302
  %v2231 = vpack.c.b16 %v1311, %v1303
  %v2232 = vpack.c.b16 %v1312, %v1304
  %v2233 = vpack.c.b16 %v1321, %v1313
  %v2234 = vpack.c.b16 %v1322, %v1314
  %v2235 = vpack.c.b16 %v1323, %v1315
  %v2236 = vpack.c.b16 %v1324, %v1316
  %v2237 = vpack.c.b16 %v1325, %v1317
  %v2238 = vpack.c.b16 %v1326, %v1318
  %v2239 = vpack.c.b16 %v1327, %v1319
  %v2240 = vpack.c.b16 %v1328, %v1320
  %v2241 = vpack.c.b16 %v1337, %v1329
  %v2242 = vpack.c.b16 %v1338, %v1330
  %v2243 = vpack.c.b16 %v1339, %v1331
  %v2244 = vpack.c.b16 %v1340, %v1332
  %v2245 = vpack.c.b16 %v1341, %v1333
  %v2246 = vpack.c.b16 %v1342, %v1334
  %v2247 = vpack.c.b16 %v1343, %v1335
  %v2248 = vpack.c.b16 %v1344, %v1336
  %v2249 = vpack.c.b16 %v1353, %v1345
  %v2250 = vpack.c.b16 %v1354, %v1346
  %v2251 = vpack.c.b16 %v1355, %v1347
  %v2252 = vpack.c.b16 %v1356, %v1348
  %v2253 = vpack.c.b16 %v1357, %v1349
  %v2254 = vpack.c.b16 %v1358, %v1350
  %v2255 = vpack.c.b16 %v1359, %v1351
  %v2256 = vpack.c.b16 %v1360, %v1352
  %v2257 = vpack.c.b16 %v1369, %v1361
  %v2258 = vpack.c.b16 %v1370, %v1362
  %v2259 = vpack.c.b16 %v1371, %v1363
  %v2260 = vpack.c.b16 %v1372, %v1364
  %v2261 = vpack.c.b16 %v1373, %v1365
  %v2262 = vpack.c.b16 %v1374, %v1366
  %v2263 = vpack.c.b16 %v1375, %v1367
  %v2264 = vpack.c.b16 %v1376, %v1368
  %v2265 = vpack.c.b16 %v1385, %v1377
  %v2266 = vpack.c.b16 %v1386, %v1378
  %v2267 = vpack.c.b16 %v1387, %v1379
  %v2268 = vpack.c.b16 %v1388, %v1380
  %v2269 = vpack.c.b16 %v1389, %v1381
  %v2270 = vpack.c.b16 %v1390, %v1382
  %v2271 = vpack.c.b16 %v1391, %v1383
  %v2272 = vpack.c.b16 %v1392, %v1384
  %v2273 = vpack.c.b16 %v1401, %v1393
  %v2274 = vpack.c.b16 %v1402, %v1394
  %v2275 = vpack.c.b16 %v1403, %v1395
  %v2276 = vpack.c.b16 %v1404, %v1396
  %v2277 = vpack.c.b16 %v1405, %v1397
  %v2278 = vpack.c.b16 %v1406, %v1398
  %v2279 = vpack.c.b16 %v1407, %v1399
  %v2280 = vpack.c.b16 %v1408, %v1400
  %v2281 = vpack.c.b16 %v1417, %v1409
  %v2282 = vpack.c.b16 %v1418, %v1410
  %v2283 = vpack.c.b16 %v1419, %v1411
  %v2284 = vpack.c.b16 %v1420, %v1412
  %v2285 = vpack.c.b16 %v1421, %v1413
  %v2286 = vpack.c.b16 %v1422, %v1414
  %v2287 = vpack.c.b16 %v1423, %v1415
  %v2288 = vpack.c.b16 %v1424, %v1416
  %v2289 = vpack.c.b16 %v1433, %v1425
  %v2290 = vpack.c.b16 %v1434, %v1426
  %v2291 = vpack.c.b16 %v1435, %v1427
  %v2292 = vpack.c.b16 %v1436, %v1428
  %v2293 = vpack.c.b16 %v1437, %v1429
  %v2294 = vpack.c.b16 %v1438, %v1430
  %v2295 = vpack.c.b16 %v1439, %v1431
  %v2296 = vpack.c.b16 %v1440, %v1432
  %v2297 = vpack.c.b16 %v1449, %v1441
  %v2298 = vpack.c.b16 %v1450, %v1442
  %v2299 = vpack.c.b16 %v1451, %v1443
  %v2300 = vpack.c.b16 %v1452, %v1444
  %v2301 = vpack.c.b16 %v1453, %v1445
  %v2302 = vpack.c.b16 %v1454, %v1446
  %v2303 = vpack.c.b16 %v1455, %v1447
  %v2304 = vpack.c.b16 %v1456, %v1448
  %v2305 = vpack.c.b16 %v1465, %v1457
  %v2306 = vpack.c.b16 %v1466, %v1458
  %v2307 = vpack.c.b16 %v1467, %v1459
  %v2308 = vpack.c.b16 %v1468, %v1460
  %v2309 = vpack.c.b16 %v1469, %v1461
  %v2310 = vpack.c.b16 %v1470, %v1462
  %v2311 = vpack.c.b16 %v1471, %v1463
  %v2312 = vpack.c.b16 %v1472, %v1464
  %v2313 = vpack.c.b16 %v1481, %v1473
  %v2314 = vpack.c.b16 %v1482, %v1474
  %v2315 = vpack.c.b16 %v1483, %v1475
  %v2316 = vpack.c.b16 %v1484, %v1476
  %v2317 = vpack.c.b16 %v1485, %v1477
  %v2318 = vpack.c.b16 %v1486, %v1478
  %v2319 = vpack.c.b16 %v1487, %v1479
  %v2320 = vpack.c.b16 %v1488, %v1480
  %v2321 = vpack.c.b16 %v1497, %v1489
  %v2322 = vpack.c.b16 %v1498, %v1490
  %v2323 = vpack.c.b16 %v1499, %v1491
  %v2324 = vpack.c.b16 %v1500, %v1492
  %v2325 = vpack.c.b16 %v1501, %v1493
  %v2326 = vpack.c.b16 %v1502, %v1494
  %v2327 = vpack.c.b16 %v1503, %v1495
  %v2328 = vpack.c.b16 %v1504, %v1496
  %v2329 = vpack.c.b16 %v1513, %v1505
  %v2330 = vpack.c.b16 %v1514, %v1506
  %v2331 = vpack.c.b16 %v1515, %v1507
  %v2332 = vpack.c.b16 %v1516, %v1508
  %v2333 = vpack.c.b16 %v1517, %v1509
  %v2334 = vpack.c.b16 %v1518, %v1510
  %v2335 = vpack.c.b16 %v1519, %v1511
  %v2336 = vpack.c.b16 %v1520, %v1512
  %v2337 = vpack.c.b16 %v1529, %v1521
  %v2338 = vpack.c.b16 %v1530, %v1522
  %v2339 = vpack.c.b16 %v1531, %v1523
  %v2340 = vpack.c.b16 %v1532, %v1524
  %v2341 = vpack.c.b16 %v1533, %v1525
  %v2342 = vpack.c.b16 %v1534, %v1526
  %v2343 = vpack.c.b16 %v1535, %v1527
  %v2344 = vpack.c.b16 %v1536, %v1528
  %v2345 = vpack.c.b16 %v1545, %v1537
  %v2346 = vpack.c.b16 %v1546, %v1538
  %v2347 = vpack.c.b16 %v1547, %v1539
  %v2348 = vpack.c.b16 %v1548, %v1540
  %v2349 = vpack.c.b16 %v1549, %v1541
  %v2350 = vpack.c.b16 %v1550, %v1542
  %v2351 = vpack.c.b16 %v1551, %v1543
  %v2352 = vpack.c.b16 %v1552, %v1544
  %v2353 = vpack.c.b16 %v1561, %v1553
  %v2354 = vpack.c.b16 %v1562, %v1554
  %v2355 = vpack.c.b16 %v1563, %v1555
  %v2356 = vpack.c.b16 %v1564, %v1556
  %v2357 = vpack.c.b16 %v1565, %v1557
  %v2358 = vpack.c.b16 %v1566, %v1558
  %v2359 = vpack.c.b16 %v1567, %v1559
  %v2360 = vpack.c.b16 %v1568, %v1560
  %v2361 = vpack.c.b16 %v1577, %v1569
  %v2362 = vpack.c.b16 %v1578, %v1570
  %v2363 = vpack.c.b16 %v1579, %v1571
  %v2364 = vpack.c.b16 %v1580, %v1572
  %v2365 = vpack.c.b16 %v1581, %v1573
  %v2366 = vpack.c.b16 %v1582, %v1574
  %v2367 = vpack.c.b16 %v1583, %v1575
  %v2368 = vpack.c.b16 %v1584, %v1576
  %v2369 = vpack.c.b16 %v1593, %v1585
  %v2370 = vpack.c.b16 %v1594, %v1586
  %v2371 = vpack.c.b16 %v1595, %v1587
  %v2372 = vpack.c.b16 %v1596, %v1588
  %v2373 = vpack.c.b16 %v1597, %v1589
  %v2374 = vpack.c.b16 %v1598, %v1590
  %v2375 = vpack.c.b16 %v1599, %v1591
  %v2376 = vpack.c.b16 %v1600, %v1592
  %v2377 = vpack.c.b16 %v1609, %v1601
  %v2378 = vpack.c.b16 %v1610, %v1602
  %v2379 = vpack.c.b16 %v1611, %v1603
  %v2380 = vpack.c.b16 %v1612, %v1604
  %v2381 = vpack.c.b16 %v1613, %v1605
  %v2382 = vpack.c.b16 %v1614, %v1606
  %v2383 = vpack.c.b16 %v1615, %v1607
  %v2384 = vpack.c.b16 %v1616, %v1608
  %v2385 = vpack.c.b16 %v1625, %v1617
  %v2386 = vpack.c.b16 %v1626, %v1618
  %v2387 = vpack.c.b16 %v1627, %v1619
  %v2388 = vpack.c.b16 %v1628, %v1620
  %v2389 = vpack.c.b16 %v1629, %v1621
  %v2390 = vpack.c.b16 %v1630, %v1622
  %v2391 = vpack.c.b16 %v1631, %v1623
  %v2392 = vpack.c.b16 %v1632, %v1624
  %v2393 = vpack.c.b16 %v1641, %v1633
  %v2394 = vpack.c.b16 %v1642, %v1634
  %v2395 = vpack.c.b16 %v1643, %v1635
  %v2396 = vpack.c.b16 %v1644, %v1636
  %v2397 = vpack.c.b16 %v1645, %v1637
  %v2398 = vpack.c.b16 %v1646, %v1638
  %v2399 = vpack.c.b16 %v1647, %v1639
  %v2400 = vpack.c.b16 %v1648, %v1640
  %v2401 = vpack.c.b16 %v1657, %v1649
  %v2402 = vpack.c.b16 %v1658, %v1650
  %v2403 = vpack.c.b16 %v1659, %v1651
  %v2404 = vpack.c.b16 %v1660, %v1652
  %v2405 = vpack.c.b16 %v1661, %v1653
  %v2406 = vpack.c.b16 %v1662, %v1654
  %v2407 = vpack.c.b16 %v1663, %v1655
  %v2408 = vpack.c.b16 %v1664, %v1656
  %v2409 = vpack.c.b16 %v1673, %v1665
  %v2410 = vpack.c.b16 %v1674, %v1666
  %v2411 = vpack.c.b16 %v1675, %v1667
  %v2412 = vpack.c.b16 %v1676, %v1668
  %v2413 = vpack.c.b16 %v1677, %v1669
  %v2414 = vpack.c.b16 %v1678, %v1670
  %v2415 = vpack.c.b16 %v1679, %v1671
  %v2416 = vpack.c.b16 %v1680, %v1672
  %v2417 = vpack.c.b16 %v1689, %v1681
  %v2418 = vpack.c.b16 %v1690, %v1682
  %v2419 = vpack.c.b16 %v1691, %v1683
  %v2420 = vpack.c.b16 %v1692, %v1684
  %v2421 = vpack.c.b16 %v1693, %v1685
  %v2422 = vpack.c.b16 %v1694, %v1686
  %v2423 = vpack.c.b16 %v1695, %v1687
  %v2424 = vpack.c.b16 %v1696, %v1688
  %v2425 = vpack.c.b16 %v1705, %v1697
  %v2426 = vpack.c.b16 %v1706, %v1698
  %v2427 = vpack.c.b16 %v1707, %v1699
  %v2428 = vpack.c.b16 %v1708, %v1700
  %v2429 = vpack.c.b16 %v1709, %v1701
  %v2430 = vpack.c.b16 %v1710, %v1702
  %v2431 = vpack.c.b16 %v1711, %v1703
  %v2432 = vpack.c.b16 %v1712, %v1704
  %v2433 = vpack.c.b16 %v1721, %v1713
  %v2434 = vpack.c.b16 %v1722, %v1714
  %v2435 = vpack.c.b16 %v1723, %v1715
  %v2436 = vpack.c.b16 %v1724, %v1716
  %v2437 = vpack.c.b16 %v1725, %v1717
  %v2438 = vpack.c.b16 %v1726, %v1718
  %v2439 = vpack.c.b16 %v1727, %v1719
  %v2440 = vpack.c.b16 %v1728, %v1720
  %v2441 = vpack.c.b16 %v1737, %v1729
  %v2442 = vpack.c.b16 %v1738, %v1730
  %v2443 = vpack.c.b16 %v1739, %v1731
  %v2444 = vpack.c.b16 %v1740, %v1732
  %v2445 = vpack.c.b16 %v1741, %v1733
  %v2446 = vpack.c.b16 %v1742, %v1734
  %v2447 = vpack.c.b16 %v1743, %v1735
  %v2448 = vpack.c.b16 %v1744, %v1736
  %v2449 = vpack.c.b16 %v1753, %v1745
  %v2450 = vpack.c.b16 %v1754, %v1746
  %v2451 = vpack.c.b16 %v1755, %v1747
  %v2452 = vpack.c.b16 %v1756, %v1748
  %v2453 = vpack.c.b16 %v1757, %v1749
  %v2454 = vpack.c.b16 %v1758, %v1750
  %v2455 = vpack.c.b16 %v1759, %v1751
  %v2456 = vpack.c.b16 %v1760, %v1752
  %v2457 = vpack.c.b16 %v1769, %v1761
  %v2458 = vpack.c.b16 %v1770, %v1762
  %v2459 = vpack.c.b16 %v1771, %v1763
  %v2460 = vpack.c.b16 %v1772, %v1764
  %v2461 = vpack.c.b16 %v1773, %v1765
  %v2462 = vpack.c.b16 %v1774, %v1766
  %v2463 = vpack.c.b16 %v1775, %v1767
  %v2464 = vpack.c.b16 %v1776, %v1768
  %v2465 = vpack.c.b16 %v1785, %v1777
  %v2466 = vpack.c.b16 %v1786, %v1778
  %v2467 = vpack.c.b16 %v1787, %v1779
  %v2468 = vpack.c.b16 %v1788, %v1780
  %v2469 = vpack.c.b16 %v1789, %v1781
  %v2470 = vpack.c.b16 %v1790, %v1782
  %v2471 = vpack.c.b16 %v1791, %v1783
  %v2472 = vpack.c.b16 %v1792, %v1784
  %v2473 = vpack.c.b16 %v1801, %v1793
  %v2474 = vpack.c.b16 %v1802, %v1794
  %v2475 = vpack.c.b16 %v1803, %v1795
  %v2476 = vpack.c.b16 %v1804, %v1796
  %v2477 = vpack.c.b16 %v1805, %v1797
  %v2478 = vpack.c.b16 %v1806, %v1798
  %v2479 = vpack.c.b16 %v1807, %v1799
  %v2480 = vpack.c.b16 %v1808, %v1800
  %v2481 = vpack.c.b16 %v1817, %v1809
  %v2482 = vpack.c.b16 %v1818, %v1810
  %v2483 = vpack.c.b16 %v1819, %v1811
  %v2484 = vpack.c.b16 %v1820, %v1812
  %v2485 = vpack.c.b16 %v1821, %v1813
  %v2486 = vpack.c.b16 %v1822, %v1814
  %v2487 = vpack.c.b16 %v1823, %v1815
  %v2488 = vpack.c.b16 %v1824, %v1816
  %v2489 = vpack.c.b16 %v1833, %v1825
  %v2490 = vpack.c.b16 %v1834, %v1826
  %v2491 = vpack.c.b16 %v1835, %v1827
  %v2492 = vpack.c.b16 %v1836, %v1828
  %v2493 = vpack.c.b16 %v1837, %v1829
  %v2494 = vpack.c.b16 %v1838, %v1830
  %v2495 = vpack.c.b16 %v1839, %v1831
  %v2496 = vpack.c.b16 %v1840, %v1832
  %v2497 = vpack.c.b16 %v1849, %v1841
  %v2498 = vpack.c.b16 %v1850, %v1842
  %v2499 = vpack.c.b16 %v1851, %v1843
  %v2500 = vpack.c.b16 %v1852, %v1844
  %v2501 = vpack.c.b16 %v1853, %v1845
  %v2502 = vpack.c.b16 %v1854, %v1846
  %v2503 = vpack.c.b16 %v1855, %v1847
  %v2504 = vpack.c.b16 %v1856, %v1848
  %v2505 = vpack.c.b16 %v1865, %v1857
  %v2506 = vpack.c.b16 %v1866, %v1858
  %v2507 = vpack.c.b16 %v1867, %v1859
  %v2508 = vpack.c.b16 %v1868, %v1860
  %v2509 = vpack.c.b16 %v1869, %v1861
  %v2510 = vpack.c.b16 %v1870, %v1862
  %v2511 = vpack.c.b16 %v1871, %v1863
  %v2512 = vpack.c.b16 %v1872, %v1864
  %v2513 = vpack.c.b16 %v1881, %v1873
  %v2514 = vpack.c.b16 %v1882, %v1874
  %v2515 = vpack.c.b16 %v1883, %v1875
  %v2516 = vpack.c.b16 %v1884, %v1876
  %v2517 = vpack.c.b16 %v1885, %v1877
  %v2518 = vpack.c.b16 %v1886, %v1878
  %v2519 = vpack.c.b16 %v1887, %v1879
  %v2520 = vpack.c.b16 %v1888, %v1880
  %v2521 = vpack.c.b16 %v1897, %v1889
  %v2522 = vpack.c.b16 %v1898, %v1890
  %v2523 = vpack.c.b16 %v1899, %v1891
  %v2524 = vpack.c.b16 %v1900, %v1892
  %v2525 = vpack.c.b16 %v1901, %v1893
  %v2526 = vpack.c.b16 %v1902, %v1894
  %v2527 = vpack.c.b16 %v1903, %v1895
  %v2528 = vpack.c.b16 %v1904, %v1896
  %v2529 = vpack.c.b16 %v1913, %v1905
  %v2530 = vpack.c.b16 %v1914, %v1906
  %v2531 = vpack.c.b16 %v1915, %v1907
  %v2532 = vpack.c.b16 %v1916, %v1908
  %v2533 = vpack.c.b16 %v1917, %v1909
  %v2534 = vpack.c.b16 %v1918, %v1910
  %v2535 = vpack.c.b16 %v1919, %v1911
  %v2536 = vpack.c.b16 %v1920, %v1912
  %v2537 = vpack.c.b16 %v1929, %v1921
  %v2538 = vpack.c.b16 %v1930, %v1922
  %v2539 = vpack.c.b16 %v1931, %v1923
  %v2540 = vpack.c.b16 %v1932, %v1924
  %v2541 = vpack.c.b16 %v1933, %v1925
  %v2542 = vpack.c.b16 %v1934, %v1926
  %v2543 = vpack.c.b16 %v1935, %v1927
  %v2544 = vpack.c.b16 %v1936, %v1928
  %v2545 = vpack.c.b16 %v1945, %v1937
  %v2546 = vpack.c.b16 %v1946, %v1938
  %v2547 = vpack.c.b16 %v1947, %v1939
  %v2548 = vpack.c.b16 %v1948, %v1940
  %v2549 = vpack.c.b16 %v1949, %v1941
  %v2550 = vpack.c.b16 %v1950, %v1942
  %v2551 = vpack.c.b16 %v1951, %v1943
  %v2552 = vpack.c.b16 %v1952, %v1944
  %v2553 = vpack.c.b16 %v1961, %v1953
  %v2554 = vpack.c.b16 %v1962, %v1954
  %v2555 = vpack.c.b16 %v1963, %v1955
  %v2556 = vpack.c.b16 %v1964, %v1956
  %v2557 = vpack.c.b16 %v1965, %v1957
  %v2558 = vpack.c.b16 %v1966, %v1958
  %v2559 = vpack.c.b16 %v1967, %v1959
  %v2560 = vpack.c.b16 %v1968, %v1960
  %v2561 = vpack.c.b16 %v1977, %v1969
  %v2562 = vpack.c.b16 %v1978, %v1970
  %v2563 = vpack.c.b16 %v1979, %v1971
  %v2564 = vpack.c.b16 %v1980, %v1972
  %v2565 = vpack.c.b16 %v1981, %v1973
  %v2566 = vpack.c.b16 %v1982, %v1974
  %v2567 = vpack.c.b16 %v1983, %v1975
  %v2568 = vpack.c.b16 %v1984, %v1976
  %v2569 = vpack.c.b16 %v1993, %v1985
  %v2570 = vpack.c.b16 %v1994, %v1986
  %v2571 = vpack.c.b16 %v1995, %v1987
  %v2572 = vpack.c.b16 %v1996, %v1988
  %v2573 = vpack.c.b16 %v1997, %v1989
  %v2574 = vpack.c.b16 %v1998, %v1990
  %v2575 = vpack.c.b16 %v1999, %v1991
  %v2576 = vpack.c.b16 %v2000, %v1992
  %v2577 = vpack.c.b16 %v2009, %v2001
  %v2578 = vpack.c.b16 %v2010, %v2002
  %v2579 = vpack.c.b16 %v2011, %v2003
  %v2580 = vpack.c.b16 %v2012, %v2004
  %v2581 = vpack.c.b16 %v2013, %v2005
  %v2582 = vpack.c.b16 %v2014, %v2006
  %v2583 = vpack.c.b16 %v2015, %v2007
  %v2584 = vpack.c.b16 %v2016, %v2008
  %v2585 = vpack.c.b16 %v2025, %v2017
  %v2586 = vpack.c.b16 %v2026, %v2018
  %v2587 = vpack.c.b16 %v2027, %v2019
  %v2588 = vpack.c.b16 %v2028, %v2020
  %v2589 = vpack.c.b16 %v2029, %v2021
  %v2590 = vpack.c.b16 %v2030, %v2022
  %v2591 = vpack.c.b16 %v2031, %v2023
  %v2592 = vpack.c.b16 %v2032, %v2024
  %v2593 = vpack.c.b16 %v2041, %v2033
  %v2594 = vpack.c.b16 %v2042, %v2034
  %v2595 = vpack.c.b16 %v2043, %v2035
  %v2596 = vpack.c.b16 %v2044, %v2036
  %v2597 = vpack.c.b16 %v2045, %v2037
  %v2598 = vpack.c.b16 %v2046, %v2038
  %v2599 = vpack.c.b16 %v2047, %v2039
  %v2600 = vpack.c.b16 %v2048, %v2040
  %v2601 = vpack.c.b16 %v2057, %v2049
  %v2602 = vpack.c.b16 %v2058, %v2050
  %v2603 = vpack.c.b16 %v2059, %v2051
  %v2604 = vpack.c.b16 %v2060, %v2052
  %v2605 = vpack.c.b16 %v2061, %v2053
  %v2606 = vpack.c.b16 %v2062, %v2054
  %v2607 = vpack.c.b16 %v2063, %v2055
  %v2608 = vpack.c.b16 %v2064, %v2056
  %v2609 = vpack.c.b16 %v2073, %v2065
  %v2610 = vpack.c.b16 %v2074, %v2066
  %v2611 = vpack.c.b16 %v2075, %v2067
  %v2612 = vpack.c.b16 %v2076, %v2068
  %v2613 = vpack.c.b16 %v2077, %v2069
  %v2614 = vpack.c.b16 %v2078, %v2070
  %v2615 = vpack.c.b16 %v2079, %v2071
  %v2616 = vpack.c.b16 %v2080, %v2072
  %v2617 = vpack.c.b16 %v2089, %v2081
  %v2618 = vpack.c.b16 %v2090, %v2082
  %v2619 = vpack.c.b16 %v2091, %v2083
  %v2620 = vpack.c.b16 %v2092, %v2084
  %v2621 = vpack.c.b16 %v2093, %v2085
  %v2622 = vpack.c.b16 %v2094, %v2086
  %v2623 = vpack.c.b16 %v2095, %v2087
  %v2624 = vpack.c.b16 %v2096, %v2088
  %v2625 = vpack.c.b16 %v2105, %v2097
  %v2626 = vpack.c.b16 %v2106, %v2098
  %v2627 = vpack.c.b16 %v2107, %v2099
  %v2628 = vpack.c.b16 %v2108, %v2100
  %v2629 = vpack.c.b16 %v2109, %v2101
  %v2630 = vpack.c.b16 %v2110, %v2102
  %v2631 = vpack.c.b16 %v2111, %v2103
  %v2632 = vpack.c.b16 %v2112, %v2104
  %v2633 = vpack.c.b16 %v2121, %v2113
  %v2634 = vpack.c.b16 %v2122, %v2114
  %v2635 = vpack.c.b16 %v2123, %v2115
  %v2636 = vpack.c.b16 %v2124, %v2116
  %v2637 = vpack.c.b16 %v2125, %v2117
  %v2638 = vpack.c.b16 %v2126, %v2118
  %v2639 = vpack.c.b16 %v2127, %v2119
  %v2640 = vpack.c.b16 %v2128, %v2120
  %3153 = vmatprep.subr.bf16.mxu0 %v2130
  %3154 = vmatpush1.bf16.xpose.msra.mxu0 %v2129
  %3155 = vmatprep.subr.bf16.mxu0 %v2138
  %3156 = vmatpush1.bf16.xpose.msra.mxu0 %v2137
  %3157 = vmatprep.subr.bf16.mxu0 %v2146
  %3158 = vmatpush1.bf16.xpose.msra.mxu0 %v2145
  %3159 = vmatprep.subr.bf16.mxu0 %v2154
  %3160 = vmatpush1.bf16.xpose.msra.mxu0 %v2153
  %3161 = vmatprep.subr.bf16.mxu0 %v2162
  %3162 = vmatpush1.bf16.xpose.msra.mxu0 %v2161
  %3163 = vmatprep.subr.bf16.mxu0 %v2170
  %3164 = vmatpush1.bf16.xpose.msra.mxu0 %v2169
  %3165 = vmatprep.subr.bf16.mxu0 %v2178
  %3166 = vmatpush1.bf16.xpose.msra.mxu0 %v2177
  %3167 = vmatprep.subr.bf16.mxu0 %v2186
  %3168 = vmatpush1.bf16.xpose.msra.mxu0 %v2185
  %3169 = vmatprep.subr.bf16.mxu0 %v2194
  %3170 = vmatpush1.bf16.xpose.msra.mxu0 %v2193
  %3171 = vmatprep.subr.bf16.mxu0 %v2202
  %3172 = vmatpush1.bf16.xpose.msra.mxu0 %v2201
  %3173 = vmatprep.subr.bf16.mxu0 %v2210
  %3174 = vmatpush1.bf16.xpose.msra.mxu0 %v2209
  %3175 = vmatprep.subr.bf16.mxu0 %v2218
  %3176 = vmatpush1.bf16.xpose.msra.mxu0 %v2217
  %3177 = vmatprep.subr.bf16.mxu0 %v2226
  %3178 = vmatpush1.bf16.xpose.msra.mxu0 %v2225
  %3179 = vmatprep.subr.bf16.mxu0 %v2234
  %3180 = vmatpush1.bf16.xpose.msra.mxu0 %v2233
  %3181 = vmatprep.subr.bf16.mxu0 %v2242
  %3182 = vmatpush1.bf16.xpose.msra.mxu0 %v2241
  %3183 = vmatprep.subr.bf16.mxu0 %v2250
  %3184 = vmatpush1.bf16.xpose.msra.mxu0 %v2249
  %3185 = vmatprep.mubr.bf16.mxu0 %v573
  %3186 = vmatmul.mubr.bf16.gmra.mrb[0].mxu0 %v559
  %v3187 = vpop.f32.mrb[0].mxu0
  %v3188 = vadd.f32 0.0, %v3187
  %v3189 = vpop.f32.mrb[0].mxu0
  %v3190 = vadd.f32 0.0, %v3189
  %v3191 = vpop.f32.mrb[0].mxu0
  %v3192 = vpop.f32.mrb[0].mxu0
  %3193 = vdwg.mxu0
  %3194 = vmatprep.subr.bf16.mxu0 %v2132
  %3195 = vmatpush1.bf16.xpose.msra.mxu0 %v2131
  %3196 = vmatprep.subr.bf16.mxu0 %v2140
  %3197 = vmatpush1.bf16.xpose.msra.mxu0 %v2139
  %3198 = vmatprep.subr.bf16.mxu0 %v2148
  %3199 = vmatpush1.bf16.xpose.msra.mxu0 %v2147
  %3200 = vmatprep.subr.bf16.mxu0 %v2156
  %3201 = vmatpush1.bf16.xpose.msra.mxu0 %v2155
  %3202 = vmatprep.subr.bf16.mxu0 %v2164
  %3203 = vmatpush1.bf16.xpose.msra.mxu0 %v2163
  %3204 = vmatprep.subr.bf16.mxu0 %v2172
  %3205 = vmatpush1.bf16.xpose.msra.mxu0 %v2171
  %3206 = vmatprep.subr.bf16.mxu0 %v2180
  %3207 = vmatpush1.bf16.xpose.msra.mxu0 %v2179
  %3208 = vmatprep.subr.bf16.mxu0 %v2188
  %3209 = vmatpush1.bf16.xpose.msra.mxu0 %v2187
  %3210 = vmatprep.subr.bf16.mxu0 %v2196
  %3211 = vmatpush1.bf16.xpose.msra.mxu0 %v2195
  %3212 = vmatprep.subr.bf16.mxu0 %v2204
  %3213 = vmatpush1.bf16.xpose.msra.mxu0 %v2203
  %3214 = vmatprep.subr.bf16.mxu0 %v2212
  %3215 = vmatpush1.bf16.xpose.msra.mxu0 %v2211
  %3216 = vmatprep.subr.bf16.mxu0 %v2220
  %3217 = vmatpush1.bf16.xpose.msra.mxu0 %v2219
  %3218 = vmatprep.subr.bf16.mxu0 %v2228
  %3219 = vmatpush1.bf16.xpose.msra.mxu0 %v2227
  %3220 = vmatprep.subr.bf16.mxu0 %v2236
  %3221 = vmatpush1.bf16.xpose.msra.mxu0 %v2235
  %3222 = vmatprep.subr.bf16.mxu0 %v2244
  %3223 = vmatpush1.bf16.xpose.msra.mxu0 %v2243
  %3224 = vmatprep.subr.bf16.mxu0 %v2252
  %3225 = vmatpush1.bf16.xpose.msra.mxu0 %v2251
  %3226 = vmatprep.mubr.bf16.mxu0 %v583
  %3227 = vmatmul.mubr.bf16.gmra.mrb[0].mxu0 %v581
  %v3228 = vpop.f32.mrb[0].mxu0
  %v3229 = vadd.f32 %v3188, %v3228
  %v3230 = vpop.f32.mrb[0].mxu0
  %v3231 = vadd.f32 %v3190, %v3230
  %v3232 = vpop.f32.mrb[0].mxu0
  %v3233 = vpop.f32.mrb[0].mxu0
  %3234 = vdwg.mxu0
  %3235 = vmatprep.subr.bf16.mxu0 %v2134
  %3236 = vmatpush1.bf16.xpose.msra.mxu0 %v2133
  %3237 = vmatprep.subr.bf16.mxu0 %v2142
  %3238 = vmatpush1.bf16.xpose.msra.mxu0 %v2141
  %3239 = vmatprep.subr.bf16.mxu0 %v2150
  %3240 = vmatpush1.bf16.xpose.msra.mxu0 %v2149
  %3241 = vmatprep.subr.bf16.mxu0 %v2158
  %3242 = vmatpush1.bf16.xpose.msra.mxu0 %v2157
  %3243 = vmatprep.subr.bf16.mxu0 %v2166
  %3244 = vmatpush1.bf16.xpose.msra.mxu0 %v2165
  %3245 = vmatprep.subr.bf16.mxu0 %v2174
  %3246 = vmatpush1.bf16.xpose.msra.mxu0 %v2173
  %3247 = vmatprep.subr.bf16.mxu0 %v2182
  %3248 = vmatpush1.bf16.xpose.msra.mxu0 %v2181
  %3249 = vmatprep.subr.bf16.mxu0 %v2190
  %3250 = vmatpush1.bf16.xpose.msra.mxu0 %v2189
  %3251 = vmatprep.subr.bf16.mxu0 %v2198
  %3252 = vmatpush1.bf16.xpose.msra.mxu0 %v2197
  %3253 = vmatprep.subr.bf16.mxu0 %v2206
  %3254 = vmatpush1.bf16.xpose.msra.mxu0 %v2205
  %3255 = vmatprep.subr.bf16.mxu0 %v2214
  %3256 = vmatpush1.bf16.xpose.msra.mxu0 %v2213
  %3257 = vmatprep.subr.bf16.mxu0 %v2222
  %3258 = vmatpush1.bf16.xpose.msra.mxu0 %v2221
  %3259 = vmatprep.subr.bf16.mxu0 %v2230
  %3260 = vmatpush1.bf16.xpose.msra.mxu0 %v2229
  %3261 = vmatprep.subr.bf16.mxu0 %v2238
  %3262 = vmatpush1.bf16.xpose.msra.mxu0 %v2237
  %3263 = vmatprep.subr.bf16.mxu0 %v2246
  %3264 = vmatpush1.bf16.xpose.msra.mxu0 %v2245
  %3265 = vmatprep.subr.bf16.mxu0 %v2254
  %3266 = vmatpush1.bf16.xpose.msra.mxu0 %v2253
  %3267 = vmatprep.mubr.bf16.mxu0 %v580
  %3268 = vmatmul.mubr.bf16.gmra.mrb[0].mxu0 %v566
  %v3269 = vpop.f32.mrb[0].mxu0
  %v3270 = vadd.f32 %v3229, %v3269
  %v3271 = vpop.f32.mrb[0].mxu0
  %v3272 = vadd.f32 %v3231, %v3271
  %v3273 = vpop.f32.mrb[0].mxu0
  %v3274 = vpop.f32.mrb[0].mxu0
  %3275 = vdwg.mxu0
  %3276 = vmatprep.subr.bf16.mxu0 %v2136
  %3277 = vmatpush1.bf16.xpose.msra.mxu0 %v2135
  %3278 = vmatprep.subr.bf16.mxu0 %v2144
  %3279 = vmatpush1.bf16.xpose.msra.mxu0 %v2143
  %3280 = vmatprep.subr.bf16.mxu0 %v2152
  %3281 = vmatpush1.bf16.xpose.msra.mxu0 %v2151
  %3282 = vmatprep.subr.bf16.mxu0 %v2160
  %3283 = vmatpush1.bf16.xpose.msra.mxu0 %v2159
  %3284 = vmatprep.subr.bf16.mxu0 %v2168
  %3285 = vmatpush1.bf16.xpose.msra.mxu0 %v2167
  %3286 = vmatprep.subr.bf16.mxu0 %v2176
  %3287 = vmatpush1.bf16.xpose.msra.mxu0 %v2175
  %3288 = vmatprep.subr.bf16.mxu0 %v2184
  %3289 = vmatpush1.bf16.xpose.msra.mxu0 %v2183
  %3290 = vmatprep.subr.bf16.mxu0 %v2192
  %3291 = vmatpush1.bf16.xpose.msra.mxu0 %v2191
  %3292 = vmatprep.subr.bf16.mxu0 %v2200
  %3293 = vmatpush1.bf16.xpose.msra.mxu0 %v2199
  %3294 = vmatprep.subr.bf16.mxu0 %v2208
  %3295 = vmatpush1.bf16.xpose.msra.mxu0 %v2207
  %3296 = vmatprep.subr.bf16.mxu0 %v2216
  %3297 = vmatpush1.bf16.xpose.msra.mxu0 %v2215
  %3298 = vmatprep.subr.bf16.mxu0 %v2224
  %3299 = vmatpush1.bf16.xpose.msra.mxu0 %v2223
  %3300 = vmatprep.subr.bf16.mxu0 %v2232
  %3301 = vmatpush1.bf16.xpose.msra.mxu0 %v2231
  %3302 = vmatprep.subr.bf16.mxu0 %v2240
  %3303 = vmatpush1.bf16.xpose.msra.mxu0 %v2239
  %3304 = vmatprep.subr.bf16.mxu0 %v2248
  %3305 = vmatpush1.bf16.xpose.msra.mxu0 %v2247
  %3306 = vmatprep.subr.bf16.mxu0 %v2256
  %3307 = vmatpush1.bf16.xpose.msra.mxu0 %v2255
  %3308 = vmatprep.mubr.bf16.mxu0 %v584
  %3309 = vmatmul.mubr.bf16.gmra.mrb[0].mxu0 %v582
  %v3310 = vpop.f32.mrb[0].mxu0
  %v3311 = vadd.f32 %v3270, %v3310
  %v3312 = vpop.f32.mrb[0].mxu0
  %v3313 = vadd.f32 %v3272, %v3312
  %v3314 = vpop.f32.mrb[0].mxu0
  %v3315 = vpop.f32.mrb[0].mxu0
  %3316 = vdwg.mxu0
  %3317 = vmatprep.subr.bf16.mxu0 %v2258
  %3318 = vmatpush1.bf16.xpose.msra.mxu0 %v2257
  %3319 = vmatprep.subr.bf16.mxu0 %v2266
  %3320 = vmatpush1.bf16.xpose.msra.mxu0 %v2265
  %3321 = vmatprep.subr.bf16.mxu0 %v2274
  %3322 = vmatpush1.bf16.xpose.msra.mxu0 %v2273
  %3323 = vmatprep.subr.bf16.mxu0 %v2282
  %3324 = vmatpush1.bf16.xpose.msra.mxu0 %v2281
  %3325 = vmatprep.subr.bf16.mxu0 %v2290
  %3326 = vmatpush1.bf16.xpose.msra.mxu0 %v2289
  %3327 = vmatprep.subr.bf16.mxu0 %v2298
  %3328 = vmatpush1.bf16.xpose.msra.mxu0 %v2297
  %3329 = vmatprep.subr.bf16.mxu0 %v2306
  %3330 = vmatpush1.bf16.xpose.msra.mxu0 %v2305
  %3331 = vmatprep.subr.bf16.mxu0 %v2314
  %3332 = vmatpush1.bf16.xpose.msra.mxu0 %v2313
  %3333 = vmatprep.subr.bf16.mxu0 %v2322
  %3334 = vmatpush1.bf16.xpose.msra.mxu0 %v2321
  %3335 = vmatprep.subr.bf16.mxu0 %v2330
  %3336 = vmatpush1.bf16.xpose.msra.mxu0 %v2329
  %3337 = vmatprep.subr.bf16.mxu0 %v2338
  %3338 = vmatpush1.bf16.xpose.msra.mxu0 %v2337
  %3339 = vmatprep.subr.bf16.mxu0 %v2346
  %3340 = vmatpush1.bf16.xpose.msra.mxu0 %v2345
  %3341 = vmatprep.subr.bf16.mxu0 %v2354
  %3342 = vmatpush1.bf16.xpose.msra.mxu0 %v2353
  %3343 = vmatprep.subr.bf16.mxu0 %v2362
  %3344 = vmatpush1.bf16.xpose.msra.mxu0 %v2361
  %3345 = vmatprep.subr.bf16.mxu0 %v2370
  %3346 = vmatpush1.bf16.xpose.msra.mxu0 %v2369
  %3347 = vmatprep.subr.bf16.mxu0 %v2378
  %3348 = vmatpush1.bf16.xpose.msra.mxu0 %v2377
  %3349 = vmatprep.mubr.bf16.mxu0 %v573
  %3350 = vmatmul.mubr.bf16.gmra.mrb[0].mxu0 %v559
  %v3351 = vpop.f32.mrb[0].mxu0
  %v3352 = vadd.f32 0.0, %v3351
  %v3353 = vpop.f32.mrb[0].mxu0
  %v3354 = vadd.f32 0.0, %v3353
  %v3355 = vpop.f32.mrb[0].mxu0
  %v3356 = vpop.f32.mrb[0].mxu0
  %3357 = vdwg.mxu0
  %3358 = vmatprep.subr.bf16.mxu0 %v2260
  %3359 = vmatpush1.bf16.xpose.msra.mxu0 %v2259
  %3360 = vmatprep.subr.bf16.mxu0 %v2268
  %3361 = vmatpush1.bf16.xpose.msra.mxu0 %v2267
  %3362 = vmatprep.subr.bf16.mxu0 %v2276
  %3363 = vmatpush1.bf16.xpose.msra.mxu0 %v2275
  %3364 = vmatprep.subr.bf16.mxu0 %v2284
  %3365 = vmatpush1.bf16.xpose.msra.mxu0 %v2283
  %3366 = vmatprep.subr.bf16.mxu0 %v2292
  %3367 = vmatpush1.bf16.xpose.msra.mxu0 %v2291
  %3368 = vmatprep.subr.bf16.mxu0 %v2300
  %3369 = vmatpush1.bf16.xpose.msra.mxu0 %v2299
  %3370 = vmatprep.subr.bf16.mxu0 %v2308
  %3371 = vmatpush1.bf16.xpose.msra.mxu0 %v2307
  %3372 = vmatprep.subr.bf16.mxu0 %v2316
  %3373 = vmatpush1.bf16.xpose.msra.mxu0 %v2315
  %3374 = vmatprep.subr.bf16.mxu0 %v2324
  %3375 = vmatpush1.bf16.xpose.msra.mxu0 %v2323
  %3376 = vmatprep.subr.bf16.mxu0 %v2332
  %3377 = vmatpush1.bf16.xpose.msra.mxu0 %v2331
  %3378 = vmatprep.subr.bf16.mxu0 %v2340
  %3379 = vmatpush1.bf16.xpose.msra.mxu0 %v2339
  %3380 = vmatprep.subr.bf16.mxu0 %v2348
  %3381 = vmatpush1.bf16.xpose.msra.mxu0 %v2347
  %3382 = vmatprep.subr.bf16.mxu0 %v2356
  %3383 = vmatpush1.bf16.xpose.msra.mxu0 %v2355
  %3384 = vmatprep.subr.bf16.mxu0 %v2364
  %3385 = vmatpush1.bf16.xpose.msra.mxu0 %v2363
  %3386 = vmatprep.subr.bf16.mxu0 %v2372
  %3387 = vmatpush1.bf16.xpose.msra.mxu0 %v2371
  %3388 = vmatprep.subr.bf16.mxu0 %v2380
  %3389 = vmatpush1.bf16.xpose.msra.mxu0 %v2379
  %3390 = vmatprep.mubr.bf16.mxu0 %v583
  %3391 = vmatmul.mubr.bf16.gmra.mrb[0].mxu0 %v581
  %v3392 = vpop.f32.mrb[0].mxu0
  %v3393 = vadd.f32 %v3352, %v3392
  %v3394 = vpop.f32.mrb[0].mxu0
  %v3395 = vadd.f32 %v3354, %v3394
  %v3396 = vpop.f32.mrb[0].mxu0
  %v3397 = vpop.f32.mrb[0].mxu0
  %3398 = vdwg.mxu0
  %3399 = vmatprep.subr.bf16.mxu0 %v2262
  %3400 = vmatpush1.bf16.xpose.msra.mxu0 %v2261
  %3401 = vmatprep.subr.bf16.mxu0 %v2270
  %3402 = vmatpush1.bf16.xpose.msra.mxu0 %v2269
  %3403 = vmatprep.subr.bf16.mxu0 %v2278
  %3404 = vmatpush1.bf16.xpose.msra.mxu0 %v2277
  %3405 = vmatprep.subr.bf16.mxu0 %v2286
  %3406 = vmatpush1.bf16.xpose.msra.mxu0 %v2285
  %3407 = vmatprep.subr.bf16.mxu0 %v2294
  %3408 = vmatpush1.bf16.xpose.msra.mxu0 %v2293
  %3409 = vmatprep.subr.bf16.mxu0 %v2302
  %3410 = vmatpush1.bf16.xpose.msra.mxu0 %v2301
  %3411 = vmatprep.subr.bf16.mxu0 %v2310
  %3412 = vmatpush1.bf16.xpose.msra.mxu0 %v2309
  %3413 = vmatprep.subr.bf16.mxu0 %v2318
  %3414 = vmatpush1.bf16.xpose.msra.mxu0 %v2317
  %3415 = vmatprep.subr.bf16.mxu0 %v2326
  %3416 = vmatpush1.bf16.xpose.msra.mxu0 %v2325
  %3417 = vmatprep.subr.bf16.mxu0 %v2334
  %3418 = vmatpush1.bf16.xpose.msra.mxu0 %v2333
  %3419 = vmatprep.subr.bf16.mxu0 %v2342
  %3420 = vmatpush1.bf16.xpose.msra.mxu0 %v2341
  %3421 = vmatprep.subr.bf16.mxu0 %v2350
  %3422 = vmatpush1.bf16.xpose.msra.mxu0 %v2349
  %3423 = vmatprep.subr.bf16.mxu0 %v2358
  %3424 = vmatpush1.bf16.xpose.msra.mxu0 %v2357
  %3425 = vmatprep.subr.bf16.mxu0 %v2366
  %3426 = vmatpush1.bf16.xpose.msra.mxu0 %v2365
  %3427 = vmatprep.subr.bf16.mxu0 %v2374
  %3428 = vmatpush1.bf16.xpose.msra.mxu0 %v2373
  %3429 = vmatprep.subr.bf16.mxu0 %v2382
  %3430 = vmatpush1.bf16.xpose.msra.mxu0 %v2381
  %3431 = vmatprep.mubr.bf16.mxu0 %v580
  %3432 = vmatmul.mubr.bf16.gmra.mrb[0].mxu0 %v566
  %v3433 = vpop.f32.mrb[0].mxu0
  %v3434 = vadd.f32 %v3393, %v3433
  %v3435 = vpop.f32.mrb[0].mxu0
  %v3436 = vadd.f32 %v3395, %v3435
  %v3437 = vpop.f32.mrb[0].mxu0
  %v3438 = vpop.f32.mrb[0].mxu0
  %3439 = vdwg.mxu0
  %3440 = vmatprep.subr.bf16.mxu0 %v2264
  %3441 = vmatpush1.bf16.xpose.msra.mxu0 %v2263
  %3442 = vmatprep.subr.bf16.mxu0 %v2272
  %3443 = vmatpush1.bf16.xpose.msra.mxu0 %v2271
  %3444 = vmatprep.subr.bf16.mxu0 %v2280
  %3445 = vmatpush1.bf16.xpose.msra.mxu0 %v2279
  %3446 = vmatprep.subr.bf16.mxu0 %v2288
  %3447 = vmatpush1.bf16.xpose.msra.mxu0 %v2287
  %3448 = vmatprep.subr.bf16.mxu0 %v2296
  %3449 = vmatpush1.bf16.xpose.msra.mxu0 %v2295
  %3450 = vmatprep.subr.bf16.mxu0 %v2304
  %3451 = vmatpush1.bf16.xpose.msra.mxu0 %v2303
  %3452 = vmatprep.subr.bf16.mxu0 %v2312
  %3453 = vmatpush1.bf16.xpose.msra.mxu0 %v2311
  %3454 = vmatprep.subr.bf16.mxu0 %v2320
  %3455 = vmatpush1.bf16.xpose.msra.mxu0 %v2319
  %3456 = vmatprep.subr.bf16.mxu0 %v2328
  %3457 = vmatpush1.bf16.xpose.msra.mxu0 %v2327
  %3458 = vmatprep.subr.bf16.mxu0 %v2336
  %3459 = vmatpush1.bf16.xpose.msra.mxu0 %v2335
  %3460 = vmatprep.subr.bf16.mxu0 %v2344
  %3461 = vmatpush1.bf16.xpose.msra.mxu0 %v2343
  %3462 = vmatprep.subr.bf16.mxu0 %v2352
  %3463 = vmatpush1.bf16.xpose.msra.mxu0 %v2351
  %3464 = vmatprep.subr.bf16.mxu0 %v2360
  %3465 = vmatpush1.bf16.xpose.msra.mxu0 %v2359
  %3466 = vmatprep.subr.bf16.mxu0 %v2368
  %3467 = vmatpush1.bf16.xpose.msra.mxu0 %v2367
  %3468 = vmatprep.subr.bf16.mxu0 %v2376
  %3469 = vmatpush1.bf16.xpose.msra.mxu0 %v2375
  %3470 = vmatprep.subr.bf16.mxu0 %v2384
  %3471 = vmatpush1.bf16.xpose.msra.mxu0 %v2383
  %3472 = vmatprep.mubr.bf16.mxu0 %v584
  %3473 = vmatmul.mubr.bf16.gmra.mrb[0].mxu0 %v582
  %v3474 = vpop.f32.mrb[0].mxu0
  %v3475 = vadd.f32 %v3434, %v3474
  %v3476 = vpop.f32.mrb[0].mxu0
  %v3477 = vadd.f32 %v3436, %v3476
  %v3478 = vpop.f32.mrb[0].mxu0
  %v3479 = vpop.f32.mrb[0].mxu0
  %3480 = vdwg.mxu0
  %3481 = vmatprep.subr.bf16.mxu0 %v2386
  %3482 = vmatpush1.bf16.xpose.msra.mxu0 %v2385
  %3483 = vmatprep.subr.bf16.mxu0 %v2394
  %3484 = vmatpush1.bf16.xpose.msra.mxu0 %v2393
  %3485 = vmatprep.subr.bf16.mxu0 %v2402
  %3486 = vmatpush1.bf16.xpose.msra.mxu0 %v2401
  %3487 = vmatprep.subr.bf16.mxu0 %v2410
  %3488 = vmatpush1.bf16.xpose.msra.mxu0 %v2409
  %3489 = vmatprep.subr.bf16.mxu0 %v2418
  %3490 = vmatpush1.bf16.xpose.msra.mxu0 %v2417
  %3491 = vmatprep.subr.bf16.mxu0 %v2426
  %3492 = vmatpush1.bf16.xpose.msra.mxu0 %v2425
  %3493 = vmatprep.subr.bf16.mxu0 %v2434
  %3494 = vmatpush1.bf16.xpose.msra.mxu0 %v2433
  %3495 = vmatprep.subr.bf16.mxu0 %v2442
  %3496 = vmatpush1.bf16.xpose.msra.mxu0 %v2441
  %3497 = vmatprep.subr.bf16.mxu0 %v2450
  %3498 = vmatpush1.bf16.xpose.msra.mxu0 %v2449
  %3499 = vmatprep.subr.bf16.mxu0 %v2458
  %3500 = vmatpush1.bf16.xpose.msra.mxu0 %v2457
  %3501 = vmatprep.subr.bf16.mxu0 %v2466
  %3502 = vmatpush1.bf16.xpose.msra.mxu0 %v2465
  %3503 = vmatprep.subr.bf16.mxu0 %v2474
  %3504 = vmatpush1.bf16.xpose.msra.mxu0 %v2473
  %3505 = vmatprep.subr.bf16.mxu0 %v2482
  %3506 = vmatpush1.bf16.xpose.msra.mxu0 %v2481
  %3507 = vmatprep.subr.bf16.mxu0 %v2490
  %3508 = vmatpush1.bf16.xpose.msra.mxu0 %v2489
  %3509 = vmatprep.subr.bf16.mxu0 %v2498
  %3510 = vmatpush1.bf16.xpose.msra.mxu0 %v2497
  %3511 = vmatprep.subr.bf16.mxu0 %v2506
  %3512 = vmatpush1.bf16.xpose.msra.mxu0 %v2505
  %3513 = vmatprep.mubr.bf16.mxu0 %v573
  %3514 = vmatmul.mubr.bf16.gmra.mrb[0].mxu0 %v559
  %v3515 = vpop.f32.mrb[0].mxu0
  %v3516 = vadd.f32 0.0, %v3515
  %v3517 = vpop.f32.mrb[0].mxu0
  %v3518 = vadd.f32 0.0, %v3517
  %v3519 = vpop.f32.mrb[0].mxu0
  %v3520 = vpop.f32.mrb[0].mxu0
  %3521 = vdwg.mxu0
  %3522 = vmatprep.subr.bf16.mxu0 %v2388
  %3523 = vmatpush1.bf16.xpose.msra.mxu0 %v2387
  %3524 = vmatprep.subr.bf16.mxu0 %v2396
  %3525 = vmatpush1.bf16.xpose.msra.mxu0 %v2395
  %3526 = vmatprep.subr.bf16.mxu0 %v2404
  %3527 = vmatpush1.bf16.xpose.msra.mxu0 %v2403
  %3528 = vmatprep.subr.bf16.mxu0 %v2412
  %3529 = vmatpush1.bf16.xpose.msra.mxu0 %v2411
  %3530 = vmatprep.subr.bf16.mxu0 %v2420
  %3531 = vmatpush1.bf16.xpose.msra.mxu0 %v2419
  %3532 = vmatprep.subr.bf16.mxu0 %v2428
  %3533 = vmatpush1.bf16.xpose.msra.mxu0 %v2427
  %3534 = vmatprep.subr.bf16.mxu0 %v2436
  %3535 = vmatpush1.bf16.xpose.msra.mxu0 %v2435
  %3536 = vmatprep.subr.bf16.mxu0 %v2444
  %3537 = vmatpush1.bf16.xpose.msra.mxu0 %v2443
  %3538 = vmatprep.subr.bf16.mxu0 %v2452
  %3539 = vmatpush1.bf16.xpose.msra.mxu0 %v2451
  %3540 = vmatprep.subr.bf16.mxu0 %v2460
  %3541 = vmatpush1.bf16.xpose.msra.mxu0 %v2459
  %3542 = vmatprep.subr.bf16.mxu0 %v2468
  %3543 = vmatpush1.bf16.xpose.msra.mxu0 %v2467
  %3544 = vmatprep.subr.bf16.mxu0 %v2476
  %3545 = vmatpush1.bf16.xpose.msra.mxu0 %v2475
  %3546 = vmatprep.subr.bf16.mxu0 %v2484
  %3547 = vmatpush1.bf16.xpose.msra.mxu0 %v2483
  %3548 = vmatprep.subr.bf16.mxu0 %v2492
  %3549 = vmatpush1.bf16.xpose.msra.mxu0 %v2491
  %3550 = vmatprep.subr.bf16.mxu0 %v2500
  %3551 = vmatpush1.bf16.xpose.msra.mxu0 %v2499
  %3552 = vmatprep.subr.bf16.mxu0 %v2508
  %3553 = vmatpush1.bf16.xpose.msra.mxu0 %v2507
  %3554 = vmatprep.mubr.bf16.mxu0 %v583
  %3555 = vmatmul.mubr.bf16.gmra.mrb[0].mxu0 %v581
  %v3556 = vpop.f32.mrb[0].mxu0
  %v3557 = vadd.f32 %v3516, %v3556
  %v3558 = vpop.f32.mrb[0].mxu0
  %v3559 = vadd.f32 %v3518, %v3558
  %v3560 = vpop.f32.mrb[0].mxu0
  %v3561 = vpop.f32.mrb[0].mxu0
  %3562 = vdwg.mxu0
  %3563 = vmatprep.subr.bf16.mxu0 %v2390
  %3564 = vmatpush1.bf16.xpose.msra.mxu0 %v2389
  %3565 = vmatprep.subr.bf16.mxu0 %v2398
  %3566 = vmatpush1.bf16.xpose.msra.mxu0 %v2397
  %3567 = vmatprep.subr.bf16.mxu0 %v2406
  %3568 = vmatpush1.bf16.xpose.msra.mxu0 %v2405
  %3569 = vmatprep.subr.bf16.mxu0 %v2414
  %3570 = vmatpush1.bf16.xpose.msra.mxu0 %v2413
  %3571 = vmatprep.subr.bf16.mxu0 %v2422
  %3572 = vmatpush1.bf16.xpose.msra.mxu0 %v2421
  %3573 = vmatprep.subr.bf16.mxu0 %v2430
  %3574 = vmatpush1.bf16.xpose.msra.mxu0 %v2429
  %3575 = vmatprep.subr.bf16.mxu0 %v2438
  %3576 = vmatpush1.bf16.xpose.msra.mxu0 %v2437
  %3577 = vmatprep.subr.bf16.mxu0 %v2446
  %3578 = vmatpush1.bf16.xpose.msra.mxu0 %v2445
  %3579 = vmatprep.subr.bf16.mxu0 %v2454
  %3580 = vmatpush1.bf16.xpose.msra.mxu0 %v2453
  %3581 = vmatprep.subr.bf16.mxu0 %v2462
  %3582 = vmatpush1.bf16.xpose.msra.mxu0 %v2461
  %3583 = vmatprep.subr.bf16.mxu0 %v2470
  %3584 = vmatpush1.bf16.xpose.msra.mxu0 %v2469
  %3585 = vmatprep.subr.bf16.mxu0 %v2478
  %3586 = vmatpush1.bf16.xpose.msra.mxu0 %v2477
  %3587 = vmatprep.subr.bf16.mxu0 %v2486
  %3588 = vmatpush1.bf16.xpose.msra.mxu0 %v2485
  %3589 = vmatprep.subr.bf16.mxu0 %v2494
  %3590 = vmatpush1.bf16.xpose.msra.mxu0 %v2493
  %3591 = vmatprep.subr.bf16.mxu0 %v2502
  %3592 = vmatpush1.bf16.xpose.msra.mxu0 %v2501
  %3593 = vmatprep.subr.bf16.mxu0 %v2510
  %3594 = vmatpush1.bf16.xpose.msra.mxu0 %v2509
  %3595 = vmatprep.mubr.bf16.mxu0 %v580
  %3596 = vmatmul.mubr.bf16.gmra.mrb[0].mxu0 %v566
  %v3597 = vpop.f32.mrb[0].mxu0
  %v3598 = vadd.f32 %v3557, %v3597
  %v3599 = vpop.f32.mrb[0].mxu0
  %v3600 = vadd.f32 %v3559, %v3599
  %v3601 = vpop.f32.mrb[0].mxu0
  %v3602 = vpop.f32.mrb[0].mxu0
  %3603 = vdwg.mxu0
  %3604 = vmatprep.subr.bf16.mxu0 %v2392
  %3605 = vmatpush1.bf16.xpose.msra.mxu0 %v2391
  %3606 = vmatprep.subr.bf16.mxu0 %v2400
  %3607 = vmatpush1.bf16.xpose.msra.mxu0 %v2399
  %3608 = vmatprep.subr.bf16.mxu0 %v2408
  %3609 = vmatpush1.bf16.xpose.msra.mxu0 %v2407
  %3610 = vmatprep.subr.bf16.mxu0 %v2416
  %3611 = vmatpush1.bf16.xpose.msra.mxu0 %v2415
  %3612 = vmatprep.subr.bf16.mxu0 %v2424
  %3613 = vmatpush1.bf16.xpose.msra.mxu0 %v2423
  %3614 = vmatprep.subr.bf16.mxu0 %v2432
  %3615 = vmatpush1.bf16.xpose.msra.mxu0 %v2431
  %3616 = vmatprep.subr.bf16.mxu0 %v2440
  %3617 = vmatpush1.bf16.xpose.msra.mxu0 %v2439
  %3618 = vmatprep.subr.bf16.mxu0 %v2448
  %3619 = vmatpush1.bf16.xpose.msra.mxu0 %v2447
  %3620 = vmatprep.subr.bf16.mxu0 %v2456
  %3621 = vmatpush1.bf16.xpose.msra.mxu0 %v2455
  %3622 = vmatprep.subr.bf16.mxu0 %v2464
  %3623 = vmatpush1.bf16.xpose.msra.mxu0 %v2463
  %3624 = vmatprep.subr.bf16.mxu0 %v2472
  %3625 = vmatpush1.bf16.xpose.msra.mxu0 %v2471
  %3626 = vmatprep.subr.bf16.mxu0 %v2480
  %3627 = vmatpush1.bf16.xpose.msra.mxu0 %v2479
  %3628 = vmatprep.subr.bf16.mxu0 %v2488
  %3629 = vmatpush1.bf16.xpose.msra.mxu0 %v2487
  %3630 = vmatprep.subr.bf16.mxu0 %v2496
  %3631 = vmatpush1.bf16.xpose.msra.mxu0 %v2495
  %3632 = vmatprep.subr.bf16.mxu0 %v2504
  %3633 = vmatpush1.bf16.xpose.msra.mxu0 %v2503
  %3634 = vmatprep.subr.bf16.mxu0 %v2512
  %3635 = vmatpush1.bf16.xpose.msra.mxu0 %v2511
  %3636 = vmatprep.mubr.bf16.mxu0 %v584
  %3637 = vmatmul.mubr.bf16.gmra.mrb[0].mxu0 %v582
  %v3638 = vpop.f32.mrb[0].mxu0
  %v3639 = vadd.f32 %v3598, %v3638
  %v3640 = vpop.f32.mrb[0].mxu0
  %v3641 = vadd.f32 %v3600, %v3640
  %v3642 = vpop.f32.mrb[0].mxu0
  %v3643 = vpop.f32.mrb[0].mxu0
  %3644 = vdwg.mxu0
  %3645 = vmatprep.subr.bf16.mxu0 %v2514
  %3646 = vmatpush1.bf16.xpose.msra.mxu0 %v2513
  %3647 = vmatprep.subr.bf16.mxu0 %v2522
  %3648 = vmatpush1.bf16.xpose.msra.mxu0 %v2521
  %3649 = vmatprep.subr.bf16.mxu0 %v2530
  %3650 = vmatpush1.bf16.xpose.msra.mxu0 %v2529
  %3651 = vmatprep.subr.bf16.mxu0 %v2538
  %3652 = vmatpush1.bf16.xpose.msra.mxu0 %v2537
  %3653 = vmatprep.subr.bf16.mxu0 %v2546
  %3654 = vmatpush1.bf16.xpose.msra.mxu0 %v2545
  %3655 = vmatprep.subr.bf16.mxu0 %v2554
  %3656 = vmatpush1.bf16.xpose.msra.mxu0 %v2553
  %3657 = vmatprep.subr.bf16.mxu0 %v2562
  %3658 = vmatpush1.bf16.xpose.msra.mxu0 %v2561
  %3659 = vmatprep.subr.bf16.mxu0 %v2570
  %3660 = vmatpush1.bf16.xpose.msra.mxu0 %v2569
  %3661 = vmatprep.subr.bf16.mxu0 %v2578
  %3662 = vmatpush1.bf16.xpose.msra.mxu0 %v2577
  %3663 = vmatprep.subr.bf16.mxu0 %v2586
  %3664 = vmatpush1.bf16.xpose.msra.mxu0 %v2585
  %3665 = vmatprep.subr.bf16.mxu0 %v2594
  %3666 = vmatpush1.bf16.xpose.msra.mxu0 %v2593
  %3667 = vmatprep.subr.bf16.mxu0 %v2602
  %3668 = vmatpush1.bf16.xpose.msra.mxu0 %v2601
  %3669 = vmatprep.subr.bf16.mxu0 %v2610
  %3670 = vmatpush1.bf16.xpose.msra.mxu0 %v2609
  %3671 = vmatprep.subr.bf16.mxu0 %v2618
  %3672 = vmatpush1.bf16.xpose.msra.mxu0 %v2617
  %3673 = vmatprep.subr.bf16.mxu0 %v2626
  %3674 = vmatpush1.bf16.xpose.msra.mxu0 %v2625
  %3675 = vmatprep.subr.bf16.mxu0 %v2634
  %3676 = vmatpush1.bf16.xpose.msra.mxu0 %v2633
  %3677 = vmatprep.mubr.bf16.mxu0 %v573
  %3678 = vmatmul.mubr.bf16.gmra.mrb[0].mxu0 %v559
  %v3679 = vpop.f32.mrb[0].mxu0
  %v3680 = vadd.f32 0.0, %v3679
  %v3681 = vpop.f32.mrb[0].mxu0
  %v3682 = vadd.f32 0.0, %v3681
  %v3683 = vpop.f32.mrb[0].mxu0
  %v3684 = vpop.f32.mrb[0].mxu0
  %3685 = vdwg.mxu0
  %3686 = vmatprep.subr.bf16.mxu0 %v2516
  %3687 = vmatpush1.bf16.xpose.msra.mxu0 %v2515
  %3688 = vmatprep.subr.bf16.mxu0 %v2524
  %3689 = vmatpush1.bf16.xpose.msra.mxu0 %v2523
  %3690 = vmatprep.subr.bf16.mxu0 %v2532
  %3691 = vmatpush1.bf16.xpose.msra.mxu0 %v2531
  %3692 = vmatprep.subr.bf16.mxu0 %v2540
  %3693 = vmatpush1.bf16.xpose.msra.mxu0 %v2539
  %3694 = vmatprep.subr.bf16.mxu0 %v2548
  %3695 = vmatpush1.bf16.xpose.msra.mxu0 %v2547
  %3696 = vmatprep.subr.bf16.mxu0 %v2556
  %3697 = vmatpush1.bf16.xpose.msra.mxu0 %v2555
  %3698 = vmatprep.subr.bf16.mxu0 %v2564
  %3699 = vmatpush1.bf16.xpose.msra.mxu0 %v2563
  %3700 = vmatprep.subr.bf16.mxu0 %v2572
  %3701 = vmatpush1.bf16.xpose.msra.mxu0 %v2571
  %3702 = vmatprep.subr.bf16.mxu0 %v2580
  %3703 = vmatpush1.bf16.xpose.msra.mxu0 %v2579
  %3704 = vmatprep.subr.bf16.mxu0 %v2588
  %3705 = vmatpush1.bf16.xpose.msra.mxu0 %v2587
  %3706 = vmatprep.subr.bf16.mxu0 %v2596
  %3707 = vmatpush1.bf16.xpose.msra.mxu0 %v2595
  %3708 = vmatprep.subr.bf16.mxu0 %v2604
  %3709 = vmatpush1.bf16.xpose.msra.mxu0 %v2603
  %3710 = vmatprep.subr.bf16.mxu0 %v2612
  %3711 = vmatpush1.bf16.xpose.msra.mxu0 %v2611
  %3712 = vmatprep.subr.bf16.mxu0 %v2620
  %3713 = vmatpush1.bf16.xpose.msra.mxu0 %v2619
  %3714 = vmatprep.subr.bf16.mxu0 %v2628
  %3715 = vmatpush1.bf16.xpose.msra.mxu0 %v2627
  %3716 = vmatprep.subr.bf16.mxu0 %v2636
  %3717 = vmatpush1.bf16.xpose.msra.mxu0 %v2635
  %3718 = vmatprep.mubr.bf16.mxu0 %v583
  %3719 = vmatmul.mubr.bf16.gmra.mrb[0].mxu0 %v581
  %v3720 = vpop.f32.mrb[0].mxu0
  %v3721 = vadd.f32 %v3680, %v3720
  %v3722 = vpop.f32.mrb[0].mxu0
  %v3723 = vadd.f32 %v3682, %v3722
  %v3724 = vpop.f32.mrb[0].mxu0
  %v3725 = vpop.f32.mrb[0].mxu0
  %3726 = vdwg.mxu0
  %3727 = vmatprep.subr.bf16.mxu0 %v2518
  %3728 = vmatpush1.bf16.xpose.msra.mxu0 %v2517
  %3729 = vmatprep.subr.bf16.mxu0 %v2526
  %3730 = vmatpush1.bf16.xpose.msra.mxu0 %v2525
  %3731 = vmatprep.subr.bf16.mxu0 %v2534
  %3732 = vmatpush1.bf16.xpose.msra.mxu0 %v2533
  %3733 = vmatprep.subr.bf16.mxu0 %v2542
  %3734 = vmatpush1.bf16.xpose.msra.mxu0 %v2541
  %3735 = vmatprep.subr.bf16.mxu0 %v2550
  %3736 = vmatpush1.bf16.xpose.msra.mxu0 %v2549
  %3737 = vmatprep.subr.bf16.mxu0 %v2558
  %3738 = vmatpush1.bf16.xpose.msra.mxu0 %v2557
  %3739 = vmatprep.subr.bf16.mxu0 %v2566
  %3740 = vmatpush1.bf16.xpose.msra.mxu0 %v2565
  %3741 = vmatprep.subr.bf16.mxu0 %v2574
  %3742 = vmatpush1.bf16.xpose.msra.mxu0 %v2573
  %3743 = vmatprep.subr.bf16.mxu0 %v2582
  %3744 = vmatpush1.bf16.xpose.msra.mxu0 %v2581
  %3745 = vmatprep.subr.bf16.mxu0 %v2590
  %3746 = vmatpush1.bf16.xpose.msra.mxu0 %v2589
  %3747 = vmatprep.subr.bf16.mxu0 %v2598
  %3748 = vmatpush1.bf16.xpose.msra.mxu0 %v2597
  %3749 = vmatprep.subr.bf16.mxu0 %v2606
  %3750 = vmatpush1.bf16.xpose.msra.mxu0 %v2605
  %3751 = vmatprep.subr.bf16.mxu0 %v2614
  %3752 = vmatpush1.bf16.xpose.msra.mxu0 %v2613
  %3753 = vmatprep.subr.bf16.mxu0 %v2622
  %3754 = vmatpush1.bf16.xpose.msra.mxu0 %v2621
  %3755 = vmatprep.subr.bf16.mxu0 %v2630
  %3756 = vmatpush1.bf16.xpose.msra.mxu0 %v2629
  %3757 = vmatprep.subr.bf16.mxu0 %v2638
  %3758 = vmatpush1.bf16.xpose.msra.mxu0 %v2637
  %3759 = vmatprep.mubr.bf16.mxu0 %v580
  %3760 = vmatmul.mubr.bf16.gmra.mrb[0].mxu0 %v566
  %v3761 = vpop.f32.mrb[0].mxu0
  %v3762 = vadd.f32 %v3721, %v3761
  %v3763 = vpop.f32.mrb[0].mxu0
  %v3764 = vadd.f32 %v3723, %v3763
  %v3765 = vpop.f32.mrb[0].mxu0
  %v3766 = vpop.f32.mrb[0].mxu0
  %3767 = vdwg.mxu0
  %3768 = vmatprep.subr.bf16.mxu0 %v2520
  %3769 = vmatpush1.bf16.xpose.msra.mxu0 %v2519
  %3770 = vmatprep.subr.bf16.mxu0 %v2528
  %3771 = vmatpush1.bf16.xpose.msra.mxu0 %v2527
  %3772 = vmatprep.subr.bf16.mxu0 %v2536
  %3773 = vmatpush1.bf16.xpose.msra.mxu0 %v2535
  %3774 = vmatprep.subr.bf16.mxu0 %v2544
  %3775 = vmatpush1.bf16.xpose.msra.mxu0 %v2543
  %3776 = vmatprep.subr.bf16.mxu0 %v2552
  %3777 = vmatpush1.bf16.xpose.msra.mxu0 %v2551
  %3778 = vmatprep.subr.bf16.mxu0 %v2560
  %3779 = vmatpush1.bf16.xpose.msra.mxu0 %v2559
  %3780 = vmatprep.subr.bf16.mxu0 %v2568
  %3781 = vmatpush1.bf16.xpose.msra.mxu0 %v2567
  %3782 = vmatprep.subr.bf16.mxu0 %v2576
  %3783 = vmatpush1.bf16.xpose.msra.mxu0 %v2575
  %3784 = vmatprep.subr.bf16.mxu0 %v2584
  %3785 = vmatpush1.bf16.xpose.msra.mxu0 %v2583
  %3786 = vmatprep.subr.bf16.mxu0 %v2592
  %3787 = vmatpush1.bf16.xpose.msra.mxu0 %v2591
  %3788 = vmatprep.subr.bf16.mxu0 %v2600
  %3789 = vmatpush1.bf16.xpose.msra.mxu0 %v2599
  %3790 = vmatprep.subr.bf16.mxu0 %v2608
  %3791 = vmatpush1.bf16.xpose.msra.mxu0 %v2607
  %3792 = vmatprep.subr.bf16.mxu0 %v2616
  %3793 = vmatpush1.bf16.xpose.msra.mxu0 %v2615
  %3794 = vmatprep.subr.bf16.mxu0 %v2624
  %3795 = vmatpush1.bf16.xpose.msra.mxu0 %v2623
  %3796 = vmatprep.subr.bf16.mxu0 %v2632
  %3797 = vmatpush1.bf16.xpose.msra.mxu0 %v2631
  %3798 = vmatprep.subr.bf16.mxu0 %v2640
  %3799 = vmatpush1.bf16.xpose.msra.mxu0 %v2639
  %3800 = vmatprep.mubr.bf16.mxu0 %v584
  %3801 = vmatmul.mubr.bf16.gmra.mrb[0].mxu0 %v582
  %v3802 = vpop.f32.mrb[0].mxu0
  %v3803 = vadd.f32 %v3762, %v3802
  %v3804 = vpop.f32.mrb[0].mxu0
  %v3805 = vadd.f32 %v3764, %v3804
  %v3806 = vpop.f32.mrb[0].mxu0
  %v3807 = vpop.f32.mrb[0].mxu0
  %3808 = vdwg.mxu0
  %v3817 = vcombine.low %v3311, %v3313
  %v3818 = vcombine.low %v3475, %v3477
  %v3820 = vunpack.c.l.s4 1983009808
  %v3821 = vunpack.c.0.s8 %v3820
  %v3822 = vlaneseq
  %v3823 = vshrl.u32 %v3822, 7
  %v3824 = vsub.s32 %v3821, %v3823
  %v3825 = vrot.slane %v3817, %v3824
  %v3827 = vunpack.c.l.s4 1983009808
  %v3828 = vunpack.c.0.s8 %v3827
  %v3829 = vlaneseq
  %v3830 = vshrl.u32 %v3829, 7
  %v3831 = vsub.s32 %v3828, %v3830
  %v3832 = vrot.slane %v3818, %v3831
  %v3833 = vcombine.low %v3825, %v3832
  %v3834 = vcombine.low %v3639, %v3641
  %v3835 = vcombine.low %v3803, %v3805
  %v3837 = vunpack.c.l.s4 1983009808
  %v3838 = vunpack.c.0.s8 %v3837
  %v3839 = vlaneseq
  %v3840 = vshrl.u32 %v3839, 7
  %v3841 = vsub.s32 %v3838, %v3840
  %v3842 = vrot.slane %v3834, %v3841
  %v3844 = vunpack.c.l.s4 1983009808
  %v3845 = vunpack.c.0.s8 %v3844
  %v3846 = vlaneseq
  %v3847 = vshrl.u32 %v3846, 7
  %v3848 = vsub.s32 %v3845, %v3847
  %v3849 = vrot.slane %v3835, %v3848
  %v3850 = vcombine.low %v3842, %v3849
  %v3853 = vadd.f32 %v20, %v3833
  %v3854 = vadd.f32 %v21, %v3850
  %3855 = vst [vmem:[#allocation2] sm:$0xff] %v3853
  %3856 = vst [vmem:[#allocation2 + $0x8] sm:$0xff] %v3854
  // Predicated region
  $region18: #{conv_inflation_block.5} parent=0 // pred_check
    %p3857 = pneg %p14
  $region19: #{conv_inflation_block.5} parent=0 // pred_check_branch
    %3859 = sbr.rel (%p3857) target = $region21
  $region20: #{conv_inflation_block.5} parent=0 // pred_region
    %v3860 = vld [vmem:[#allocation2] sm:$0xff]
    %v3861 = vld [vmem:[#allocation2 + $0x8] sm:$0xff]
    %v3862 = vld [vmem:[%s2] sm:$0xff]
    %v3864 = vlaneseq
    %v3865 = vshrl.u32 %v3864, 7
    %v3866 = vsub.s32 0, %v3865
    %v3867 = vrot.slane %v3862, %v3866
    %v3868 = vlaneseq
    %v3869 = vshrl.u32 %v3868, 7
    %v3870 = vsub.s32 1, %v3869
    %v3871 = vrot.slane %v3862, %v3870
    %v3872 = vlaneseq
    %v3873 = vshrl.u32 %v3872, 7
    %v3874 = vsub.s32 2, %v3873
    %v3875 = vrot.slane %v3862, %v3874
    %v3876 = vlaneseq
    %v3877 = vshrl.u32 %v3876, 7
    %v3878 = vsub.s32 3, %v3877
    %v3879 = vrot.slane %v3862, %v3878
    %v3880 = vlaneseq
    %v3881 = vshrl.u32 %v3880, 7
    %v3882 = vsub.s32 4, %v3881
    %v3883 = vrot.slane %v3862, %v3882
    %v3884 = vlaneseq
    %v3885 = vshrl.u32 %v3884, 7
    %v3886 = vsub.s32 5, %v3885
    %v3887 = vrot.slane %v3862, %v3886
    %v3888 = vlaneseq
    %v3889 = vshrl.u32 %v3888, 7
    %v3890 = vsub.s32 6, %v3889
    %v3891 = vrot.slane %v3862, %v3890
    %v3892 = vlaneseq
    %v3893 = vshrl.u32 %v3892, 7
    %v3894 = vsub.s32 7, %v3893
    %v3895 = vrot.slane %v3862, %v3894
    %v3896 = vcombine.low %v3867, %v3871
    %v3897 = vcombine.low %v3875, %v3879
    %v3899 = vunpack.c.l.s4 1983009808
    %v3900 = vunpack.c.0.s8 %v3899
    %v3901 = vlaneseq
    %v3902 = vshrl.u32 %v3901, 7
    %v3903 = vsub.s32 %v3900, %v3902
    %v3904 = vrot.slane %v3896, %v3903
    %v3906 = vunpack.c.l.s4 1983009808
    %v3907 = vunpack.c.0.s8 %v3906
    %v3908 = vlaneseq
    %v3909 = vshrl.u32 %v3908, 7
    %v3910 = vsub.s32 %v3907, %v3909
    %v3911 = vrot.slane %v3897, %v3910
    %v3912 = vcombine.low %v3904, %v3911
    %v3913 = vcombine.low %v3883, %v3887
    %v3914 = vcombine.low %v3891, %v3895
    %v3916 = vunpack.c.l.s4 1983009808
    %v3917 = vunpack.c.0.s8 %v3916
    %v3918 = vlaneseq
    %v3919 = vshrl.u32 %v3918, 7
    %v3920 = vsub.s32 %v3917, %v3919
    %v3921 = vrot.slane %v3913, %v3920
    %v3923 = vunpack.c.l.s4 1983009808
    %v3924 = vunpack.c.0.s8 %v3923
    %v3925 = vlaneseq
    %v3926 = vshrl.u32 %v3925, 7
    %v3927 = vsub.s32 %v3924, %v3926
    %v3928 = vrot.slane %v3914, %v3927
    %v3929 = vcombine.low %v3921, %v3928
    %v3932 = vadd.f32 %v3860, %v3912
    %v3933 = vadd.f32 %v3861, %v3929
    %3934 = vst [vmem:[%s3] sm:$0xff] %v3932
    %3935 = vst [vmem:[%s3 + $0x8] sm:$0xff] %v3933
  $region21: #{conv_inflation_block.5} parent=0 // pred_fallthru
    _
  // Predicated region
  $region22: #{conv_inflation_block.5} parent=0 // pred_check
    _
  $region23: #{conv_inflation_block.5} parent=0 // pred_check_branch
    %3937 = sbr.rel (0) target = $region25
  $region24: #{conv_inflation_block.5} parent=0 // pred_region
    _
  $region25: #{conv_inflation_block.5} parent=0 // pred_fallthru
    _
  // Predicated region
  $region26: #{conv_inflation_block.5} parent=0 // pred_check
    _
  $region27: #{conv_inflation_block.5} parent=0 // pred_check_branch
    %3939 = sbr.rel (0) target = $region29
  $region28: #{conv_inflation_block.5} parent=0 // pred_region
    _
  $region29: #{conv_inflation_block.5} parent=0 // pred_fallthru
    _

</llo_original>
